<compile_context>
chip_gen: v5e
topology: v5e:2x2
jax: 0.10.0
libtpu: 0.0.40
codegen_flags: <defaults>
</compile_context>

<pallas_src>
import functools
import math

import numpy as np
import jax
import jax.numpy as jnp
from jax.experimental import pallas as pl
from jax.experimental.pallas import tpu as pltpu

# ----------------------------------------------------------------------------
# Config (scaled-down but structure-faithful: original uses input_size,
# hidden=512, expr dims [1024, 512], cond dims [512, 512], dec [1024,1024]+expr)
# ----------------------------------------------------------------------------
BATCH = 2
INPUT_SIZE = 64
CLASS_SIZES = [3, 5]                      # cats concatenated along dim 1
N_CAT = sum(CLASS_SIZES)
HIDDEN = 256                              # BERT hidden (latent_dim)
N_LAYERS = 2
N_HEADS = 2                               # unused in compute: S=1 => ctx == V
FF_HIDDEN = 4 * HIDDEN                    # BERT feed-forward hidden
EXPR_ENCODER_DIMS = [128, HIDDEN]         # ~ [1024, latent_dim]
COND_ENCODER_DIMS = [128, HIDDEN]         # ~ [512, latent_dim]
DECODER_DIMS = [128, 128] + EXPR_ENCODER_DIMS   # ~ [1024, 1024] + expr dims

LANE = 128
OUT_PAD = ((INPUT_SIZE + LANE - 1) // LANE) * LANE   # lane-dense output width

# Decoder layer output dims (reversed decoder_dims, then final -> input_size)
DEC_DIMS = [DECODER_DIMS[i] for i in range(len(DECODER_DIMS) - 1, -1, -1)] + [INPUT_SIZE]
N_DEC = len(DEC_DIMS)

# Weight slabs are grouped by output (lane) width so every carved weight view
# spans the slab's full lane extent; row offsets are 16-aligned (bf16 sublane tile).
SLAB_WIDTHS = (128, 256, 1024)
_SLAB_OF_WIDTH = {w: i for i, w in enumerate(SLAB_WIDTHS)}
_ROW_ALIGN = 16


# ----------------------------------------------------------------------------
# Static slab layout (Python ints only — closed over by the kernel)
# ----------------------------------------------------------------------------
def _build_layout():
    w, b = {}, {}
    slab_rows = [0, 0, 0]
    bias_row = [0]

    def add_w(name, din, dout):
        s = _SLAB_OF_WIDTH[dout]
        w[name] = (s, slab_rows[s], din)
        slab_rows[s] += -(-din // _ROW_ALIGN) * _ROW_ALIGN

    def add_b(name, width):
        b[name] = (bias_row[0], width)
        bias_row[0] += 1

    # expr encoder: Linear+ReLU stack
    prev = INPUT_SIZE
    for i, d in enumerate(EXPR_ENCODER_DIMS):
        add_w(f'expr_w{i}', prev, d); add_b(f'expr_b{i}', d)
        prev = d

    # condition encoders: layer-1 fused (old|new along output lanes)
    add_w('cond_w1', N_CAT, 2 * COND_ENCODER_DIMS[0])
    add_b('cond_b1', 2 * COND_ENCODER_DIMS[0])
    add_w('old_w2', COND_ENCODER_DIMS[0], HIDDEN); add_b('old_b2', HIDDEN)
    add_w('new_w2', COND_ENCODER_DIMS[0], HIDDEN); add_b('new_b2', HIDDEN)
    add_b('pe', HIDDEN)                              # positional encoding, pos 0

    # BERT blocks (V/O folded into a single W_vo per block)
    for i in range(N_LAYERS):
        add_b(f'ln1_g_{i}', HIDDEN); add_b(f'ln1_b_{i}', HIDDEN)
        add_w(f'wvo_{i}', HIDDEN, HIDDEN); add_b(f'bvo_{i}', HIDDEN)
        add_b(f'ln2_g_{i}', HIDDEN); add_b(f'ln2_b_{i}', HIDDEN)
        add_w(f'w1_{i}', HIDDEN, FF_HIDDEN); add_b(f'b1_{i}', FF_HIDDEN)
        add_w(f'w2_{i}', FF_HIDDEN, HIDDEN); add_b(f'b2_{i}', HIDDEN)

    # decoder: Linear+ReLU stack, final layer padded to OUT_PAD lanes
    prev = HIDDEN
    for i, d in enumerate(DEC_DIMS):
        dout = OUT_PAD if i == N_DEC - 1 else d
        add_w(f'dec_w{i}', prev, dout); add_b(f'dec_b{i}', dout)
        prev = d

    return {
        'w': w,
        'b': b,
        'slab_rows': tuple(slab_rows),
        'bias_rows': -(-bias_row[0] // 8) * 8,
        'bias_width': max(SLAB_WIDTHS),
    }


LAYOUT = _build_layout()


# ----------------------------------------------------------------------------
# The fused forward kernel (everything in one body, 4 parameter slabs in VMEM)
# ----------------------------------------------------------------------------
def _fused_forward_kernel(y_ref, cats_ref, bias_ref,
                          w128_ref, w256_ref, w1024_ref, o_ref, *, layout):
    slabs = (w128_ref, w256_ref, w1024_ref)

    def W(name):                                   # bf16 (din, dout) weight view
        s, off, din = layout['w'][name]
        return slabs[s][off:off + din, :]

    def B(name):                                   # f32 (1, dout) bias/LN row
        row, width = layout['b'][name]
        return bias_ref[row:row + 1, :width]

    def dense(h, wname, bname, relu=True):
        z = jnp.dot(h.astype(jnp.bfloat16), W(wname),
                    preferred_element_type=jnp.float32) + B(bname)
        return jnp.maximum(z, 0.0) if relu else z

    def layer_norm(v, gname, bname):
        mu = jnp.mean(v, axis=-1, keepdims=True)
        var = jnp.mean((v - mu) ** 2, axis=-1, keepdims=True)
        return (v - mu) * jax.lax.rsqrt(var + 1e-6) * B(gname) + B(bname)

    def gelu(v):  # tanh-approx GELU (BERT-pytorch style)
        return 0.5 * v * (1.0 + jnp.tanh(
            0.7978845608028654 * (v + 0.044715 * v * v * v)))

    # ---- expr encoder: Linear+ReLU stack ----
    x = y_ref[...]
    for i in range(len(EXPR_ENCODER_DIMS)):
        x = dense(x, f'expr_w{i}', f'expr_b{i}')

    # ---- condition encoders: layer 1 fused (old|new) over the same cats ----
    h1 = dense(cats_ref[...], 'cond_w1', 'cond_b1')          # (B, 2*128)
    d1 = COND_ENCODER_DIMS[0]                                # lane-aligned split
    c_old = dense(h1[:, :d1], 'old_w2', 'old_b2')            # (B, H)
    c_new = dense(h1[:, d1:], 'new_w2', 'new_b2')            # (B, H)

    # ---- BERT encoder over seq_len == 1 (sequence axis squeezed out) ----
    h = x + c_old + B('pe')                                  # + positional enc (pos 0)
    for i in range(N_LAYERS):
        # pre-LN MHA; with one key per query softmax == 1 so context == V for
        # every head: sublayer reduces exactly to x + LN(x) @ (Wv@Wo) + (bv@Wo+bo).
        a = layer_norm(h, f'ln1_g_{i}', f'ln1_b_{i}')
        h = h + dense(a, f'wvo_{i}', f'bvo_{i}', relu=False)
        # pre-LN GELU feed-forward sublayer
        f = layer_norm(h, f'ln2_g_{i}', f'ln2_b_{i}')
        f = gelu(dense(f, f'w1_{i}', f'b1_{i}', relu=False))
        h = h + dense(f, f'w2_{i}', f'b2_{i}', relu=False)

    # ---- decoder: Linear+ReLU stack (final layer padded to 128 lanes) ----
    z = h + c_new
    for i in range(N_DEC):
        z = dense(z, f'dec_w{i}', f'dec_b{i}')
    o_ref[...] = z                                           # (B, OUT_PAD) lane-dense


# ----------------------------------------------------------------------------
# Parameter init (deterministic, nn.Linear-style uniform bounds)
# ----------------------------------------------------------------------------
def _linear_init(key, din, dout):
    kw, kb = jax.random.split(key)
    bound = 1.0 / math.sqrt(din)
    w = jax.random.uniform(kw, (din, dout), jnp.float32, -bound, bound)
    b = jax.random.uniform(kb, (dout,), jnp.float32, -bound, bound)
    return w, b


def _mlp_init(key, dims, prev_d):
    layers = []
    for d in dims:
        key, sub = jax.random.split(key)
        layers.append(_linear_init(sub, prev_d, d))
        prev_d = d
    return layers


def _block_init(key, hidden, ff):
    ks = jax.random.split(key, 6)
    p = {'ln1_g': jnp.ones((hidden,), jnp.float32),
         'ln1_b': jnp.zeros((hidden,), jnp.float32),
         'ln2_g': jnp.ones((hidden,), jnp.float32),
         'ln2_b': jnp.zeros((hidden,), jnp.float32)}
    # wq/wk exist as parameters but are unused in forward (S=1 => ctx == V).
    p['wq'], p['bq'] = _linear_init(ks[0], hidden, hidden)
    p['wk'], p['bk'] = _linear_init(ks[1], hidden, hidden)
    p['wv'], p['bv'] = _linear_init(ks[2], hidden, hidden)
    p['wo'], p['bo'] = _linear_init(ks[3], hidden, hidden)
    p['w1'], p['b1'] = _linear_init(ks[4], hidden, ff)
    p['w2'], p['b2'] = _linear_init(ks[5], ff, hidden)
    return p


def sinusoidal_pe(seq_len, d_model):
    pos = np.arange(seq_len, dtype=np.float32)[:, None]
    i = np.arange(0, d_model, 2, dtype=np.float32)
    div = np.exp(-math.log(10000.0) * i / d_model)
    pe = np.zeros((seq_len, d_model), np.float32)
    pe[:, 0::2] = np.sin(pos * div)
    pe[:, 1::2] = np.cos(pos * div)
    return pe


def init_params(key):
    keys = jax.random.split(key, 4 + N_LAYERS)
    params = {
        'expr_encoder': _mlp_init(keys[0], EXPR_ENCODER_DIMS, INPUT_SIZE),
        'old_cond_encoder': _mlp_init(keys[1], COND_ENCODER_DIMS, N_CAT),
        'new_cond_encoder': _mlp_init(keys[2], COND_ENCODER_DIMS, N_CAT),
        'bert_blocks': [_block_init(keys[4 + i], HIDDEN, FF_HIDDEN)
                        for i in range(N_LAYERS)],
        'decoder': _mlp_init(keys[3], DEC_DIMS, HIDDEN),
    }
    return params


# ----------------------------------------------------------------------------
# One-time host-side packing: 3 bf16 weight slabs + 1 f32 bias/LN/PE slab.
# (Hoisted out of the jitted call path — runs once at init.)
# ----------------------------------------------------------------------------
def pack_params(params):
    slabs = [np.zeros((LAYOUT['slab_rows'][s], SLAB_WIDTHS[s]), np.float32)
             for s in range(len(SLAB_WIDTHS))]
    biases = np.zeros((LAYOUT['bias_rows'], LAYOUT['bias_width']), np.float32)

    def put_w(name, mat):
        mat = np.asarray(mat, np.float32)
        s, off, din = LAYOUT['w'][name]
        assert mat.shape[0] == din, (name, mat.shape, din)
        slabs[s][off:off + din, :mat.shape[1]] = mat          # zero-pad extra lanes

    def put_b(name, vec):
        vec = np.asarray(vec, np.float32).reshape(-1)
        row, _ = LAYOUT['b'][name]
        biases[row, :vec.shape[0]] = vec

    for i, (w, b) in enumerate(params['expr_encoder']):
        put_w(f'expr_w{i}', w); put_b(f'expr_b{i}', b)

    (ow1, ob1), (ow2, ob2) = params['old_cond_encoder']
    (nw1, nb1), (nw2, nb2) = params['new_cond_encoder']
    put_w('cond_w1', np.concatenate([np.asarray(ow1), np.asarray(nw1)], axis=1))
    put_b('cond_b1', np.concatenate([np.asarray(ob1), np.asarray(nb1)], axis=0))
    put_w('old_w2', ow2); put_b('old_b2', ob2)
    put_w('new_w2', nw2); put_b('new_b2', nb2)
    put_b('pe', sinusoidal_pe(1, HIDDEN)[0])

    for i, blk in enumerate(params['bert_blocks']):
        wv = np.asarray(blk['wv'], np.float32); bv = np.asarray(blk['bv'], np.float32)
        wo = np.asarray(blk['wo'], np.float32); bo = np.asarray(blk['bo'], np.float32)
        put_w(f'wvo_{i}', wv @ wo)              # host-side V/O fold
        put_b(f'bvo_{i}', bv @ wo + bo)
        put_b(f'ln1_g_{i}', blk['ln1_g']); put_b(f'ln1_b_{i}', blk['ln1_b'])
        put_b(f'ln2_g_{i}', blk['ln2_g']); put_b(f'ln2_b_{i}', blk['ln2_b'])
        put_w(f'w1_{i}', blk['w1']); put_b(f'b1_{i}', blk['b1'])
        put_w(f'w2_{i}', blk['w2']); put_b(f'b2_{i}', blk['b2'])

    for i, (w, b) in enumerate(params['decoder']):
        put_w(f'dec_w{i}', w); put_b(f'dec_b{i}', b)

    return {
        'bias': jnp.asarray(biases),                              # f32
        'w128': jnp.asarray(slabs[0], dtype=jnp.bfloat16),
        'w256': jnp.asarray(slabs[1], dtype=jnp.bfloat16),
        'w1024': jnp.asarray(slabs[2], dtype=jnp.bfloat16),
    }


# ----------------------------------------------------------------------------
# PreAE forward: (pred_y, y) = forward(y, cats)  — one fused pallas_call
# ----------------------------------------------------------------------------
def preae_forward(packed, y, cats_list):
    cats = jnp.concatenate(cats_list, axis=1)            # torch.cat(cats, dim=1)
    B = y.shape[0]
    kernel = functools.partial(_fused_forward_kernel, layout=LAYOUT)
    out = pl.pallas_call(
        kernel,
        out_shape=jax.ShapeDtypeStruct((B, OUT_PAD), jnp.float32),
        compiler_params=pltpu.CompilerParams(
            vmem_limit_bytes=12 * 1024 * 1024),
    )(y, cats, packed['bias'], packed['w128'], packed['w256'], packed['w1024'])
    return out[:, :INPUT_SIZE], y


if __name__ == "__main__":
    key = jax.random.PRNGKey(0)
    kp_, ky, k1, k2 = jax.random.split(key, 4)

    params = init_params(kp_)
    packed = pack_params(params)                         # once, outside the jitted path

    y = jax.random.normal(ky, (BATCH, INPUT_SIZE), jnp.float32)
    drugs = jax.nn.one_hot(
        jax.random.randint(k1, (BATCH,), 0, CLASS_SIZES[0]), CLASS_SIZES[0],
        dtype=jnp.float32)
    cell_types = jax.nn.one_hot(
        jax.random.randint(k2, (BATCH,), 0, CLASS_SIZES[1]), CLASS_SIZES[1],
        dtype=jnp.float32)

    fwd = jax.jit(preae_forward)
    pred_y, y_out = fwd(packed, y, [drugs, cell_types])
    jax.block_until_ready(pred_y)
    jax.block_until_ready(y_out)

    assert pred_y.shape == (BATCH, INPUT_SIZE)
    assert y_out.shape == (BATCH, INPUT_SIZE)
    assert bool(jnp.all(jnp.isfinite(pred_y)))
    print("KERNEL_OK")
</pallas_src>

<mosaic_0001>
module attributes {stable_mosaic.version = 11 : i64} {
  func.func @_fused_forward_kernel(%arg0: memref<2x64xf32, #tpu.memory_space<vmem>>, %arg1: memref<2x8xf32, #tpu.memory_space<vmem>>, %arg2: memref<32x1024xf32, #tpu.memory_space<vmem>>, %arg3: memref<704x128xbf16, #tpu.memory_space<vmem>>, %arg4: memref<3216x256xbf16, #tpu.memory_space<vmem>>, %arg5: memref<512x1024xbf16, #tpu.memory_space<vmem>>, %arg6: memref<2x128xf32, #tpu.memory_space<vmem>>) attributes {dimension_semantics = [], scalar_prefetch = 0 : i64, scratch_operands = 0 : i64, tpu.core_type = #tpu.core_type<tc>} {
    %c0 = arith.constant 0 : index
    %c0_0 = arith.constant 0 : index
    %0 = vector.load %arg0[%c0, %c0_0] : memref<2x64xf32, #tpu.memory_space<vmem>>, vector<2x64xf32>
    %1 = arith.truncf %0 : vector<2x64xf32> to vector<2x64xbf16>
    %c0_1 = arith.constant 0 : index
    %c0_2 = arith.constant 0 : index
    %2 = vector.load %arg3[%c0_1, %c0_2] : memref<704x128xbf16, #tpu.memory_space<vmem>>, vector<64x128xbf16>
    %cst = arith.constant dense<0.000000e+00> : vector<2x128xf32>
    %3 = tpu.matmul %1, %2, %cst {dimension_numbers = #tpu.dot_dimension_numbers<[1], [0], [0], [1], [0, 0, 1, 1], [], []>} : vector<2x64xbf16>, vector<64x128xbf16>, vector<2x128xf32> -> vector<2x128xf32>
    %c0_3 = arith.constant 0 : index
    %c0_4 = arith.constant 0 : index
    %4 = vector.load %arg2[%c0_3, %c0_4] : memref<32x1024xf32, #tpu.memory_space<vmem>>, vector<1x128xf32>
    %5 = vector.broadcast %4 : vector<1x128xf32> to vector<2x128xf32>
    %6 = arith.addf %3, %5 : vector<2x128xf32>
    %cst_5 = arith.constant 0.000000e+00 : f32
    %7 = vector.broadcast %cst_5 : f32 to vector<2x128xf32>
    %8 = arith.maximumf %6, %7 : vector<2x128xf32>
    %9 = arith.truncf %8 : vector<2x128xf32> to vector<2x128xbf16>
    %c0_6 = arith.constant 0 : index
    %c0_7 = arith.constant 0 : index
    %10 = vector.load %arg4[%c0_6, %c0_7] : memref<3216x256xbf16, #tpu.memory_space<vmem>>, vector<128x256xbf16>
    %cst_8 = arith.constant dense<0.000000e+00> : vector<2x256xf32>
    %11 = tpu.matmul %9, %10, %cst_8 {dimension_numbers = #tpu.dot_dimension_numbers<[1], [0], [0], [1], [0, 0, 1, 1], [], []>} : vector<2x128xbf16>, vector<128x256xbf16>, vector<2x256xf32> -> vector<2x256xf32>
    %c1 = arith.constant 1 : index
    %c0_9 = arith.constant 0 : index
    %12 = vector.load %arg2[%c1, %c0_9] : memref<32x1024xf32, #tpu.memory_space<vmem>>, vector<1x256xf32>
    %13 = vector.broadcast %12 : vector<1x256xf32> to vector<2x256xf32>
    %14 = arith.addf %11, %13 : vector<2x256xf32>
    %cst_10 = arith.constant 0.000000e+00 : f32
    %15 = vector.broadcast %cst_10 : f32 to vector<2x256xf32>
    %16 = arith.maximumf %14, %15 : vector<2x256xf32>
    %c0_11 = arith.constant 0 : index
    %c0_12 = arith.constant 0 : index
    %17 = vector.load %arg1[%c0_11, %c0_12] : memref<2x8xf32, #tpu.memory_space<vmem>>, vector<2x8xf32>
    %18 = arith.truncf %17 : vector<2x8xf32> to vector<2x8xbf16>
    %c128 = arith.constant 128 : index
    %c0_13 = arith.constant 0 : index
    %19 = vector.load %arg4[%c128, %c0_13] : memref<3216x256xbf16, #tpu.memory_space<vmem>>, vector<8x256xbf16>
    %cst_14 = arith.constant dense<0.000000e+00> : vector<2x256xf32>
    %20 = tpu.matmul %18, %19, %cst_14 {dimension_numbers = #tpu.dot_dimension_numbers<[1], [0], [0], [1], [0, 0, 1, 1], [], []>} : vector<2x8xbf16>, vector<8x256xbf16>, vector<2x256xf32> -> vector<2x256xf32>
    %c2 = arith.constant 2 : index
    %c0_15 = arith.constant 0 : index
    %21 = vector.load %arg2[%c2, %c0_15] : memref<32x1024xf32, #tpu.memory_space<vmem>>, vector<1x256xf32>
    %22 = vector.broadcast %21 : vector<1x256xf32> to vector<2x256xf32>
    %23 = arith.addf %20, %22 : vector<2x256xf32>
    %cst_16 = arith.constant 0.000000e+00 : f32
    %24 = vector.broadcast %cst_16 : f32 to vector<2x256xf32>
    %25 = arith.maximumf %23, %24 : vector<2x256xf32>
    %26 = vector.extract_strided_slice %25 {offsets = [0, 0], sizes = [2, 128], strides = [1, 1]} : vector<2x256xf32> to vector<2x128xf32>
    %27 = arith.truncf %26 : vector<2x128xf32> to vector<2x128xbf16>
    %c144 = arith.constant 144 : index
    %c0_17 = arith.constant 0 : index
    %28 = vector.load %arg4[%c144, %c0_17] : memref<3216x256xbf16, #tpu.memory_space<vmem>>, vector<128x256xbf16>
    %cst_18 = arith.constant dense<0.000000e+00> : vector<2x256xf32>
    %29 = tpu.matmul %27, %28, %cst_18 {dimension_numbers = #tpu.dot_dimension_numbers<[1], [0], [0], [1], [0, 0, 1, 1], [], []>} : vector<2x128xbf16>, vector<128x256xbf16>, vector<2x256xf32> -> vector<2x256xf32>
    %c3 = arith.constant 3 : index
    %c0_19 = arith.constant 0 : index
    %30 = vector.load %arg2[%c3, %c0_19] : memref<32x1024xf32, #tpu.memory_space<vmem>>, vector<1x256xf32>
    %31 = vector.broadcast %30 : vector<1x256xf32> to vector<2x256xf32>
    %32 = arith.addf %29, %31 : vector<2x256xf32>
    %cst_20 = arith.constant 0.000000e+00 : f32
    %33 = vector.broadcast %cst_20 : f32 to vector<2x256xf32>
    %34 = arith.maximumf %32, %33 : vector<2x256xf32>
    %35 = vector.extract_strided_slice %25 {offsets = [0, 128], sizes = [2, 128], strides = [1, 1]} : vector<2x256xf32> to vector<2x128xf32>
    %36 = arith.truncf %35 : vector<2x128xf32> to vector<2x128xbf16>
    %c272 = arith.constant 272 : index
    %c0_21 = arith.constant 0 : index
    %37 = vector.load %arg4[%c272, %c0_21] : memref<3216x256xbf16, #tpu.memory_space<vmem>>, vector<128x256xbf16>
    %cst_22 = arith.constant dense<0.000000e+00> : vector<2x256xf32>
    %38 = tpu.matmul %36, %37, %cst_22 {dimension_numbers = #tpu.dot_dimension_numbers<[1], [0], [0], [1], [0, 0, 1, 1], [], []>} : vector<2x128xbf16>, vector<128x256xbf16>, vector<2x256xf32> -> vector<2x256xf32>
    %c4 = arith.constant 4 : index
    %c0_23 = arith.constant 0 : index
    %39 = vector.load %arg2[%c4, %c0_23] : memref<32x1024xf32, #tpu.memory_space<vmem>>, vector<1x256xf32>
    %40 = vector.broadcast %39 : vector<1x256xf32> to vector<2x256xf32>
    %41 = arith.addf %38, %40 : vector<2x256xf32>
    %cst_24 = arith.constant 0.000000e+00 : f32
    %42 = vector.broadcast %cst_24 : f32 to vector<2x256xf32>
    %43 = arith.maximumf %41, %42 : vector<2x256xf32>
    %44 = arith.addf %16, %34 : vector<2x256xf32>
    %c5 = arith.constant 5 : index
    %c0_25 = arith.constant 0 : index
    %45 = vector.load %arg2[%c5, %c0_25] : memref<32x1024xf32, #tpu.memory_space<vmem>>, vector<1x256xf32>
    %46 = vector.broadcast %45 : vector<1x256xf32> to vector<2x256xf32>
    %47 = arith.addf %44, %46 : vector<2x256xf32>
    %cst_26 = arith.constant dense<0.000000e+00> : vector<2xf32>
    %48 = vector.multi_reduction <add>, %47, %cst_26 [1] : vector<2x256xf32> to vector<2xf32>
    %49 = vector.shape_cast %48 : vector<2xf32> to vector<2x1xf32>
    %cst_27 = arith.constant 2.560000e+02 : f32
    %50 = vector.broadcast %cst_27 : f32 to vector<2x1xf32>
    %51 = arith.divf %49, %50 : vector<2x1xf32>
    %52 = vector.broadcast %51 : vector<2x1xf32> to vector<2x256xf32>
    %53 = arith.subf %47, %52 : vector<2x256xf32>
    %54 = arith.mulf %53, %53 : vector<2x256xf32>
    %cst_28 = arith.constant dense<0.000000e+00> : vector<2xf32>
    %55 = vector.multi_reduction <add>, %54, %cst_28 [1] : vector<2x256xf32> to vector<2xf32>
    %56 = vector.shape_cast %55 : vector<2xf32> to vector<2x1xf32>
    %cst_29 = arith.constant 2.560000e+02 : f32
    %57 = vector.broadcast %cst_29 : f32 to vector<2x1xf32>
    %58 = arith.divf %56, %57 : vector<2x1xf32>
    %59 = vector.broadcast %51 : vector<2x1xf32> to vector<2x256xf32>
    %60 = arith.subf %47, %59 : vector<2x256xf32>
    %cst_30 = arith.constant 9.99999997E-7 : f32
    %61 = vector.broadcast %cst_30 : f32 to vector<2x1xf32>
    %62 = arith.addf %58, %61 : vector<2x1xf32>
    %63 = math.rsqrt %62 : vector<2x1xf32>
    %64 = vector.broadcast %63 : vector<2x1xf32> to vector<2x256xf32>
    %65 = arith.mulf %60, %64 : vector<2x256xf32>
    %c6 = arith.constant 6 : index
    %c0_31 = arith.constant 0 : index
    %66 = vector.load %arg2[%c6, %c0_31] : memref<32x1024xf32, #tpu.memory_space<vmem>>, vector<1x256xf32>
    %67 = vector.broadcast %66 : vector<1x256xf32> to vector<2x256xf32>
    %68 = arith.mulf %65, %67 : vector<2x256xf32>
    %c7 = arith.constant 7 : index
    %c0_32 = arith.constant 0 : index
    %69 = vector.load %arg2[%c7, %c0_32] : memref<32x1024xf32, #tpu.memory_space<vmem>>, vector<1x256xf32>
    %70 = vector.broadcast %69 : vector<1x256xf32> to vector<2x256xf32>
    %71 = arith.addf %68, %70 : vector<2x256xf32>
    %72 = arith.truncf %71 : vector<2x256xf32> to vector<2x256xbf16>
    %c400 = arith.constant 400 : index
    %c0_33 = arith.constant 0 : index
    %73 = vector.load %arg4[%c400, %c0_33] : memref<3216x256xbf16, #tpu.memory_space<vmem>>, vector<256x256xbf16>
    %cst_34 = arith.constant dense<0.000000e+00> : vector<2x256xf32>
    %74 = tpu.matmul %72, %73, %cst_34 {dimension_numbers = #tpu.dot_dimension_numbers<[1], [0], [0], [1], [0, 0, 1, 1], [], []>} : vector<2x256xbf16>, vector<256x256xbf16>, vector<2x256xf32> -> vector<2x256xf32>
    %c8 = arith.constant 8 : index
    %c0_35 = arith.constant 0 : index
    %75 = vector.load %arg2[%c8, %c0_35] : memref<32x1024xf32, #tpu.memory_space<vmem>>, vector<1x256xf32>
    %76 = vector.broadcast %75 : vector<1x256xf32> to vector<2x256xf32>
    %77 = arith.addf %74, %76 : vector<2x256xf32>
    %78 = arith.addf %47, %77 : vector<2x256xf32>
    %cst_36 = arith.constant dense<0.000000e+00> : vector<2xf32>
    %79 = vector.multi_reduction <add>, %78, %cst_36 [1] : vector<2x256xf32> to vector<2xf32>
    %80 = vector.shape_cast %79 : vector<2xf32> to vector<2x1xf32>
    %cst_37 = arith.constant 2.560000e+02 : f32
    %81 = vector.broadcast %cst_37 : f32 to vector<2x1xf32>
    %82 = arith.divf %80, %81 : vector<2x1xf32>
    %83 = vector.broadcast %82 : vector<2x1xf32> to vector<2x256xf32>
    %84 = arith.subf %78, %83 : vector<2x256xf32>
    %85 = arith.mulf %84, %84 : vector<2x256xf32>
    %cst_38 = arith.constant dense<0.000000e+00> : vector<2xf32>
    %86 = vector.multi_reduction <add>, %85, %cst_38 [1] : vector<2x256xf32> to vector<2xf32>
    %87 = vector.shape_cast %86 : vector<2xf32> to vector<2x1xf32>
    %cst_39 = arith.constant 2.560000e+02 : f32
    %88 = vector.broadcast %cst_39 : f32 to vector<2x1xf32>
    %89 = arith.divf %87, %88 : vector<2x1xf32>
    %90 = vector.broadcast %82 : vector<2x1xf32> to vector<2x256xf32>
    %91 = arith.subf %78, %90 : vector<2x256xf32>
    %cst_40 = arith.constant 9.99999997E-7 : f32
    %92 = vector.broadcast %cst_40 : f32 to vector<2x1xf32>
    %93 = arith.addf %89, %92 : vector<2x1xf32>
    %94 = math.rsqrt %93 : vector<2x1xf32>
    %95 = vector.broadcast %94 : vector<2x1xf32> to vector<2x256xf32>
    %96 = arith.mulf %91, %95 : vector<2x256xf32>
    %c9 = arith.constant 9 : index
    %c0_41 = arith.constant 0 : index
    %97 = vector.load %arg2[%c9, %c0_41] : memref<32x1024xf32, #tpu.memory_space<vmem>>, vector<1x256xf32>
    %98 = vector.broadcast %97 : vector<1x256xf32> to vector<2x256xf32>
    %99 = arith.mulf %96, %98 : vector<2x256xf32>
    %c10 = arith.constant 10 : index
    %c0_42 = arith.constant 0 : index
    %100 = vector.load %arg2[%c10, %c0_42] : memref<32x1024xf32, #tpu.memory_space<vmem>>, vector<1x256xf32>
    %101 = vector.broadcast %100 : vector<1x256xf32> to vector<2x256xf32>
    %102 = arith.addf %99, %101 : vector<2x256xf32>
    %103 = arith.truncf %102 : vector<2x256xf32> to vector<2x256xbf16>
    %c0_43 = arith.constant 0 : index
    %c0_44 = arith.constant 0 : index
    %104 = vector.load %arg5[%c0_43, %c0_44] : memref<512x1024xbf16, #tpu.memory_space<vmem>>, vector<256x1024xbf16>
    %cst_45 = arith.constant dense<0.000000e+00> : vector<2x1024xf32>
    %105 = tpu.matmul %103, %104, %cst_45 {dimension_numbers = #tpu.dot_dimension_numbers<[1], [0], [0], [1], [0, 0, 1, 1], [], []>} : vector<2x256xbf16>, vector<256x1024xbf16>, vector<2x1024xf32> -> vector<2x1024xf32>
    %c11 = arith.constant 11 : index
    %c0_46 = arith.constant 0 : index
    %106 = vector.load %arg2[%c11, %c0_46] : memref<32x1024xf32, #tpu.memory_space<vmem>>, vector<1x1024xf32>
    %107 = vector.broadcast %106 : vector<1x1024xf32> to vector<2x1024xf32>
    %108 = arith.addf %105, %107 : vector<2x1024xf32>
    %cst_47 = arith.constant 5.000000e-01 : f32
    %109 = vector.broadcast %cst_47 : f32 to vector<2x1024xf32>
    %110 = arith.mulf %109, %108 : vector<2x1024xf32>
    %cst_48 = arith.constant 4.471500e-02 : f32
    %111 = vector.broadcast %cst_48 : f32 to vector<2x1024xf32>
    %112 = arith.mulf %111, %108 : vector<2x1024xf32>
    %113 = arith.mulf %112, %108 : vector<2x1024xf32>
    %114 = arith.mulf %113, %108 : vector<2x1024xf32>
    %115 = arith.addf %108, %114 : vector<2x1024xf32>
    %cst_49 = arith.constant 0.797884583 : f32
    %116 = vector.broadcast %cst_49 : f32 to vector<2x1024xf32>
    %117 = arith.mulf %116, %115 : vector<2x1024xf32>
    %118 = math.tanh %117 : vector<2x1024xf32>
    %cst_50 = arith.constant 1.000000e+00 : f32
    %119 = vector.broadcast %cst_50 : f32 to vector<2x1024xf32>
    %120 = arith.addf %119, %118 : vector<2x1024xf32>
    %121 = arith.mulf %110, %120 : vector<2x1024xf32>
    %122 = arith.truncf %121 : vector<2x1024xf32> to vector<2x1024xbf16>
    %c656 = arith.constant 656 : index
    %c0_51 = arith.constant 0 : index
    %123 = vector.load %arg4[%c656, %c0_51] : memref<3216x256xbf16, #tpu.memory_space<vmem>>, vector<1024x256xbf16>
    %cst_52 = arith.constant dense<0.000000e+00> : vector<2x256xf32>
    %124 = tpu.matmul %122, %123, %cst_52 {dimension_numbers = #tpu.dot_dimension_numbers<[1], [0], [0], [1], [0, 0, 1, 1], [], []>} : vector<2x1024xbf16>, vector<1024x256xbf16>, vector<2x256xf32> -> vector<2x256xf32>
    %c12 = arith.constant 12 : index
    %c0_53 = arith.constant 0 : index
    %125 = vector.load %arg2[%c12, %c0_53] : memref<32x1024xf32, #tpu.memory_space<vmem>>, vector<1x256xf32>
    %126 = vector.broadcast %125 : vector<1x256xf32> to vector<2x256xf32>
    %127 = arith.addf %124, %126 : vector<2x256xf32>
    %128 = arith.addf %78, %127 : vector<2x256xf32>
    %cst_54 = arith.constant dense<0.000000e+00> : vector<2xf32>
    %129 = vector.multi_reduction <add>, %128, %cst_54 [1] : vector<2x256xf32> to vector<2xf32>
    %130 = vector.shape_cast %129 : vector<2xf32> to vector<2x1xf32>
    %cst_55 = arith.constant 2.560000e+02 : f32
    %131 = vector.broadcast %cst_55 : f32 to vector<2x1xf32>
    %132 = arith.divf %130, %131 : vector<2x1xf32>
    %133 = vector.broadcast %132 : vector<2x1xf32> to vector<2x256xf32>
    %134 = arith.subf %128, %133 : vector<2x256xf32>
    %135 = arith.mulf %134, %134 : vector<2x256xf32>
    %cst_56 = arith.constant dense<0.000000e+00> : vector<2xf32>
    %136 = vector.multi_reduction <add>, %135, %cst_56 [1] : vector<2x256xf32> to vector<2xf32>
    %137 = vector.shape_cast %136 : vector<2xf32> to vector<2x1xf32>
    %cst_57 = arith.constant 2.560000e+02 : f32
    %138 = vector.broadcast %cst_57 : f32 to vector<2x1xf32>
    %139 = arith.divf %137, %138 : vector<2x1xf32>
    %140 = vector.broadcast %132 : vector<2x1xf32> to vector<2x256xf32>
    %141 = arith.subf %128, %140 : vector<2x256xf32>
    %cst_58 = arith.constant 9.99999997E-7 : f32
    %142 = vector.broadcast %cst_58 : f32 to vector<2x1xf32>
    %143 = arith.addf %139, %142 : vector<2x1xf32>
    %144 = math.rsqrt %143 : vector<2x1xf32>
    %145 = vector.broadcast %144 : vector<2x1xf32> to vector<2x256xf32>
    %146 = arith.mulf %141, %145 : vector<2x256xf32>
    %c13 = arith.constant 13 : index
    %c0_59 = arith.constant 0 : index
    %147 = vector.load %arg2[%c13, %c0_59] : memref<32x1024xf32, #tpu.memory_space<vmem>>, vector<1x256xf32>
    %148 = vector.broadcast %147 : vector<1x256xf32> to vector<2x256xf32>
    %149 = arith.mulf %146, %148 : vector<2x256xf32>
    %c14 = arith.constant 14 : index
    %c0_60 = arith.constant 0 : index
    %150 = vector.load %arg2[%c14, %c0_60] : memref<32x1024xf32, #tpu.memory_space<vmem>>, vector<1x256xf32>
    %151 = vector.broadcast %150 : vector<1x256xf32> to vector<2x256xf32>
    %152 = arith.addf %149, %151 : vector<2x256xf32>
    %153 = arith.truncf %152 : vector<2x256xf32> to vector<2x256xbf16>
    %c1680 = arith.constant 1680 : index
    %c0_61 = arith.constant 0 : index
    %154 = vector.load %arg4[%c1680, %c0_61] : memref<3216x256xbf16, #tpu.memory_space<vmem>>, vector<256x256xbf16>
    %cst_62 = arith.constant dense<0.000000e+00> : vector<2x256xf32>
    %155 = tpu.matmul %153, %154, %cst_62 {dimension_numbers = #tpu.dot_dimension_numbers<[1], [0], [0], [1], [0, 0, 1, 1], [], []>} : vector<2x256xbf16>, vector<256x256xbf16>, vector<2x256xf32> -> vector<2x256xf32>
    %c15 = arith.constant 15 : index
    %c0_63 = arith.constant 0 : index
    %156 = vector.load %arg2[%c15, %c0_63] : memref<32x1024xf32, #tpu.memory_space<vmem>>, vector<1x256xf32>
    %157 = vector.broadcast %156 : vector<1x256xf32> to vector<2x256xf32>
    %158 = arith.addf %155, %157 : vector<2x256xf32>
    %159 = arith.addf %128, %158 : vector<2x256xf32>
    %cst_64 = arith.constant dense<0.000000e+00> : vector<2xf32>
    %160 = vector.multi_reduction <add>, %159, %cst_64 [1] : vector<2x256xf32> to vector<2xf32>
    %161 = vector.shape_cast %160 : vector<2xf32> to vector<2x1xf32>
    %cst_65 = arith.constant 2.560000e+02 : f32
    %162 = vector.broadcast %cst_65 : f32 to vector<2x1xf32>
    %163 = arith.divf %161, %162 : vector<2x1xf32>
    %164 = vector.broadcast %163 : vector<2x1xf32> to vector<2x256xf32>
    %165 = arith.subf %159, %164 : vector<2x256xf32>
    %166 = arith.mulf %165, %165 : vector<2x256xf32>
    %cst_66 = arith.constant dense<0.000000e+00> : vector<2xf32>
    %167 = vector.multi_reduction <add>, %166, %cst_66 [1] : vector<2x256xf32> to vector<2xf32>
    %168 = vector.shape_cast %167 : vector<2xf32> to vector<2x1xf32>
    %cst_67 = arith.constant 2.560000e+02 : f32
    %169 = vector.broadcast %cst_67 : f32 to vector<2x1xf32>
    %170 = arith.divf %168, %169 : vector<2x1xf32>
    %171 = vector.broadcast %163 : vector<2x1xf32> to vector<2x256xf32>
    %172 = arith.subf %159, %171 : vector<2x256xf32>
    %cst_68 = arith.constant 9.99999997E-7 : f32
    %173 = vector.broadcast %cst_68 : f32 to vector<2x1xf32>
    %174 = arith.addf %170, %173 : vector<2x1xf32>
    %175 = math.rsqrt %174 : vector<2x1xf32>
    %176 = vector.broadcast %175 : vector<2x1xf32> to vector<2x256xf32>
    %177 = arith.mulf %172, %176 : vector<2x256xf32>
    %c16 = arith.constant 16 : index
    %c0_69 = arith.constant 0 : index
    %178 = vector.load %arg2[%c16, %c0_69] : memref<32x1024xf32, #tpu.memory_space<vmem>>, vector<1x256xf32>
    %179 = vector.broadcast %178 : vector<1x256xf32> to vector<2x256xf32>
    %180 = arith.mulf %177, %179 : vector<2x256xf32>
    %c17 = arith.constant 17 : index
    %c0_70 = arith.constant 0 : index
    %181 = vector.load %arg2[%c17, %c0_70] : memref<32x1024xf32, #tpu.memory_space<vmem>>, vector<1x256xf32>
    %182 = vector.broadcast %181 : vector<1x256xf32> to vector<2x256xf32>
    %183 = arith.addf %180, %182 : vector<2x256xf32>
    %184 = arith.truncf %183 : vector<2x256xf32> to vector<2x256xbf16>
    %c256 = arith.constant 256 : index
    %c0_71 = arith.constant 0 : index
    %185 = vector.load %arg5[%c256, %c0_71] : memref<512x1024xbf16, #tpu.memory_space<vmem>>, vector<256x1024xbf16>
    %cst_72 = arith.constant dense<0.000000e+00> : vector<2x1024xf32>
    %186 = tpu.matmul %184, %185, %cst_72 {dimension_numbers = #tpu.dot_dimension_numbers<[1], [0], [0], [1], [0, 0, 1, 1], [], []>} : vector<2x256xbf16>, vector<256x1024xbf16>, vector<2x1024xf32> -> vector<2x1024xf32>
    %c18 = arith.constant 18 : index
    %c0_73 = arith.constant 0 : index
    %187 = vector.load %arg2[%c18, %c0_73] : memref<32x1024xf32, #tpu.memory_space<vmem>>, vector<1x1024xf32>
    %188 = vector.broadcast %187 : vector<1x1024xf32> to vector<2x1024xf32>
    %189 = arith.addf %186, %188 : vector<2x1024xf32>
    %cst_74 = arith.constant 5.000000e-01 : f32
    %190 = vector.broadcast %cst_74 : f32 to vector<2x1024xf32>
    %191 = arith.mulf %190, %189 : vector<2x1024xf32>
    %cst_75 = arith.constant 4.471500e-02 : f32
    %192 = vector.broadcast %cst_75 : f32 to vector<2x1024xf32>
    %193 = arith.mulf %192, %189 : vector<2x1024xf32>
    %194 = arith.mulf %193, %189 : vector<2x1024xf32>
    %195 = arith.mulf %194, %189 : vector<2x1024xf32>
    %196 = arith.addf %189, %195 : vector<2x1024xf32>
    %cst_76 = arith.constant 0.797884583 : f32
    %197 = vector.broadcast %cst_76 : f32 to vector<2x1024xf32>
    %198 = arith.mulf %197, %196 : vector<2x1024xf32>
    %199 = math.tanh %198 : vector<2x1024xf32>
    %cst_77 = arith.constant 1.000000e+00 : f32
    %200 = vector.broadcast %cst_77 : f32 to vector<2x1024xf32>
    %201 = arith.addf %200, %199 : vector<2x1024xf32>
    %202 = arith.mulf %191, %201 : vector<2x1024xf32>
    %203 = arith.truncf %202 : vector<2x1024xf32> to vector<2x1024xbf16>
    %c1936 = arith.constant 1936 : index
    %c0_78 = arith.constant 0 : index
    %204 = vector.load %arg4[%c1936, %c0_78] : memref<3216x256xbf16, #tpu.memory_space<vmem>>, vector<1024x256xbf16>
    %cst_79 = arith.constant dense<0.000000e+00> : vector<2x256xf32>
    %205 = tpu.matmul %203, %204, %cst_79 {dimension_numbers = #tpu.dot_dimension_numbers<[1], [0], [0], [1], [0, 0, 1, 1], [], []>} : vector<2x1024xbf16>, vector<1024x256xbf16>, vector<2x256xf32> -> vector<2x256xf32>
    %c19 = arith.constant 19 : index
    %c0_80 = arith.constant 0 : index
    %206 = vector.load %arg2[%c19, %c0_80] : memref<32x1024xf32, #tpu.memory_space<vmem>>, vector<1x256xf32>
    %207 = vector.broadcast %206 : vector<1x256xf32> to vector<2x256xf32>
    %208 = arith.addf %205, %207 : vector<2x256xf32>
    %209 = arith.addf %159, %208 : vector<2x256xf32>
    %210 = arith.addf %209, %43 : vector<2x256xf32>
    %211 = arith.truncf %210 : vector<2x256xf32> to vector<2x256xbf16>
    %c2960 = arith.constant 2960 : index
    %c0_81 = arith.constant 0 : index
    %212 = vector.load %arg4[%c2960, %c0_81] : memref<3216x256xbf16, #tpu.memory_space<vmem>>, vector<256x256xbf16>
    %cst_82 = arith.constant dense<0.000000e+00> : vector<2x256xf32>
    %213 = tpu.matmul %211, %212, %cst_82 {dimension_numbers = #tpu.dot_dimension_numbers<[1], [0], [0], [1], [0, 0, 1, 1], [], []>} : vector<2x256xbf16>, vector<256x256xbf16>, vector<2x256xf32> -> vector<2x256xf32>
    %c20 = arith.constant 20 : index
    %c0_83 = arith.constant 0 : index
    %214 = vector.load %arg2[%c20, %c0_83] : memref<32x1024xf32, #tpu.memory_space<vmem>>, vector<1x256xf32>
    %215 = vector.broadcast %214 : vector<1x256xf32> to vector<2x256xf32>
    %216 = arith.addf %213, %215 : vector<2x256xf32>
    %cst_84 = arith.constant 0.000000e+00 : f32
    %217 = vector.broadcast %cst_84 : f32 to vector<2x256xf32>
    %218 = arith.maximumf %216, %217 : vector<2x256xf32>
    %219 = arith.truncf %218 : vector<2x256xf32> to vector<2x256xbf16>
    %c64 = arith.constant 64 : index
    %c0_85 = arith.constant 0 : index
    %220 = vector.load %arg3[%c64, %c0_85] : memref<704x128xbf16, #tpu.memory_space<vmem>>, vector<256x128xbf16>
    %cst_86 = arith.constant dense<0.000000e+00> : vector<2x128xf32>
    %221 = tpu.matmul %219, %220, %cst_86 {dimension_numbers = #tpu.dot_dimension_numbers<[1], [0], [0], [1], [0, 0, 1, 1], [], []>} : vector<2x256xbf16>, vector<256x128xbf16>, vector<2x128xf32> -> vector<2x128xf32>
    %c21 = arith.constant 21 : index
    %c0_87 = arith.constant 0 : index
    %222 = vector.load %arg2[%c21, %c0_87] : memref<32x1024xf32, #tpu.memory_space<vmem>>, vector<1x128xf32>
    %223 = vector.broadcast %222 : vector<1x128xf32> to vector<2x128xf32>
    %224 = arith.addf %221, %223 : vector<2x128xf32>
    %cst_88 = arith.constant 0.000000e+00 : f32
    %225 = vector.broadcast %cst_88 : f32 to vector<2x128xf32>
    %226 = arith.maximumf %224, %225 : vector<2x128xf32>
    %227 = arith.truncf %226 : vector<2x128xf32> to vector<2x128xbf16>
    %c320 = arith.constant 320 : index
    %c0_89 = arith.constant 0 : index
    %228 = vector.load %arg3[%c320, %c0_89] : memref<704x128xbf16, #tpu.memory_space<vmem>>, vector<128x128xbf16>
    %cst_90 = arith.constant dense<0.000000e+00> : vector<2x128xf32>
    %229 = tpu.matmul %227, %228, %cst_90 {dimension_numbers = #tpu.dot_dimension_numbers<[1], [0], [0], [1], [0, 0, 1, 1], [], []>} : vector<2x128xbf16>, vector<128x128xbf16>, vector<2x128xf32> -> vector<2x128xf32>
    %c22 = arith.constant 22 : index
    %c0_91 = arith.constant 0 : index
    %230 = vector.load %arg2[%c22, %c0_91] : memref<32x1024xf32, #tpu.memory_space<vmem>>, vector<1x128xf32>
    %231 = vector.broadcast %230 : vector<1x128xf32> to vector<2x128xf32>
    %232 = arith.addf %229, %231 : vector<2x128xf32>
    %cst_92 = arith.constant 0.000000e+00 : f32
    %233 = vector.broadcast %cst_92 : f32 to vector<2x128xf32>
    %234 = arith.maximumf %232, %233 : vector<2x128xf32>
    %235 = arith.truncf %234 : vector<2x128xf32> to vector<2x128xbf16>
    %c448 = arith.constant 448 : index
    %c0_93 = arith.constant 0 : index
    %236 = vector.load %arg3[%c448, %c0_93] : memref<704x128xbf16, #tpu.memory_space<vmem>>, vector<128x128xbf16>
    %cst_94 = arith.constant dense<0.000000e+00> : vector<2x128xf32>
    %237 = tpu.matmul %235, %236, %cst_94 {dimension_numbers = #tpu.dot_dimension_numbers<[1], [0], [0], [1], [0, 0, 1, 1], [], []>} : vector<2x128xbf16>, vector<128x128xbf16>, vector<2x128xf32> -> vector<2x128xf32>
    %c23 = arith.constant 23 : index
    %c0_95 = arith.constant 0 : index
    %238 = vector.load %arg2[%c23, %c0_95] : memref<32x1024xf32, #tpu.memory_space<vmem>>, vector<1x128xf32>
    %239 = vector.broadcast %238 : vector<1x128xf32> to vector<2x128xf32>
    %240 = arith.addf %237, %239 : vector<2x128xf32>
    %cst_96 = arith.constant 0.000000e+00 : f32
    %241 = vector.broadcast %cst_96 : f32 to vector<2x128xf32>
    %242 = arith.maximumf %240, %241 : vector<2x128xf32>
    %243 = arith.truncf %242 : vector<2x128xf32> to vector<2x128xbf16>
    %c576 = arith.constant 576 : index
    %c0_97 = arith.constant 0 : index
    %244 = vector.load %arg3[%c576, %c0_97] : memref<704x128xbf16, #tpu.memory_space<vmem>>, vector<128x128xbf16>
    %cst_98 = arith.constant dense<0.000000e+00> : vector<2x128xf32>
    %245 = tpu.matmul %243, %244, %cst_98 {dimension_numbers = #tpu.dot_dimension_numbers<[1], [0], [0], [1], [0, 0, 1, 1], [], []>} : vector<2x128xbf16>, vector<128x128xbf16>, vector<2x128xf32> -> vector<2x128xf32>
    %c24 = arith.constant 24 : index
    %c0_99 = arith.constant 0 : index
    %246 = vector.load %arg2[%c24, %c0_99] : memref<32x1024xf32, #tpu.memory_space<vmem>>, vector<1x128xf32>
    %247 = vector.broadcast %246 : vector<1x128xf32> to vector<2x128xf32>
    %248 = arith.addf %245, %247 : vector<2x128xf32>
    %cst_100 = arith.constant 0.000000e+00 : f32
    %249 = vector.broadcast %cst_100 : f32 to vector<2x128xf32>
    %250 = arith.maximumf %248, %249 : vector<2x128xf32>
    %c0_101 = arith.constant 0 : index
    %c0_102 = arith.constant 0 : index
    %251 = vector.load %arg6[%c0_101, %c0_102] : memref<2x128xf32, #tpu.memory_space<vmem>>, vector<2x128xf32>
    tpu.vector_store %arg6[%c0_101, %c0_102], %250 {strides = array<i32>} : memref<2x128xf32, #tpu.memory_space<vmem>>, vector<2x128xf32>,
    return
  }
}

</mosaic_0001>

<llo_original>
// kernel: preae_forward.1
$region0: #{preae_forward.1}
  #allocation0 [shape = 'u32[]', space=smem, size = 0x4, offset = 0x4, fixed_abs, tag = 'smem constant byte address 0x4 - core index']
  #allocation1 [shape = 'u32[72,128]{1,0:T(1,128)}', space=vmem, size = 0x9000, scoped, tag = 'internal scratch']
  %s0 = inlined_call_operand.hbm [shape: f32[2,64], index: 0, kind: input, shape index: {}]
  %s1 = inlined_call_operand.vmem [shape: f32[2,8], index: 1, kind: input, shape index: {}]
  %s2 = inlined_call_operand.hbm [shape: f32[32,1024], index: 2, kind: input, shape index: {}]
  %s3 = inlined_call_operand.hbm [shape: bf16[704,128], index: 3, kind: input, shape index: {}]
  %s4 = inlined_call_operand.hbm [shape: bf16[3216,256], index: 4, kind: input, shape index: {}]
  %s5 = inlined_call_operand.hbm [shape: bf16[512,1024], index: 5, kind: input, shape index: {}]
  %s6 = inlined_call_operand.hbm [shape: f32[2,128], index: 6, kind: output, shape index: {}]
  %s7 = sld [smem:[#allocation0]]
  $region54: #{preae_forward.1} parent=0
    _
  %s9 = ssub.s32 1, %s7
  %s10 = scalar_select 0, %s9, %s7
  $region1: #{preae_forward.1} parent=0
    #allocation2 [shape = 'u8[1024]{0}', space=vmem, size = 0x400, scoped, tag = 'input window, operand 0, single buffered']
    #allocation3 [shape = 's32[1]{0}', space=sflag, size = 0x4, scoped, tag = 'scoped memory for preae_forward.1']
    #allocation4 [shape = 's32[1]{0}', space=sflag, size = 0x4, scoped, tag = 'scoped memory for preae_forward.1']
    #allocation5 [shape = 'u8[131072]{0}', space=vmem, size = 0x20000, scoped, tag = 'input window, operand 2, single buffered']
    #allocation6 [shape = 's32[1]{0}', space=sflag, size = 0x4, scoped, tag = 'scoped memory for preae_forward.1']
    #allocation7 [shape = 'u8[180224]{0}', space=vmem, size = 0x2c000, scoped, tag = 'input window, operand 3, single buffered']
    #allocation8 [shape = 'u8[1646592]{0}', space=vmem, size = 0x192000, scoped, tag = 'input window, operand 4, single buffered']
    #allocation9 [shape = 's32[1]{0}', space=sflag, size = 0x4, scoped, tag = 'scoped memory for preae_forward.1']
    #allocation10 [shape = 'u8[1048576]{0}', space=vmem, size = 0x100000, scoped, tag = 'input window, operand 5, single buffered']
    #allocation11 [shape = 'u8[1024]{0}', space=vmem, size = 0x400, scoped, tag = 'output window, operand 0, single buffered']
    %11 = vsyncpa [#allocation3], 0
    %12 = vsyncpa [#allocation6], 0
    %13 = vsyncpa [#allocation9], 0
    %14 = vsyncpa [#allocation4], 0
    // Predicated region
    $region2: #{preae_forward.1} parent=1 // pred_check
      _
    $region3: #{preae_forward.1} parent=1 // pred_check_branch
      %16 = sbr.rel (0) target = $region5
    $region4: #{preae_forward.1} parent=1 // pred_region
      %18 = vsyncadd [#allocation3], 0
      %s20 = sshll.u32 %s0, 4
      %s21 = int_to_ptr.hbm [resolvable:$true] %s20
      %s22 = sshll.u32 [#allocation2], 4
      %s23 = int_to_ptr.vmem [resolvable:$true] %s22
      %25 = dma.hbm_to_vmem [thread:$0]  %s21, 32, %s23, [#allocation3]
    $region5: #{preae_forward.1} parent=1 // pred_fallthru
      _
    // Predicated region
    $region6: #{preae_forward.1} parent=1 // pred_check
      _
    $region7: #{preae_forward.1} parent=1 // pred_check_branch
      %27 = sbr.rel (0) target = $region9
    $region8: #{preae_forward.1} parent=1 // pred_region
      _
    $region9: #{preae_forward.1} parent=1 // pred_fallthru
      _
    // Predicated region
    $region10: #{preae_forward.1} parent=1 // pred_check
      _
    $region11: #{preae_forward.1} parent=1 // pred_check_branch
      %29 = sbr.rel (0) target = $region13
    $region12: #{preae_forward.1} parent=1 // pred_region
      %31 = vsyncadd [#allocation6], 0
      %s32 = sshll.u32 %s2, 4
      %s33 = int_to_ptr.hbm [resolvable:$true] %s32
      %s34 = sshll.u32 [#allocation5], 4
      %s35 = int_to_ptr.vmem [resolvable:$true] %s34
      %40 = dma.hbm_to_vmem [thread:$0]  %s33, 4096, %s35, [#allocation6], 1024, 1024, 64
    $region13: #{preae_forward.1} parent=1 // pred_fallthru
      _
    // Predicated region
    $region14: #{preae_forward.1} parent=1 // pred_check
      _
    $region15: #{preae_forward.1} parent=1 // pred_check_branch
      %42 = sbr.rel (0) target = $region17
    $region16: #{preae_forward.1} parent=1 // pred_region
      %44 = vsyncadd [#allocation6], 0
      %s45 = sshll.u32 %s3, 4
      %s46 = int_to_ptr.hbm [resolvable:$true] %s45
      %s47 = sshll.u32 [#allocation7], 4
      %s48 = int_to_ptr.vmem [resolvable:$true] %s47
      %53 = dma.hbm_to_vmem [thread:$0]  %s46, 5632, %s48, [#allocation6], 64, 64, 4
    $region17: #{preae_forward.1} parent=1 // pred_fallthru
      _
    // Predicated region
    $region18: #{preae_forward.1} parent=1 // pred_check
      _
    $region19: #{preae_forward.1} parent=1 // pred_check_branch
      %55 = sbr.rel (0) target = $region21
    $region20: #{preae_forward.1} parent=1 // pred_region
      %57 = vsyncadd [#allocation9], 0
      %s58 = sshll.u32 %s4, 4
      %s59 = int_to_ptr.hbm [resolvable:$true] %s58
      %s60 = sshll.u32 [#allocation8], 4
      %s61 = int_to_ptr.vmem [resolvable:$true] %s60
      %66 = dma.hbm_to_vmem [thread:$0]  %s59, 51456, %s61, [#allocation9], 128, 128, 8
    $region21: #{preae_forward.1} parent=1 // pred_fallthru
      _
    // Predicated region
    $region22: #{preae_forward.1} parent=1 // pred_check
      _
    $region23: #{preae_forward.1} parent=1 // pred_check_branch
      %68 = sbr.rel (0) target = $region25
    $region24: #{preae_forward.1} parent=1 // pred_region
      %70 = vsyncadd [#allocation9], 0
      %s71 = sshll.u32 %s5, 4
      %s72 = int_to_ptr.hbm [resolvable:$true] %s71
      %s73 = sshll.u32 [#allocation10], 4
      %s74 = int_to_ptr.vmem [resolvable:$true] %s73
      %79 = dma.hbm_to_vmem [thread:$0]  %s72, 32768, %s74, [#allocation9], 512, 512, 32
    $region25: #{preae_forward.1} parent=1 // pred_fallthru
      _
    // Predicated region
    $region26: #{preae_forward.1} parent=1 // pred_check
      _
    $region27: #{preae_forward.1} parent=1 // pred_check_branch
      %81 = sbr.rel (0) target = $region29
    $region28: #{preae_forward.1} parent=1 // pred_region
      %83 = dma.done [#allocation3], 32
    $region29: #{preae_forward.1} parent=1 // pred_fallthru
      _
    // Predicated region
    $region30: #{preae_forward.1} parent=1 // pred_check
      _
    $region31: #{preae_forward.1} parent=1 // pred_check_branch
      %85 = sbr.rel (0) target = $region33
    $region32: #{preae_forward.1} parent=1 // pred_region
      %87 = dma.done [#allocation6], 4096
    $region33: #{preae_forward.1} parent=1 // pred_fallthru
      _
    // Predicated region
    $region34: #{preae_forward.1} parent=1 // pred_check
      _
    $region35: #{preae_forward.1} parent=1 // pred_check_branch
      %89 = sbr.rel (0) target = $region37
    $region36: #{preae_forward.1} parent=1 // pred_region
      %91 = dma.done [#allocation6], 5632
    $region37: #{preae_forward.1} parent=1 // pred_fallthru
      _
    // Predicated region
    $region38: #{preae_forward.1} parent=1 // pred_check
      _
    $region39: #{preae_forward.1} parent=1 // pred_check_branch
      %93 = sbr.rel (0) target = $region41
    $region40: #{preae_forward.1} parent=1 // pred_region
      %95 = dma.done [#allocation9], 51456
    $region41: #{preae_forward.1} parent=1 // pred_fallthru
      _
    // Predicated region
    $region42: #{preae_forward.1} parent=1 // pred_check
      _
    $region43: #{preae_forward.1} parent=1 // pred_check_branch
      %97 = sbr.rel (0) target = $region45
    $region44: #{preae_forward.1} parent=1 // pred_region
      %99 = dma.done [#allocation9], 32768
    $region45: #{preae_forward.1} parent=1 // pred_fallthru
      _
    %v101 = vld [vmem:[#allocation2] sm:$0x3]
    %v102 = vpack.c.bf16 %v101, %v101
    %v103 = vld [vmem:[#allocation7] sm:$0xf]
    %v104 = vld [vmem:[#allocation7 + $0x4] sm:$0xf]
    %v105 = vld [vmem:[#allocation7 + $0x8] sm:$0xf]
    %v106 = vld [vmem:[#allocation7 + $0xc] sm:$0xf]
    %v107 = vld [vmem:[#allocation7 + $0x10] sm:$0xf]
    %v108 = vld [vmem:[#allocation7 + $0x14] sm:$0xf]
    %v109 = vld [vmem:[#allocation7 + $0x18] sm:$0xf]
    %v110 = vld [vmem:[#allocation7 + $0x1c] sm:$0xf]
    %v111 = vld [vmem:[#allocation5] ss:$0 sm:$0xff]
    %v120 = vunpack.c.l.b16 %v103
    %v121 = vunpack.c.l.b16 %v104
    %v122 = vunpack.c.l.b16 %v105
    %v123 = vunpack.c.l.b16 %v106
    %v124 = vunpack.c.l.b16 %v107
    %v125 = vunpack.c.l.b16 %v108
    %v126 = vunpack.c.l.b16 %v109
    %v127 = vunpack.c.l.b16 %v110
    %v128 = vpack.c.b16 %v121, %v120
    %v129 = vpack.c.b16 %v123, %v122
    %v130 = vpack.c.b16 %v125, %v124
    %v131 = vpack.c.b16 %v127, %v126
    %vm136 = vcmask 523264
    %v138 = vsel %vm136, %v102, 0
    %140 = vmatpush.bf16.msra.mxu0 0
    %141 = vmatpush.bf16.msra.mxu0 0
    %142 = vmatpush.bf16.msra.mxu0 0
    %143 = vmatpush.bf16.msra.mxu0 0
    %144 = vmatpush.bf16.msra.mxu0 %v131
    %145 = vmatpush.bf16.msra.mxu0 %v130
    %146 = vmatpush.bf16.msra.mxu0 %v129
    %147 = vmatpush.bf16.msra.mxu0 %v128
    %148 = vmatmul.bf16.gmra.mxu0 %v138
    %v149 = vpop.f32.mrf.mxu0
    %v150 = vadd.f32 %v111, %v149
    %v151 = vpop.f32.mrf.mxu0
    %152 = vdwg.mxu0
    %v153 = vmax.f32 %v150, 0.0
    %v154 = vpack.c.bf16 %v153, %v153
    %v155 = vld [vmem:[#allocation8] sm:$0xff]
    %v156 = vld [vmem:[#allocation8 + $0x8] sm:$0xff]
    %v157 = vld [vmem:[#allocation8 + $0x10] sm:$0xff]
    %v158 = vld [vmem:[#allocation8 + $0x18] sm:$0xff]
    %v159 = vld [vmem:[#allocation8 + $0x20] sm:$0xff]
    %v160 = vld [vmem:[#allocation8 + $0x28] sm:$0xff]
    %v161 = vld [vmem:[#allocation8 + $0x30] sm:$0xff]
    %v162 = vld [vmem:[#allocation8 + $0x38] sm:$0xff]
    %v163 = vld [vmem:[#allocation8 + $0x40] sm:$0xff]
    %v164 = vld [vmem:[#allocation8 + $0x48] sm:$0xff]
    %v165 = vld [vmem:[#allocation8 + $0x50] sm:$0xff]
    %v166 = vld [vmem:[#allocation8 + $0x58] sm:$0xff]
    %v167 = vld [vmem:[#allocation8 + $0x60] sm:$0xff]
    %v168 = vld [vmem:[#allocation8 + $0x68] sm:$0xff]
    %v169 = vld [vmem:[#allocation8 + $0x70] sm:$0xff]
    %v170 = vld [vmem:[#allocation8 + $0x78] sm:$0xff]
    %s171 = scalar_lea.vmem [#allocation5], 1
    %v172 = vld [vmem:[%s171] ss:$8 sm:$0x3]
    %v174 = vperm.slane %v172, 0
    %v175 = vperm.slane %v172, 1
    %v194 = vunpack.c.l.b16 %v155
    %v195 = vunpack.c.h.b16 %v155
    %v196 = vunpack.c.l.b16 %v156
    %v197 = vunpack.c.h.b16 %v156
    %v198 = vunpack.c.l.b16 %v157
    %v199 = vunpack.c.h.b16 %v157
    %v200 = vunpack.c.l.b16 %v158
    %v201 = vunpack.c.h.b16 %v158
    %v202 = vunpack.c.l.b16 %v159
    %v203 = vunpack.c.h.b16 %v159
    %v204 = vunpack.c.l.b16 %v160
    %v205 = vunpack.c.h.b16 %v160
    %v206 = vunpack.c.l.b16 %v161
    %v207 = vunpack.c.h.b16 %v161
    %v208 = vunpack.c.l.b16 %v162
    %v209 = vunpack.c.h.b16 %v162
    %v210 = vunpack.c.l.b16 %v163
    %v211 = vunpack.c.h.b16 %v163
    %v212 = vunpack.c.l.b16 %v164
    %v213 = vunpack.c.h.b16 %v164
    %v214 = vunpack.c.l.b16 %v165
    %v215 = vunpack.c.h.b16 %v165
    %v216 = vunpack.c.l.b16 %v166
    %v217 = vunpack.c.h.b16 %v166
    %v218 = vunpack.c.l.b16 %v167
    %v219 = vunpack.c.h.b16 %v167
    %v220 = vunpack.c.l.b16 %v168
    %v221 = vunpack.c.h.b16 %v168
    %v222 = vunpack.c.l.b16 %v169
    %v223 = vunpack.c.h.b16 %v169
    %v224 = vunpack.c.l.b16 %v170
    %v225 = vunpack.c.h.b16 %v170
    %v226 = vpack.c.b16 %v196, %v194
    %v227 = vpack.c.b16 %v197, %v195
    %v228 = vpack.c.b16 %v200, %v198
    %v229 = vpack.c.b16 %v201, %v199
    %v230 = vpack.c.b16 %v204, %v202
    %v231 = vpack.c.b16 %v205, %v203
    %v232 = vpack.c.b16 %v208, %v206
    %v233 = vpack.c.b16 %v209, %v207
    %v234 = vpack.c.b16 %v212, %v210
    %v235 = vpack.c.b16 %v213, %v211
    %v236 = vpack.c.b16 %v216, %v214
    %v237 = vpack.c.b16 %v217, %v215
    %v238 = vpack.c.b16 %v220, %v218
    %v239 = vpack.c.b16 %v221, %v219
    %v240 = vpack.c.b16 %v224, %v222
    %v241 = vpack.c.b16 %v225, %v223
    %258 = vmatpush.bf16.msra.mxu0 %v240
    %259 = vmatpush.bf16.msra.mxu0 %v238
    %260 = vmatpush.bf16.msra.mxu0 %v236
    %261 = vmatpush.bf16.msra.mxu0 %v234
    %262 = vmatpush.bf16.msra.mxu0 %v232
    %263 = vmatpush.bf16.msra.mxu0 %v230
    %264 = vmatpush.bf16.msra.mxu0 %v228
    %265 = vmatpush.bf16.msra.mxu0 %v226
    %266 = vmatmul.bf16.gmra.mxu0 %v154
    %v267 = vpop.f32.mrf.mxu0
    %v268 = vadd.f32 %v174, %v267
    %v269 = vpop.f32.mrf.mxu0
    %270 = vdwg.mxu0
    %271 = vmatpush.bf16.msra.mxu0 %v241
    %272 = vmatpush.bf16.msra.mxu0 %v239
    %273 = vmatpush.bf16.msra.mxu0 %v237
    %274 = vmatpush.bf16.msra.mxu0 %v235
    %275 = vmatpush.bf16.msra.mxu0 %v233
    %276 = vmatpush.bf16.msra.mxu0 %v231
    %277 = vmatpush.bf16.msra.mxu0 %v229
    %278 = vmatpush.bf16.msra.mxu0 %v227
    %279 = vmatmul.bf16.gmra.mxu0 %v154
    %v280 = vpop.f32.mrf.mxu0
    %v281 = vadd.f32 %v175, %v280
    %v282 = vpop.f32.mrf.mxu0
    %283 = vdwg.mxu0
    %v284 = vmax.f32 %v268, 0.0
    %v285 = vmax.f32 %v281, 0.0
    %v286 = vld [vmem:[%s1] sm:$0x3]
    %v287 = vpack.c.bf16 %v286, %v286
    %v288 = vld [vmem:[#allocation8 + $0x80] sm:$0xff]
    %s289 = scalar_lea.vmem [#allocation5], 2
    %v290 = vld [vmem:[%s289] ss:$8 sm:$0x3]
    %v292 = vperm.slane %v290, 0
    %v293 = vperm.slane %v290, 1
    %v297 = vunpack.c.l.b16 %v288
    %v298 = vunpack.c.h.b16 %v288
    %v299 = vpack.c.b16 %v297, %v297
    %v300 = vpack.c.b16 %v298, %v298
    %vm301 = vcmask 64512
    %v303 = vsel %vm301, %v287, 0
    %vm305 = vcmask 1043456
    %v307 = vsel %vm305, %v299, 0
    %v310 = vsel %vm305, %v300, 0
    %312 = vmatpush.bf16.msra.mxu0 0
    %313 = vmatpush.bf16.msra.mxu0 0
    %314 = vmatpush.bf16.msra.mxu0 0
    %315 = vmatpush.bf16.msra.mxu0 0
    %316 = vmatpush.bf16.msra.mxu0 0
    %317 = vmatpush.bf16.msra.mxu0 0
    %318 = vmatpush.bf16.msra.mxu0 0
    %319 = vmatpush.bf16.msra.mxu0 %v307
    %320 = vmatmul.bf16.gmra.mxu0 %v303
    %v321 = vpop.f32.mrf.mxu0
    %v322 = vadd.f32 %v292, %v321
    %v323 = vpop.f32.mrf.mxu0
    %324 = vdwg.mxu0
    %325 = vmatpush.bf16.msra.mxu0 0
    %326 = vmatpush.bf16.msra.mxu0 0
    %327 = vmatpush.bf16.msra.mxu0 0
    %328 = vmatpush.bf16.msra.mxu0 0
    %329 = vmatpush.bf16.msra.mxu0 0
    %330 = vmatpush.bf16.msra.mxu0 0
    %331 = vmatpush.bf16.msra.mxu0 0
    %332 = vmatpush.bf16.msra.mxu0 %v310
    %333 = vmatmul.bf16.gmra.mxu0 %v303
    %v334 = vpop.f32.mrf.mxu0
    %v335 = vadd.f32 %v293, %v334
    %v336 = vpop.f32.mrf.mxu0
    %337 = vdwg.mxu0
    %v338 = vmax.f32 %v322, 0.0
    %v339 = vmax.f32 %v335, 0.0
    %v340 = vpack.c.bf16 %v338, %v338
    %v341 = vld [vmem:[#allocation8 + $0x90] sm:$0xff]
    %v342 = vld [vmem:[#allocation8 + $0x98] sm:$0xff]
    %v343 = vld [vmem:[#allocation8 + $0xa0] sm:$0xff]
    %v344 = vld [vmem:[#allocation8 + $0xa8] sm:$0xff]
    %v345 = vld [vmem:[#allocation8 + $0xb0] sm:$0xff]
    %v346 = vld [vmem:[#allocation8 + $0xb8] sm:$0xff]
    %v347 = vld [vmem:[#allocation8 + $0xc0] sm:$0xff]
    %v348 = vld [vmem:[#allocation8 + $0xc8] sm:$0xff]
    %v349 = vld [vmem:[#allocation8 + $0xd0] sm:$0xff]
    %v350 = vld [vmem:[#allocation8 + $0xd8] sm:$0xff]
    %v351 = vld [vmem:[#allocation8 + $0xe0] sm:$0xff]
    %v352 = vld [vmem:[#allocation8 + $0xe8] sm:$0xff]
    %v353 = vld [vmem:[#allocation8 + $0xf0] sm:$0xff]
    %v354 = vld [vmem:[#allocation8 + $0xf8] sm:$0xff]
    %v355 = vld [vmem:[#allocation8 + $0x100] sm:$0xff]
    %v356 = vld [vmem:[#allocation8 + $0x108] sm:$0xff]
    %s357 = scalar_lea.vmem [#allocation5], 3
    %v358 = vld [vmem:[%s357] ss:$8 sm:$0x3]
    %v360 = vperm.slane %v358, 0
    %v361 = vperm.slane %v358, 1
    %v380 = vunpack.c.l.b16 %v341
    %v381 = vunpack.c.h.b16 %v341
    %v382 = vunpack.c.l.b16 %v342
    %v383 = vunpack.c.h.b16 %v342
    %v384 = vunpack.c.l.b16 %v343
    %v385 = vunpack.c.h.b16 %v343
    %v386 = vunpack.c.l.b16 %v344
    %v387 = vunpack.c.h.b16 %v344
    %v388 = vunpack.c.l.b16 %v345
    %v389 = vunpack.c.h.b16 %v345
    %v390 = vunpack.c.l.b16 %v346
    %v391 = vunpack.c.h.b16 %v346
    %v392 = vunpack.c.l.b16 %v347
    %v393 = vunpack.c.h.b16 %v347
    %v394 = vunpack.c.l.b16 %v348
    %v395 = vunpack.c.h.b16 %v348
    %v396 = vunpack.c.l.b16 %v349
    %v397 = vunpack.c.h.b16 %v349
    %v398 = vunpack.c.l.b16 %v350
    %v399 = vunpack.c.h.b16 %v350
    %v400 = vunpack.c.l.b16 %v351
    %v401 = vunpack.c.h.b16 %v351
    %v402 = vunpack.c.l.b16 %v352
    %v403 = vunpack.c.h.b16 %v352
    %v404 = vunpack.c.l.b16 %v353
    %v405 = vunpack.c.h.b16 %v353
    %v406 = vunpack.c.l.b16 %v354
    %v407 = vunpack.c.h.b16 %v354
    %v408 = vunpack.c.l.b16 %v355
    %v409 = vunpack.c.h.b16 %v355
    %v410 = vunpack.c.l.b16 %v356
    %v411 = vunpack.c.h.b16 %v356
    %v412 = vpack.c.b16 %v382, %v380
    %v413 = vpack.c.b16 %v383, %v381
    %v414 = vpack.c.b16 %v386, %v384
    %v415 = vpack.c.b16 %v387, %v385
    %v416 = vpack.c.b16 %v390, %v388
    %v417 = vpack.c.b16 %v391, %v389
    %v418 = vpack.c.b16 %v394, %v392
    %v419 = vpack.c.b16 %v395, %v393
    %v420 = vpack.c.b16 %v398, %v396
    %v421 = vpack.c.b16 %v399, %v397
    %v422 = vpack.c.b16 %v402, %v400
    %v423 = vpack.c.b16 %v403, %v401
    %v424 = vpack.c.b16 %v406, %v404
    %v425 = vpack.c.b16 %v407, %v405
    %v426 = vpack.c.b16 %v410, %v408
    %v427 = vpack.c.b16 %v411, %v409
    %444 = vmatpush.bf16.msra.mxu0 %v426
    %445 = vmatpush.bf16.msra.mxu0 %v424
    %446 = vmatpush.bf16.msra.mxu0 %v422
    %447 = vmatpush.bf16.msra.mxu0 %v420
    %448 = vmatpush.bf16.msra.mxu0 %v418
    %449 = vmatpush.bf16.msra.mxu0 %v416
    %450 = vmatpush.bf16.msra.mxu0 %v414
    %451 = vmatpush.bf16.msra.mxu0 %v412
    %452 = vmatmul.bf16.gmra.mxu0 %v340
    %v453 = vpop.f32.mrf.mxu0
    %v454 = vadd.f32 %v360, %v453
    %v455 = vpop.f32.mrf.mxu0
    %456 = vdwg.mxu0
    %457 = vmatpush.bf16.msra.mxu0 %v427
    %458 = vmatpush.bf16.msra.mxu0 %v425
    %459 = vmatpush.bf16.msra.mxu0 %v423
    %460 = vmatpush.bf16.msra.mxu0 %v421
    %461 = vmatpush.bf16.msra.mxu0 %v419
    %462 = vmatpush.bf16.msra.mxu0 %v417
    %463 = vmatpush.bf16.msra.mxu0 %v415
    %464 = vmatpush.bf16.msra.mxu0 %v413
    %465 = vmatmul.bf16.gmra.mxu0 %v340
    %v466 = vpop.f32.mrf.mxu0
    %v467 = vadd.f32 %v361, %v466
    %v468 = vpop.f32.mrf.mxu0
    %469 = vdwg.mxu0
    %v470 = vmax.f32 %v454, 0.0
    %v471 = vmax.f32 %v467, 0.0
    %v472 = vpack.c.bf16 %v339, %v339
    %v473 = vld [vmem:[#allocation8 + $0x110] sm:$0xff]
    %v474 = vld [vmem:[#allocation8 + $0x118] sm:$0xff]
    %v475 = vld [vmem:[#allocation8 + $0x120] sm:$0xff]
    %v476 = vld [vmem:[#allocation8 + $0x128] sm:$0xff]
    %v477 = vld [vmem:[#allocation8 + $0x130] sm:$0xff]
    %v478 = vld [vmem:[#allocation8 + $0x138] sm:$0xff]
    %v479 = vld [vmem:[#allocation8 + $0x140] sm:$0xff]
    %v480 = vld [vmem:[#allocation8 + $0x148] sm:$0xff]
    %v481 = vld [vmem:[#allocation8 + $0x150] sm:$0xff]
    %v482 = vld [vmem:[#allocation8 + $0x158] sm:$0xff]
    %v483 = vld [vmem:[#allocation8 + $0x160] sm:$0xff]
    %v484 = vld [vmem:[#allocation8 + $0x168] sm:$0xff]
    %v485 = vld [vmem:[#allocation8 + $0x170] sm:$0xff]
    %v486 = vld [vmem:[#allocation8 + $0x178] sm:$0xff]
    %v487 = vld [vmem:[#allocation8 + $0x180] sm:$0xff]
    %v488 = vld [vmem:[#allocation8 + $0x188] sm:$0xff]
    %s489 = scalar_lea.vmem [#allocation5], 4
    %v490 = vld [vmem:[%s489] ss:$8 sm:$0x3]
    %v492 = vperm.slane %v490, 0
    %v493 = vperm.slane %v490, 1
    %v512 = vunpack.c.l.b16 %v473
    %v513 = vunpack.c.h.b16 %v473
    %v514 = vunpack.c.l.b16 %v474
    %v515 = vunpack.c.h.b16 %v474
    %v516 = vunpack.c.l.b16 %v475
    %v517 = vunpack.c.h.b16 %v475
    %v518 = vunpack.c.l.b16 %v476
    %v519 = vunpack.c.h.b16 %v476
    %v520 = vunpack.c.l.b16 %v477
    %v521 = vunpack.c.h.b16 %v477
    %v522 = vunpack.c.l.b16 %v478
    %v523 = vunpack.c.h.b16 %v478
    %v524 = vunpack.c.l.b16 %v479
    %v525 = vunpack.c.h.b16 %v479
    %v526 = vunpack.c.l.b16 %v480
    %v527 = vunpack.c.h.b16 %v480
    %v528 = vunpack.c.l.b16 %v481
    %v529 = vunpack.c.h.b16 %v481
    %v530 = vunpack.c.l.b16 %v482
    %v531 = vunpack.c.h.b16 %v482
    %v532 = vunpack.c.l.b16 %v483
    %v533 = vunpack.c.h.b16 %v483
    %v534 = vunpack.c.l.b16 %v484
    %v535 = vunpack.c.h.b16 %v484
    %v536 = vunpack.c.l.b16 %v485
    %v537 = vunpack.c.h.b16 %v485
    %v538 = vunpack.c.l.b16 %v486
    %v539 = vunpack.c.h.b16 %v486
    %v540 = vunpack.c.l.b16 %v487
    %v541 = vunpack.c.h.b16 %v487
    %v542 = vunpack.c.l.b16 %v488
    %v543 = vunpack.c.h.b16 %v488
    %v544 = vpack.c.b16 %v514, %v512
    %v545 = vpack.c.b16 %v515, %v513
    %v546 = vpack.c.b16 %v518, %v516
    %v547 = vpack.c.b16 %v519, %v517
    %v548 = vpack.c.b16 %v522, %v520
    %v549 = vpack.c.b16 %v523, %v521
    %v550 = vpack.c.b16 %v526, %v524
    %v551 = vpack.c.b16 %v527, %v525
    %v552 = vpack.c.b16 %v530, %v528
    %v553 = vpack.c.b16 %v531, %v529
    %v554 = vpack.c.b16 %v534, %v532
    %v555 = vpack.c.b16 %v535, %v533
    %v556 = vpack.c.b16 %v538, %v536
    %v557 = vpack.c.b16 %v539, %v537
    %v558 = vpack.c.b16 %v542, %v540
    %v559 = vpack.c.b16 %v543, %v541
    %576 = vmatpush.bf16.msra.mxu0 %v558
    %577 = vmatpush.bf16.msra.mxu0 %v556
    %578 = vmatpush.bf16.msra.mxu0 %v554
    %579 = vmatpush.bf16.msra.mxu0 %v552
    %580 = vmatpush.bf16.msra.mxu0 %v550
    %581 = vmatpush.bf16.msra.mxu0 %v548
    %582 = vmatpush.bf16.msra.mxu0 %v546
    %583 = vmatpush.bf16.msra.mxu0 %v544
    %584 = vmatmul.bf16.gmra.mxu0 %v472
    %v585 = vpop.f32.mrf.mxu0
    %v586 = vadd.f32 %v492, %v585
    %v587 = vpop.f32.mrf.mxu0
    %588 = vdwg.mxu0
    %589 = vmatpush.bf16.msra.mxu0 %v559
    %590 = vmatpush.bf16.msra.mxu0 %v557
    %591 = vmatpush.bf16.msra.mxu0 %v555
    %592 = vmatpush.bf16.msra.mxu0 %v553
    %593 = vmatpush.bf16.msra.mxu0 %v551
    %594 = vmatpush.bf16.msra.mxu0 %v549
    %595 = vmatpush.bf16.msra.mxu0 %v547
    %596 = vmatpush.bf16.msra.mxu0 %v545
    %597 = vmatmul.bf16.gmra.mxu0 %v472
    %v598 = vpop.f32.mrf.mxu0
    %v599 = vadd.f32 %v493, %v598
    %v600 = vpop.f32.mrf.mxu0
    %601 = vdwg.mxu0
    %v602 = vmax.f32 %v586, 0.0
    %v603 = vmax.f32 %v599, 0.0
    %v604 = vadd.f32 %v284, %v470
    %v605 = vadd.f32 %v285, %v471
    %s606 = scalar_lea.vmem [#allocation5], 5
    %v607 = vld [vmem:[%s606] ss:$8 sm:$0x3]
    %v609 = vperm.slane %v607, 0
    %v610 = vperm.slane %v607, 1
    %v613 = vadd.f32 %v604, %v609
    %v614 = vadd.f32 %v605, %v610
    %vm615 = vcmask 1041408
    %v616 = vsel %vm615, %v613, 0.0
    %v617 = vsel %vm615, %v614, 0.0
    %v618 = vadd.f32 %v616, %v617
    %619 = vadd.xlane.f32.xlu0 %v618
    %v620 = vpop.xlane.xlu0 %619
    %v621 = vrcp.pop 256.0
    %v622 = vmul.f32 256.0, %v621
    %v623 = vsub.f32 1.0, %v622
    %v624 = vmul.f32 %v621, %v623
    %v625 = vadd.f32 %v621, %v624
    %vm626 = vweird.f32 %v621
    %v627 = vsel %vm626, %v621, %v625
    %v628 = vmul.f32 %v620, %v627
    %v629 = vsub.f32 %v613, %v628
    %v630 = vsub.f32 %v614, %v628
    %v631 = vmul.f32 %v629, %v629
    %v632 = vmul.f32 %v630, %v630
    %v633 = vsel %vm615, %v631, 0.0
    %v634 = vsel %vm615, %v632, 0.0
    %v635 = vadd.f32 %v633, %v634
    %636 = vadd.xlane.f32.xlu0 %v635
    %v637 = vpop.xlane.xlu0 %636
    %v638 = vmul.f32 %v637, %v627
    %v639 = vadd.f32 %v638, 1e-06
    %v640 = vrsqrt.pop %v639
    %v641 = vmul.f32 %v640, %v639
    %v642 = vmul.f32 %v641, %v640
    %v643 = vmul.f32 0.5, %v642
    %v644 = vsub.f32 1.5, %v643
    %v645 = vmul.f32 %v640, %v644
    %vm646 = vweird.f32 %v639
    %vm647 = vweird.f32 %v640
    %vm648 = vmor %vm646, %vm647
    %v649 = vsel %vm648, %v640, %v645
    %v650 = vmul.f32 %v629, %v649
    %v651 = vmul.f32 %v630, %v649
    %s652 = scalar_lea.vmem [#allocation5], 6
    %v653 = vld [vmem:[%s652] ss:$8 sm:$0x3]
    %v655 = vperm.slane %v653, 0
    %v656 = vperm.slane %v653, 1
    %v659 = vmul.f32 %v650, %v655
    %v660 = vmul.f32 %v651, %v656
    %s661 = scalar_lea.vmem [#allocation5], 7
    %v662 = vld [vmem:[%s661] ss:$8 sm:$0x3]
    %v664 = vperm.slane %v662, 0
    %v665 = vperm.slane %v662, 1
    %v668 = vadd.f32 %v659, %v664
    %v669 = vadd.f32 %v660, %v665
    %v670 = vpack.c.bf16 %v668, %v668
    %v671 = vpack.c.bf16 %v669, %v669
    %v672 = vld [vmem:[#allocation8 + $0x190] sm:$0xff]
    %v673 = vld [vmem:[#allocation8 + $0x198] sm:$0xff]
    %v674 = vld [vmem:[#allocation8 + $0x1a0] sm:$0xff]
    %v675 = vld [vmem:[#allocation8 + $0x1a8] sm:$0xff]
    %v676 = vld [vmem:[#allocation8 + $0x1b0] sm:$0xff]
    %v677 = vld [vmem:[#allocation8 + $0x1b8] sm:$0xff]
    %v678 = vld [vmem:[#allocation8 + $0x1c0] sm:$0xff]
    %v679 = vld [vmem:[#allocation8 + $0x1c8] sm:$0xff]
    %v680 = vld [vmem:[#allocation8 + $0x1d0] sm:$0xff]
    %v681 = vld [vmem:[#allocation8 + $0x1d8] sm:$0xff]
    %v682 = vld [vmem:[#allocation8 + $0x1e0] sm:$0xff]
    %v683 = vld [vmem:[#allocation8 + $0x1e8] sm:$0xff]
    %v684 = vld [vmem:[#allocation8 + $0x1f0] sm:$0xff]
    %v685 = vld [vmem:[#allocation8 + $0x1f8] sm:$0xff]
    %v686 = vld [vmem:[#allocation8 + $0x200] sm:$0xff]
    %v687 = vld [vmem:[#allocation8 + $0x208] sm:$0xff]
    %v688 = vld [vmem:[#allocation8 + $0x210] sm:$0xff]
    %v689 = vld [vmem:[#allocation8 + $0x218] sm:$0xff]
    %v690 = vld [vmem:[#allocation8 + $0x220] sm:$0xff]
    %v691 = vld [vmem:[#allocation8 + $0x228] sm:$0xff]
    %v692 = vld [vmem:[#allocation8 + $0x230] sm:$0xff]
    %v693 = vld [vmem:[#allocation8 + $0x238] sm:$0xff]
    %v694 = vld [vmem:[#allocation8 + $0x240] sm:$0xff]
    %v695 = vld [vmem:[#allocation8 + $0x248] sm:$0xff]
    %v696 = vld [vmem:[#allocation8 + $0x250] sm:$0xff]
    %v697 = vld [vmem:[#allocation8 + $0x258] sm:$0xff]
    %v698 = vld [vmem:[#allocation8 + $0x260] sm:$0xff]
    %v699 = vld [vmem:[#allocation8 + $0x268] sm:$0xff]
    %v700 = vld [vmem:[#allocation8 + $0x270] sm:$0xff]
    %v701 = vld [vmem:[#allocation8 + $0x278] sm:$0xff]
    %v702 = vld [vmem:[#allocation8 + $0x280] sm:$0xff]
    %v703 = vld [vmem:[#allocation8 + $0x288] sm:$0xff]
    %s704 = scalar_lea.vmem [#allocation5], 64
    %v705 = vld [vmem:[%s704] ss:$8 sm:$0x3]
    %v707 = vperm.slane %v705, 0
    %v708 = vperm.slane %v705, 1
    %v743 = vunpack.c.l.b16 %v672
    %v744 = vunpack.c.h.b16 %v672
    %v745 = vunpack.c.l.b16 %v673
    %v746 = vunpack.c.h.b16 %v673
    %v747 = vunpack.c.l.b16 %v674
    %v748 = vunpack.c.h.b16 %v674
    %v749 = vunpack.c.l.b16 %v675
    %v750 = vunpack.c.h.b16 %v675
    %v751 = vunpack.c.l.b16 %v676
    %v752 = vunpack.c.h.b16 %v676
    %v753 = vunpack.c.l.b16 %v677
    %v754 = vunpack.c.h.b16 %v677
    %v755 = vunpack.c.l.b16 %v678
    %v756 = vunpack.c.h.b16 %v678
    %v757 = vunpack.c.l.b16 %v679
    %v758 = vunpack.c.h.b16 %v679
    %v759 = vunpack.c.l.b16 %v680
    %v760 = vunpack.c.h.b16 %v680
    %v761 = vunpack.c.l.b16 %v681
    %v762 = vunpack.c.h.b16 %v681
    %v763 = vunpack.c.l.b16 %v682
    %v764 = vunpack.c.h.b16 %v682
    %v765 = vunpack.c.l.b16 %v683
    %v766 = vunpack.c.h.b16 %v683
    %v767 = vunpack.c.l.b16 %v684
    %v768 = vunpack.c.h.b16 %v684
    %v769 = vunpack.c.l.b16 %v685
    %v770 = vunpack.c.h.b16 %v685
    %v771 = vunpack.c.l.b16 %v686
    %v772 = vunpack.c.h.b16 %v686
    %v773 = vunpack.c.l.b16 %v687
    %v774 = vunpack.c.h.b16 %v687
    %v775 = vunpack.c.l.b16 %v688
    %v776 = vunpack.c.h.b16 %v688
    %v777 = vunpack.c.l.b16 %v689
    %v778 = vunpack.c.h.b16 %v689
    %v779 = vunpack.c.l.b16 %v690
    %v780 = vunpack.c.h.b16 %v690
    %v781 = vunpack.c.l.b16 %v691
    %v782 = vunpack.c.h.b16 %v691
    %v783 = vunpack.c.l.b16 %v692
    %v784 = vunpack.c.h.b16 %v692
    %v785 = vunpack.c.l.b16 %v693
    %v786 = vunpack.c.h.b16 %v693
    %v787 = vunpack.c.l.b16 %v694
    %v788 = vunpack.c.h.b16 %v694
    %v789 = vunpack.c.l.b16 %v695
    %v790 = vunpack.c.h.b16 %v695
    %v791 = vunpack.c.l.b16 %v696
    %v792 = vunpack.c.h.b16 %v696
    %v793 = vunpack.c.l.b16 %v697
    %v794 = vunpack.c.h.b16 %v697
    %v795 = vunpack.c.l.b16 %v698
    %v796 = vunpack.c.h.b16 %v698
    %v797 = vunpack.c.l.b16 %v699
    %v798 = vunpack.c.h.b16 %v699
    %v799 = vunpack.c.l.b16 %v700
    %v800 = vunpack.c.h.b16 %v700
    %v801 = vunpack.c.l.b16 %v701
    %v802 = vunpack.c.h.b16 %v701
    %v803 = vunpack.c.l.b16 %v702
    %v804 = vunpack.c.h.b16 %v702
    %v805 = vunpack.c.l.b16 %v703
    %v806 = vunpack.c.h.b16 %v703
    %v807 = vpack.c.b16 %v745, %v743
    %v808 = vpack.c.b16 %v746, %v744
    %v809 = vpack.c.b16 %v749, %v747
    %v810 = vpack.c.b16 %v750, %v748
    %v811 = vpack.c.b16 %v753, %v751
    %v812 = vpack.c.b16 %v754, %v752
    %v813 = vpack.c.b16 %v757, %v755
    %v814 = vpack.c.b16 %v758, %v756
    %v815 = vpack.c.b16 %v761, %v759
    %v816 = vpack.c.b16 %v762, %v760
    %v817 = vpack.c.b16 %v765, %v763
    %v818 = vpack.c.b16 %v766, %v764
    %v819 = vpack.c.b16 %v769, %v767
    %v820 = vpack.c.b16 %v770, %v768
    %v821 = vpack.c.b16 %v773, %v771
    %v822 = vpack.c.b16 %v774, %v772
    %v823 = vpack.c.b16 %v777, %v775
    %v824 = vpack.c.b16 %v778, %v776
    %v825 = vpack.c.b16 %v781, %v779
    %v826 = vpack.c.b16 %v782, %v780
    %v827 = vpack.c.b16 %v785, %v783
    %v828 = vpack.c.b16 %v786, %v784
    %v829 = vpack.c.b16 %v789, %v787
    %v830 = vpack.c.b16 %v790, %v788
    %v831 = vpack.c.b16 %v793, %v791
    %v832 = vpack.c.b16 %v794, %v792
    %v833 = vpack.c.b16 %v797, %v795
    %v834 = vpack.c.b16 %v798, %v796
    %v835 = vpack.c.b16 %v801, %v799
    %v836 = vpack.c.b16 %v802, %v800
    %v837 = vpack.c.b16 %v805, %v803
    %v838 = vpack.c.b16 %v806, %v804
    %871 = vmatpush.bf16.msra.mxu0 %v821
    %872 = vmatpush.bf16.msra.mxu0 %v819
    %873 = vmatpush.bf16.msra.mxu0 %v817
    %874 = vmatpush.bf16.msra.mxu0 %v815
    %875 = vmatpush.bf16.msra.mxu0 %v813
    %876 = vmatpush.bf16.msra.mxu0 %v811
    %877 = vmatpush.bf16.msra.mxu0 %v809
    %878 = vmatpush.bf16.msra.mxu0 %v807
    %879 = vmatmul.bf16.gmra.mxu0 %v670
    %v880 = vpop.f32.mrf.mxu0
    %v881 = vadd.f32 %v707, %v880
    %v882 = vpop.f32.mrf.mxu0
    %883 = vdwg.mxu0
    %884 = vmatpush.bf16.msra.mxu0 %v837
    %885 = vmatpush.bf16.msra.mxu0 %v835
    %886 = vmatpush.bf16.msra.mxu0 %v833
    %887 = vmatpush.bf16.msra.mxu0 %v831
    %888 = vmatpush.bf16.msra.mxu0 %v829
    %889 = vmatpush.bf16.msra.mxu0 %v827
    %890 = vmatpush.bf16.msra.mxu0 %v825
    %891 = vmatpush.bf16.msra.mxu0 %v823
    %892 = vmatmul.bf16.gmra.mxu0 %v671
    %v893 = vpop.f32.mrf.mxu0
    %v894 = vadd.f32 %v881, %v893
    %v895 = vpop.f32.mrf.mxu0
    %896 = vdwg.mxu0
    %897 = vmatpush.bf16.msra.mxu0 %v822
    %898 = vmatpush.bf16.msra.mxu0 %v820
    %899 = vmatpush.bf16.msra.mxu0 %v818
    %900 = vmatpush.bf16.msra.mxu0 %v816
    %901 = vmatpush.bf16.msra.mxu0 %v814
    %902 = vmatpush.bf16.msra.mxu0 %v812
    %903 = vmatpush.bf16.msra.mxu0 %v810
    %904 = vmatpush.bf16.msra.mxu0 %v808
    %905 = vmatmul.bf16.gmra.mxu0 %v670
    %v906 = vpop.f32.mrf.mxu0
    %v907 = vadd.f32 %v708, %v906
    %v908 = vpop.f32.mrf.mxu0
    %909 = vdwg.mxu0
    %910 = vmatpush.bf16.msra.mxu0 %v838
    %911 = vmatpush.bf16.msra.mxu0 %v836
    %912 = vmatpush.bf16.msra.mxu0 %v834
    %913 = vmatpush.bf16.msra.mxu0 %v832
    %914 = vmatpush.bf16.msra.mxu0 %v830
    %915 = vmatpush.bf16.msra.mxu0 %v828
    %916 = vmatpush.bf16.msra.mxu0 %v826
    %917 = vmatpush.bf16.msra.mxu0 %v824
    %918 = vmatmul.bf16.gmra.mxu0 %v671
    %v919 = vpop.f32.mrf.mxu0
    %v920 = vadd.f32 %v907, %v919
    %v921 = vpop.f32.mrf.mxu0
    %922 = vdwg.mxu0
    %v923 = vadd.f32 %v613, %v894
    %v924 = vadd.f32 %v614, %v920
    %v925 = vsel %vm615, %v923, 0.0
    %v926 = vsel %vm615, %v924, 0.0
    %v927 = vadd.f32 %v925, %v926
    %928 = vadd.xlane.f32.xlu0 %v927
    %v929 = vpop.xlane.xlu0 %928
    %v930 = vmul.f32 %v929, %v627
    %v931 = vsub.f32 %v923, %v930
    %v932 = vsub.f32 %v924, %v930
    %v933 = vmul.f32 %v931, %v931
    %v934 = vmul.f32 %v932, %v932
    %v935 = vsel %vm615, %v933, 0.0
    %v936 = vsel %vm615, %v934, 0.0
    %v937 = vadd.f32 %v935, %v936
    %938 = vadd.xlane.f32.xlu0 %v937
    %v939 = vpop.xlane.xlu0 %938
    %v940 = vmul.f32 %v939, %v627
    %v941 = vadd.f32 %v940, 1e-06
    %v942 = vrsqrt.pop %v941
    %v943 = vmul.f32 %v942, %v941
    %v944 = vmul.f32 %v943, %v942
    %v945 = vmul.f32 0.5, %v944
    %v946 = vsub.f32 1.5, %v945
    %v947 = vmul.f32 %v942, %v946
    %vm948 = vweird.f32 %v941
    %vm949 = vweird.f32 %v942
    %vm950 = vmor %vm948, %vm949
    %v951 = vsel %vm950, %v942, %v947
    %v952 = vmul.f32 %v931, %v951
    %v953 = vmul.f32 %v932, %v951
    %s954 = scalar_lea.vmem [#allocation5], 65
    %v955 = vld [vmem:[%s954] ss:$8 sm:$0x3]
    %v957 = vperm.slane %v955, 0
    %v958 = vperm.slane %v955, 1
    %v961 = vmul.f32 %v952, %v957
    %v962 = vmul.f32 %v953, %v958
    %s963 = scalar_lea.vmem [#allocation5], 66
    %v964 = vld [vmem:[%s963] ss:$8 sm:$0x3]
    %v966 = vperm.slane %v964, 0
    %v967 = vperm.slane %v964, 1
    %v970 = vadd.f32 %v961, %v966
    %v971 = vadd.f32 %v962, %v967
    %v972 = vpack.c.bf16 %v970, %v970
    %v973 = vpack.c.bf16 %v971, %v971
    %v974 = vld [vmem:[#allocation10] sm:$0xff]
    %v975 = vld [vmem:[#allocation10 + $0x8] sm:$0xff]
    %v976 = vld [vmem:[#allocation10 + $0x10] sm:$0xff]
    %v977 = vld [vmem:[#allocation10 + $0x18] sm:$0xff]
    %v978 = vld [vmem:[#allocation10 + $0x20] sm:$0xff]
    %v979 = vld [vmem:[#allocation10 + $0x28] sm:$0xff]
    %v980 = vld [vmem:[#allocation10 + $0x30] sm:$0xff]
    %v981 = vld [vmem:[#allocation10 + $0x38] sm:$0xff]
    %v982 = vld [vmem:[#allocation10 + $0x40] sm:$0xff]
    %v983 = vld [vmem:[#allocation10 + $0x48] sm:$0xff]
    %v984 = vld [vmem:[#allocation10 + $0x50] sm:$0xff]
    %v985 = vld [vmem:[#allocation10 + $0x58] sm:$0xff]
    %v986 = vld [vmem:[#allocation10 + $0x60] sm:$0xff]
    %v987 = vld [vmem:[#allocation10 + $0x68] sm:$0xff]
    %v988 = vld [vmem:[#allocation10 + $0x70] sm:$0xff]
    %v989 = vld [vmem:[#allocation10 + $0x78] sm:$0xff]
    %v990 = vld [vmem:[#allocation10 + $0x80] sm:$0xff]
    %v991 = vld [vmem:[#allocation10 + $0x88] sm:$0xff]
    %v992 = vld [vmem:[#allocation10 + $0x90] sm:$0xff]
    %v993 = vld [vmem:[#allocation10 + $0x98] sm:$0xff]
    %v994 = vld [vmem:[#allocation10 + $0xa0] sm:$0xff]
    %v995 = vld [vmem:[#allocation10 + $0xa8] sm:$0xff]
    %v996 = vld [vmem:[#allocation10 + $0xb0] sm:$0xff]
    %v997 = vld [vmem:[#allocation10 + $0xb8] sm:$0xff]
    %v998 = vld [vmem:[#allocation10 + $0xc0] sm:$0xff]
    %v999 = vld [vmem:[#allocation10 + $0xc8] sm:$0xff]
    %v1000 = vld [vmem:[#allocation10 + $0xd0] sm:$0xff]
    %v1001 = vld [vmem:[#allocation10 + $0xd8] sm:$0xff]
    %v1002 = vld [vmem:[#allocation10 + $0xe0] sm:$0xff]
    %v1003 = vld [vmem:[#allocation10 + $0xe8] sm:$0xff]
    %v1004 = vld [vmem:[#allocation10 + $0xf0] sm:$0xff]
    %v1005 = vld [vmem:[#allocation10 + $0xf8] sm:$0xff]
    %v1006 = vld [vmem:[#allocation10 + $0x100] sm:$0xff]
    %v1007 = vld [vmem:[#allocation10 + $0x108] sm:$0xff]
    %v1008 = vld [vmem:[#allocation10 + $0x110] sm:$0xff]
    %v1009 = vld [vmem:[#allocation10 + $0x118] sm:$0xff]
    %v1010 = vld [vmem:[#allocation10 + $0x120] sm:$0xff]
    %v1011 = vld [vmem:[#allocation10 + $0x128] sm:$0xff]
    %v1012 = vld [vmem:[#allocation10 + $0x130] sm:$0xff]
    %v1013 = vld [vmem:[#allocation10 + $0x138] sm:$0xff]
    %v1014 = vld [vmem:[#allocation10 + $0x140] sm:$0xff]
    %v1015 = vld [vmem:[#allocation10 + $0x148] sm:$0xff]
    %v1016 = vld [vmem:[#allocation10 + $0x150] sm:$0xff]
    %v1017 = vld [vmem:[#allocation10 + $0x158] sm:$0xff]
    %v1018 = vld [vmem:[#allocation10 + $0x160] sm:$0xff]
    %v1019 = vld [vmem:[#allocation10 + $0x168] sm:$0xff]
    %v1020 = vld [vmem:[#allocation10 + $0x170] sm:$0xff]
    %v1021 = vld [vmem:[#allocation10 + $0x178] sm:$0xff]
    %v1022 = vld [vmem:[#allocation10 + $0x180] sm:$0xff]
    %v1023 = vld [vmem:[#allocation10 + $0x188] sm:$0xff]
    %v1024 = vld [vmem:[#allocation10 + $0x190] sm:$0xff]
    %v1025 = vld [vmem:[#allocation10 + $0x198] sm:$0xff]
    %v1026 = vld [vmem:[#allocation10 + $0x1a0] sm:$0xff]
    %v1027 = vld [vmem:[#allocation10 + $0x1a8] sm:$0xff]
    %v1028 = vld [vmem:[#allocation10 + $0x1b0] sm:$0xff]
    %v1029 = vld [vmem:[#allocation10 + $0x1b8] sm:$0xff]
    %v1030 = vld [vmem:[#allocation10 + $0x1c0] sm:$0xff]
    %v1031 = vld [vmem:[#allocation10 + $0x1c8] sm:$0xff]
    %v1032 = vld [vmem:[#allocation10 + $0x1d0] sm:$0xff]
    %v1033 = vld [vmem:[#allocation10 + $0x1d8] sm:$0xff]
    %v1034 = vld [vmem:[#allocation10 + $0x1e0] sm:$0xff]
    %v1035 = vld [vmem:[#allocation10 + $0x1e8] sm:$0xff]
    %v1036 = vld [vmem:[#allocation10 + $0x1f0] sm:$0xff]
    %v1037 = vld [vmem:[#allocation10 + $0x1f8] sm:$0xff]
    %v1038 = vld [vmem:[#allocation10 + $0x200] sm:$0xff]
    %v1039 = vld [vmem:[#allocation10 + $0x208] sm:$0xff]
    %v1040 = vld [vmem:[#allocation10 + $0x210] sm:$0xff]
    %v1041 = vld [vmem:[#allocation10 + $0x218] sm:$0xff]
    %v1042 = vld [vmem:[#allocation10 + $0x220] sm:$0xff]
    %v1043 = vld [vmem:[#allocation10 + $0x228] sm:$0xff]
    %v1044 = vld [vmem:[#allocation10 + $0x230] sm:$0xff]
    %v1045 = vld [vmem:[#allocation10 + $0x238] sm:$0xff]
    %v1046 = vld [vmem:[#allocation10 + $0x240] sm:$0xff]
    %v1047 = vld [vmem:[#allocation10 + $0x248] sm:$0xff]
    %v1048 = vld [vmem:[#allocation10 + $0x250] sm:$0xff]
    %v1049 = vld [vmem:[#allocation10 + $0x258] sm:$0xff]
    %v1050 = vld [vmem:[#allocation10 + $0x260] sm:$0xff]
    %v1051 = vld [vmem:[#allocation10 + $0x268] sm:$0xff]
    %v1052 = vld [vmem:[#allocation10 + $0x270] sm:$0xff]
    %v1053 = vld [vmem:[#allocation10 + $0x278] sm:$0xff]
    %v1054 = vld [vmem:[#allocation10 + $0x280] sm:$0xff]
    %v1055 = vld [vmem:[#allocation10 + $0x288] sm:$0xff]
    %v1056 = vld [vmem:[#allocation10 + $0x290] sm:$0xff]
    %v1057 = vld [vmem:[#allocation10 + $0x298] sm:$0xff]
    %v1058 = vld [vmem:[#allocation10 + $0x2a0] sm:$0xff]
    %v1059 = vld [vmem:[#allocation10 + $0x2a8] sm:$0xff]
    %v1060 = vld [vmem:[#allocation10 + $0x2b0] sm:$0xff]
    %v1061 = vld [vmem:[#allocation10 + $0x2b8] sm:$0xff]
    %v1062 = vld [vmem:[#allocation10 + $0x2c0] sm:$0xff]
    %v1063 = vld [vmem:[#allocation10 + $0x2c8] sm:$0xff]
    %v1064 = vld [vmem:[#allocation10 + $0x2d0] sm:$0xff]
    %v1065 = vld [vmem:[#allocation10 + $0x2d8] sm:$0xff]
    %v1066 = vld [vmem:[#allocation10 + $0x2e0] sm:$0xff]
    %v1067 = vld [vmem:[#allocation10 + $0x2e8] sm:$0xff]
    %v1068 = vld [vmem:[#allocation10 + $0x2f0] sm:$0xff]
    %v1069 = vld [vmem:[#allocation10 + $0x2f8] sm:$0xff]
    %v1070 = vld [vmem:[#allocation10 + $0x300] sm:$0xff]
    %v1071 = vld [vmem:[#allocation10 + $0x308] sm:$0xff]
    %v1072 = vld [vmem:[#allocation10 + $0x310] sm:$0xff]
    %v1073 = vld [vmem:[#allocation10 + $0x318] sm:$0xff]
    %v1074 = vld [vmem:[#allocation10 + $0x320] sm:$0xff]
    %v1075 = vld [vmem:[#allocation10 + $0x328] sm:$0xff]
    %v1076 = vld [vmem:[#allocation10 + $0x330] sm:$0xff]
    %v1077 = vld [vmem:[#allocation10 + $0x338] sm:$0xff]
    %v1078 = vld [vmem:[#allocation10 + $0x340] sm:$0xff]
    %v1079 = vld [vmem:[#allocation10 + $0x348] sm:$0xff]
    %v1080 = vld [vmem:[#allocation10 + $0x350] sm:$0xff]
    %v1081 = vld [vmem:[#allocation10 + $0x358] sm:$0xff]
    %v1082 = vld [vmem:[#allocation10 + $0x360] sm:$0xff]
    %v1083 = vld [vmem:[#allocation10 + $0x368] sm:$0xff]
    %v1084 = vld [vmem:[#allocation10 + $0x370] sm:$0xff]
    %v1085 = vld [vmem:[#allocation10 + $0x378] sm:$0xff]
    %v1086 = vld [vmem:[#allocation10 + $0x380] sm:$0xff]
    %v1087 = vld [vmem:[#allocation10 + $0x388] sm:$0xff]
    %v1088 = vld [vmem:[#allocation10 + $0x390] sm:$0xff]
    %v1089 = vld [vmem:[#allocation10 + $0x398] sm:$0xff]
    %v1090 = vld [vmem:[#allocation10 + $0x3a0] sm:$0xff]
    %v1091 = vld [vmem:[#allocation10 + $0x3a8] sm:$0xff]
    %v1092 = vld [vmem:[#allocation10 + $0x3b0] sm:$0xff]
    %v1093 = vld [vmem:[#allocation10 + $0x3b8] sm:$0xff]
    %v1094 = vld [vmem:[#allocation10 + $0x3c0] sm:$0xff]
    %v1095 = vld [vmem:[#allocation10 + $0x3c8] sm:$0xff]
    %v1096 = vld [vmem:[#allocation10 + $0x3d0] sm:$0xff]
    %v1097 = vld [vmem:[#allocation10 + $0x3d8] sm:$0xff]
    %v1098 = vld [vmem:[#allocation10 + $0x3e0] sm:$0xff]
    %v1099 = vld [vmem:[#allocation10 + $0x3e8] sm:$0xff]
    %v1100 = vld [vmem:[#allocation10 + $0x3f0] sm:$0xff]
    %v1101 = vld [vmem:[#allocation10 + $0x3f8] sm:$0xff]
    %s1102 = scalar_lea.vmem [#allocation5], 67
    %v1103 = vld [vmem:[%s1102] ss:$8 sm:$0xf]
    %v1104 = vld [vmem:[%s1102] ss:$8 sm:$0xf0]
    %v1105 = vor.u32 %v1103, %v1104
    %v1107 = vperm.slane %v1105, 0
    %v1108 = vperm.slane %v1105, 1
    %v1109 = vperm.slane %v1105, 2
    %v1110 = vperm.slane %v1105, 3
    %v1111 = vperm.slane %v1105, 4
    %v1112 = vperm.slane %v1105, 5
    %v1113 = vperm.slane %v1105, 6
    %v1114 = vperm.slane %v1105, 7
    %v1251 = vunpack.c.l.b16 %v974
    %v1252 = vunpack.c.h.b16 %v974
    %v1253 = vunpack.c.l.b16 %v975
    %v1254 = vunpack.c.h.b16 %v975
    %v1255 = vunpack.c.l.b16 %v976
    %v1256 = vunpack.c.h.b16 %v976
    %v1257 = vunpack.c.l.b16 %v977
    %v1258 = vunpack.c.h.b16 %v977
    %v1259 = vunpack.c.l.b16 %v978
    %v1260 = vunpack.c.h.b16 %v978
    %v1261 = vunpack.c.l.b16 %v979
    %v1262 = vunpack.c.h.b16 %v979
    %v1263 = vunpack.c.l.b16 %v980
    %v1264 = vunpack.c.h.b16 %v980
    %v1265 = vunpack.c.l.b16 %v981
    %v1266 = vunpack.c.h.b16 %v981
    %v1267 = vunpack.c.l.b16 %v982
    %v1268 = vunpack.c.h.b16 %v982
    %v1269 = vunpack.c.l.b16 %v983
    %v1270 = vunpack.c.h.b16 %v983
    %v1271 = vunpack.c.l.b16 %v984
    %v1272 = vunpack.c.h.b16 %v984
    %v1273 = vunpack.c.l.b16 %v985
    %v1274 = vunpack.c.h.b16 %v985
    %v1275 = vunpack.c.l.b16 %v986
    %v1276 = vunpack.c.h.b16 %v986
    %v1277 = vunpack.c.l.b16 %v987
    %v1278 = vunpack.c.h.b16 %v987
    %v1279 = vunpack.c.l.b16 %v988
    %v1280 = vunpack.c.h.b16 %v988
    %v1281 = vunpack.c.l.b16 %v989
    %v1282 = vunpack.c.h.b16 %v989
    %v1283 = vunpack.c.l.b16 %v990
    %v1284 = vunpack.c.h.b16 %v990
    %v1285 = vunpack.c.l.b16 %v991
    %v1286 = vunpack.c.h.b16 %v991
    %v1287 = vunpack.c.l.b16 %v992
    %v1288 = vunpack.c.h.b16 %v992
    %v1289 = vunpack.c.l.b16 %v993
    %v1290 = vunpack.c.h.b16 %v993
    %v1291 = vunpack.c.l.b16 %v994
    %v1292 = vunpack.c.h.b16 %v994
    %v1293 = vunpack.c.l.b16 %v995
    %v1294 = vunpack.c.h.b16 %v995
    %v1295 = vunpack.c.l.b16 %v996
    %v1296 = vunpack.c.h.b16 %v996
    %v1297 = vunpack.c.l.b16 %v997
    %v1298 = vunpack.c.h.b16 %v997
    %v1299 = vunpack.c.l.b16 %v998
    %v1300 = vunpack.c.h.b16 %v998
    %v1301 = vunpack.c.l.b16 %v999
    %v1302 = vunpack.c.h.b16 %v999
    %v1303 = vunpack.c.l.b16 %v1000
    %v1304 = vunpack.c.h.b16 %v1000
    %v1305 = vunpack.c.l.b16 %v1001
    %v1306 = vunpack.c.h.b16 %v1001
    %v1307 = vunpack.c.l.b16 %v1002
    %v1308 = vunpack.c.h.b16 %v1002
    %v1309 = vunpack.c.l.b16 %v1003
    %v1310 = vunpack.c.h.b16 %v1003
    %v1311 = vunpack.c.l.b16 %v1004
    %v1312 = vunpack.c.h.b16 %v1004
    %v1313 = vunpack.c.l.b16 %v1005
    %v1314 = vunpack.c.h.b16 %v1005
    %v1315 = vunpack.c.l.b16 %v1006
    %v1316 = vunpack.c.h.b16 %v1006
    %v1317 = vunpack.c.l.b16 %v1007
    %v1318 = vunpack.c.h.b16 %v1007
    %v1319 = vunpack.c.l.b16 %v1008
    %v1320 = vunpack.c.h.b16 %v1008
    %v1321 = vunpack.c.l.b16 %v1009
    %v1322 = vunpack.c.h.b16 %v1009
    %v1323 = vunpack.c.l.b16 %v1010
    %v1324 = vunpack.c.h.b16 %v1010
    %v1325 = vunpack.c.l.b16 %v1011
    %v1326 = vunpack.c.h.b16 %v1011
    %v1327 = vunpack.c.l.b16 %v1012
    %v1328 = vunpack.c.h.b16 %v1012
    %v1329 = vunpack.c.l.b16 %v1013
    %v1330 = vunpack.c.h.b16 %v1013
    %v1331 = vunpack.c.l.b16 %v1014
    %v1332 = vunpack.c.h.b16 %v1014
    %v1333 = vunpack.c.l.b16 %v1015
    %v1334 = vunpack.c.h.b16 %v1015
    %v1335 = vunpack.c.l.b16 %v1016
    %v1336 = vunpack.c.h.b16 %v1016
    %v1337 = vunpack.c.l.b16 %v1017
    %v1338 = vunpack.c.h.b16 %v1017
    %v1339 = vunpack.c.l.b16 %v1018
    %v1340 = vunpack.c.h.b16 %v1018
    %v1341 = vunpack.c.l.b16 %v1019
    %v1342 = vunpack.c.h.b16 %v1019
    %v1343 = vunpack.c.l.b16 %v1020
    %v1344 = vunpack.c.h.b16 %v1020
    %v1345 = vunpack.c.l.b16 %v1021
    %v1346 = vunpack.c.h.b16 %v1021
    %v1347 = vunpack.c.l.b16 %v1022
    %v1348 = vunpack.c.h.b16 %v1022
    %v1349 = vunpack.c.l.b16 %v1023
    %v1350 = vunpack.c.h.b16 %v1023
    %v1351 = vunpack.c.l.b16 %v1024
    %v1352 = vunpack.c.h.b16 %v1024
    %v1353 = vunpack.c.l.b16 %v1025
    %v1354 = vunpack.c.h.b16 %v1025
    %v1355 = vunpack.c.l.b16 %v1026
    %v1356 = vunpack.c.h.b16 %v1026
    %v1357 = vunpack.c.l.b16 %v1027
    %v1358 = vunpack.c.h.b16 %v1027
    %v1359 = vunpack.c.l.b16 %v1028
    %v1360 = vunpack.c.h.b16 %v1028
    %v1361 = vunpack.c.l.b16 %v1029
    %v1362 = vunpack.c.h.b16 %v1029
    %v1363 = vunpack.c.l.b16 %v1030
    %v1364 = vunpack.c.h.b16 %v1030
    %v1365 = vunpack.c.l.b16 %v1031
    %v1366 = vunpack.c.h.b16 %v1031
    %v1367 = vunpack.c.l.b16 %v1032
    %v1368 = vunpack.c.h.b16 %v1032
    %v1369 = vunpack.c.l.b16 %v1033
    %v1370 = vunpack.c.h.b16 %v1033
    %v1371 = vunpack.c.l.b16 %v1034
    %v1372 = vunpack.c.h.b16 %v1034
    %v1373 = vunpack.c.l.b16 %v1035
    %v1374 = vunpack.c.h.b16 %v1035
    %v1375 = vunpack.c.l.b16 %v1036
    %v1376 = vunpack.c.h.b16 %v1036
    %v1377 = vunpack.c.l.b16 %v1037
    %v1378 = vunpack.c.h.b16 %v1037
    %v1379 = vunpack.c.l.b16 %v1038
    %v1380 = vunpack.c.h.b16 %v1038
    %v1381 = vunpack.c.l.b16 %v1039
    %v1382 = vunpack.c.h.b16 %v1039
    %v1383 = vunpack.c.l.b16 %v1040
    %v1384 = vunpack.c.h.b16 %v1040
    %v1385 = vunpack.c.l.b16 %v1041
    %v1386 = vunpack.c.h.b16 %v1041
    %v1387 = vunpack.c.l.b16 %v1042
    %v1388 = vunpack.c.h.b16 %v1042
    %v1389 = vunpack.c.l.b16 %v1043
    %v1390 = vunpack.c.h.b16 %v1043
    %v1391 = vunpack.c.l.b16 %v1044
    %v1392 = vunpack.c.h.b16 %v1044
    %v1393 = vunpack.c.l.b16 %v1045
    %v1394 = vunpack.c.h.b16 %v1045
    %v1395 = vunpack.c.l.b16 %v1046
    %v1396 = vunpack.c.h.b16 %v1046
    %v1397 = vunpack.c.l.b16 %v1047
    %v1398 = vunpack.c.h.b16 %v1047
    %v1399 = vunpack.c.l.b16 %v1048
    %v1400 = vunpack.c.h.b16 %v1048
    %v1401 = vunpack.c.l.b16 %v1049
    %v1402 = vunpack.c.h.b16 %v1049
    %v1403 = vunpack.c.l.b16 %v1050
    %v1404 = vunpack.c.h.b16 %v1050
    %v1405 = vunpack.c.l.b16 %v1051
    %v1406 = vunpack.c.h.b16 %v1051
    %v1407 = vunpack.c.l.b16 %v1052
    %v1408 = vunpack.c.h.b16 %v1052
    %v1409 = vunpack.c.l.b16 %v1053
    %v1410 = vunpack.c.h.b16 %v1053
    %v1411 = vunpack.c.l.b16 %v1054
    %v1412 = vunpack.c.h.b16 %v1054
    %v1413 = vunpack.c.l.b16 %v1055
    %v1414 = vunpack.c.h.b16 %v1055
    %v1415 = vunpack.c.l.b16 %v1056
    %v1416 = vunpack.c.h.b16 %v1056
    %v1417 = vunpack.c.l.b16 %v1057
    %v1418 = vunpack.c.h.b16 %v1057
    %v1419 = vunpack.c.l.b16 %v1058
    %v1420 = vunpack.c.h.b16 %v1058
    %v1421 = vunpack.c.l.b16 %v1059
    %v1422 = vunpack.c.h.b16 %v1059
    %v1423 = vunpack.c.l.b16 %v1060
    %v1424 = vunpack.c.h.b16 %v1060
    %v1425 = vunpack.c.l.b16 %v1061
    %v1426 = vunpack.c.h.b16 %v1061
    %v1427 = vunpack.c.l.b16 %v1062
    %v1428 = vunpack.c.h.b16 %v1062
    %v1429 = vunpack.c.l.b16 %v1063
    %v1430 = vunpack.c.h.b16 %v1063
    %v1431 = vunpack.c.l.b16 %v1064
    %v1432 = vunpack.c.h.b16 %v1064
    %v1433 = vunpack.c.l.b16 %v1065
    %v1434 = vunpack.c.h.b16 %v1065
    %v1435 = vunpack.c.l.b16 %v1066
    %v1436 = vunpack.c.h.b16 %v1066
    %v1437 = vunpack.c.l.b16 %v1067
    %v1438 = vunpack.c.h.b16 %v1067
    %v1439 = vunpack.c.l.b16 %v1068
    %v1440 = vunpack.c.h.b16 %v1068
    %v1441 = vunpack.c.l.b16 %v1069
    %v1442 = vunpack.c.h.b16 %v1069
    %v1443 = vunpack.c.l.b16 %v1070
    %v1444 = vunpack.c.h.b16 %v1070
    %v1445 = vunpack.c.l.b16 %v1071
    %v1446 = vunpack.c.h.b16 %v1071
    %v1447 = vunpack.c.l.b16 %v1072
    %v1448 = vunpack.c.h.b16 %v1072
    %v1449 = vunpack.c.l.b16 %v1073
    %v1450 = vunpack.c.h.b16 %v1073
    %v1451 = vunpack.c.l.b16 %v1074
    %v1452 = vunpack.c.h.b16 %v1074
    %v1453 = vunpack.c.l.b16 %v1075
    %v1454 = vunpack.c.h.b16 %v1075
    %v1455 = vunpack.c.l.b16 %v1076
    %v1456 = vunpack.c.h.b16 %v1076
    %v1457 = vunpack.c.l.b16 %v1077
    %v1458 = vunpack.c.h.b16 %v1077
    %v1459 = vunpack.c.l.b16 %v1078
    %v1460 = vunpack.c.h.b16 %v1078
    %v1461 = vunpack.c.l.b16 %v1079
    %v1462 = vunpack.c.h.b16 %v1079
    %v1463 = vunpack.c.l.b16 %v1080
    %v1464 = vunpack.c.h.b16 %v1080
    %v1465 = vunpack.c.l.b16 %v1081
    %v1466 = vunpack.c.h.b16 %v1081
    %v1467 = vunpack.c.l.b16 %v1082
    %v1468 = vunpack.c.h.b16 %v1082
    %v1469 = vunpack.c.l.b16 %v1083
    %v1470 = vunpack.c.h.b16 %v1083
    %v1471 = vunpack.c.l.b16 %v1084
    %v1472 = vunpack.c.h.b16 %v1084
    %v1473 = vunpack.c.l.b16 %v1085
    %v1474 = vunpack.c.h.b16 %v1085
    %v1475 = vunpack.c.l.b16 %v1086
    %v1476 = vunpack.c.h.b16 %v1086
    %v1477 = vunpack.c.l.b16 %v1087
    %v1478 = vunpack.c.h.b16 %v1087
    %v1479 = vunpack.c.l.b16 %v1088
    %v1480 = vunpack.c.h.b16 %v1088
    %v1481 = vunpack.c.l.b16 %v1089
    %v1482 = vunpack.c.h.b16 %v1089
    %v1483 = vunpack.c.l.b16 %v1090
    %v1484 = vunpack.c.h.b16 %v1090
    %v1485 = vunpack.c.l.b16 %v1091
    %v1486 = vunpack.c.h.b16 %v1091
    %v1487 = vunpack.c.l.b16 %v1092
    %v1488 = vunpack.c.h.b16 %v1092
    %v1489 = vunpack.c.l.b16 %v1093
    %v1490 = vunpack.c.h.b16 %v1093
    %v1491 = vunpack.c.l.b16 %v1094
    %v1492 = vunpack.c.h.b16 %v1094
    %v1493 = vunpack.c.l.b16 %v1095
    %v1494 = vunpack.c.h.b16 %v1095
    %v1495 = vunpack.c.l.b16 %v1096
    %v1496 = vunpack.c.h.b16 %v1096
    %v1497 = vunpack.c.l.b16 %v1097
    %v1498 = vunpack.c.h.b16 %v1097
    %v1499 = vunpack.c.l.b16 %v1098
    %v1500 = vunpack.c.h.b16 %v1098
    %v1501 = vunpack.c.l.b16 %v1099
    %v1502 = vunpack.c.h.b16 %v1099
    %v1503 = vunpack.c.l.b16 %v1100
    %v1504 = vunpack.c.h.b16 %v1100
    %v1505 = vunpack.c.l.b16 %v1101
    %v1506 = vunpack.c.h.b16 %v1101
    %v1507 = vpack.c.b16 %v1259, %v1251
    %v1508 = vpack.c.b16 %v1260, %v1252
    %v1509 = vpack.c.b16 %v1261, %v1253
    %v1510 = vpack.c.b16 %v1262, %v1254
    %v1511 = vpack.c.b16 %v1263, %v1255
    %v1512 = vpack.c.b16 %v1264, %v1256
    %v1513 = vpack.c.b16 %v1265, %v1257
    %v1514 = vpack.c.b16 %v1266, %v1258
    %v1515 = vpack.c.b16 %v1275, %v1267
    %v1516 = vpack.c.b16 %v1276, %v1268
    %v1517 = vpack.c.b16 %v1277, %v1269
    %v1518 = vpack.c.b16 %v1278, %v1270
    %v1519 = vpack.c.b16 %v1279, %v1271
    %v1520 = vpack.c.b16 %v1280, %v1272
    %v1521 = vpack.c.b16 %v1281, %v1273
    %v1522 = vpack.c.b16 %v1282, %v1274
    %v1523 = vpack.c.b16 %v1291, %v1283
    %v1524 = vpack.c.b16 %v1292, %v1284
    %v1525 = vpack.c.b16 %v1293, %v1285
    %v1526 = vpack.c.b16 %v1294, %v1286
    %v1527 = vpack.c.b16 %v1295, %v1287
    %v1528 = vpack.c.b16 %v1296, %v1288
    %v1529 = vpack.c.b16 %v1297, %v1289
    %v1530 = vpack.c.b16 %v1298, %v1290
    %v1531 = vpack.c.b16 %v1307, %v1299
    %v1532 = vpack.c.b16 %v1308, %v1300
    %v1533 = vpack.c.b16 %v1309, %v1301
    %v1534 = vpack.c.b16 %v1310, %v1302
    %v1535 = vpack.c.b16 %v1311, %v1303
    %v1536 = vpack.c.b16 %v1312, %v1304
    %v1537 = vpack.c.b16 %v1313, %v1305
    %v1538 = vpack.c.b16 %v1314, %v1306
    %v1539 = vpack.c.b16 %v1323, %v1315
    %v1540 = vpack.c.b16 %v1324, %v1316
    %v1541 = vpack.c.b16 %v1325, %v1317
    %v1542 = vpack.c.b16 %v1326, %v1318
    %v1543 = vpack.c.b16 %v1327, %v1319
    %v1544 = vpack.c.b16 %v1328, %v1320
    %v1545 = vpack.c.b16 %v1329, %v1321
    %v1546 = vpack.c.b16 %v1330, %v1322
    %v1547 = vpack.c.b16 %v1339, %v1331
    %v1548 = vpack.c.b16 %v1340, %v1332
    %v1549 = vpack.c.b16 %v1341, %v1333
    %v1550 = vpack.c.b16 %v1342, %v1334
    %v1551 = vpack.c.b16 %v1343, %v1335
    %v1552 = vpack.c.b16 %v1344, %v1336
    %v1553 = vpack.c.b16 %v1345, %v1337
    %v1554 = vpack.c.b16 %v1346, %v1338
    %v1555 = vpack.c.b16 %v1355, %v1347
    %v1556 = vpack.c.b16 %v1356, %v1348
    %v1557 = vpack.c.b16 %v1357, %v1349
    %v1558 = vpack.c.b16 %v1358, %v1350
    %v1559 = vpack.c.b16 %v1359, %v1351
    %v1560 = vpack.c.b16 %v1360, %v1352
    %v1561 = vpack.c.b16 %v1361, %v1353
    %v1562 = vpack.c.b16 %v1362, %v1354
    %v1563 = vpack.c.b16 %v1371, %v1363
    %v1564 = vpack.c.b16 %v1372, %v1364
    %v1565 = vpack.c.b16 %v1373, %v1365
    %v1566 = vpack.c.b16 %v1374, %v1366
    %v1567 = vpack.c.b16 %v1375, %v1367
    %v1568 = vpack.c.b16 %v1376, %v1368
    %v1569 = vpack.c.b16 %v1377, %v1369
    %v1570 = vpack.c.b16 %v1378, %v1370
    %v1571 = vpack.c.b16 %v1387, %v1379
    %v1572 = vpack.c.b16 %v1388, %v1380
    %v1573 = vpack.c.b16 %v1389, %v1381
    %v1574 = vpack.c.b16 %v1390, %v1382
    %v1575 = vpack.c.b16 %v1391, %v1383
    %v1576 = vpack.c.b16 %v1392, %v1384
    %v1577 = vpack.c.b16 %v1393, %v1385
    %v1578 = vpack.c.b16 %v1394, %v1386
    %v1579 = vpack.c.b16 %v1403, %v1395
    %v1580 = vpack.c.b16 %v1404, %v1396
    %v1581 = vpack.c.b16 %v1405, %v1397
    %v1582 = vpack.c.b16 %v1406, %v1398
    %v1583 = vpack.c.b16 %v1407, %v1399
    %v1584 = vpack.c.b16 %v1408, %v1400
    %v1585 = vpack.c.b16 %v1409, %v1401
    %v1586 = vpack.c.b16 %v1410, %v1402
    %v1587 = vpack.c.b16 %v1419, %v1411
    %v1588 = vpack.c.b16 %v1420, %v1412
    %v1589 = vpack.c.b16 %v1421, %v1413
    %v1590 = vpack.c.b16 %v1422, %v1414
    %v1591 = vpack.c.b16 %v1423, %v1415
    %v1592 = vpack.c.b16 %v1424, %v1416
    %v1593 = vpack.c.b16 %v1425, %v1417
    %v1594 = vpack.c.b16 %v1426, %v1418
    %v1595 = vpack.c.b16 %v1435, %v1427
    %v1596 = vpack.c.b16 %v1436, %v1428
    %v1597 = vpack.c.b16 %v1437, %v1429
    %v1598 = vpack.c.b16 %v1438, %v1430
    %v1599 = vpack.c.b16 %v1439, %v1431
    %v1600 = vpack.c.b16 %v1440, %v1432
    %v1601 = vpack.c.b16 %v1441, %v1433
    %v1602 = vpack.c.b16 %v1442, %v1434
    %v1603 = vpack.c.b16 %v1451, %v1443
    %v1604 = vpack.c.b16 %v1452, %v1444
    %v1605 = vpack.c.b16 %v1453, %v1445
    %v1606 = vpack.c.b16 %v1454, %v1446
    %v1607 = vpack.c.b16 %v1455, %v1447
    %v1608 = vpack.c.b16 %v1456, %v1448
    %v1609 = vpack.c.b16 %v1457, %v1449
    %v1610 = vpack.c.b16 %v1458, %v1450
    %v1611 = vpack.c.b16 %v1467, %v1459
    %v1612 = vpack.c.b16 %v1468, %v1460
    %v1613 = vpack.c.b16 %v1469, %v1461
    %v1614 = vpack.c.b16 %v1470, %v1462
    %v1615 = vpack.c.b16 %v1471, %v1463
    %v1616 = vpack.c.b16 %v1472, %v1464
    %v1617 = vpack.c.b16 %v1473, %v1465
    %v1618 = vpack.c.b16 %v1474, %v1466
    %v1619 = vpack.c.b16 %v1483, %v1475
    %v1620 = vpack.c.b16 %v1484, %v1476
    %v1621 = vpack.c.b16 %v1485, %v1477
    %v1622 = vpack.c.b16 %v1486, %v1478
    %v1623 = vpack.c.b16 %v1487, %v1479
    %v1624 = vpack.c.b16 %v1488, %v1480
    %v1625 = vpack.c.b16 %v1489, %v1481
    %v1626 = vpack.c.b16 %v1490, %v1482
    %v1627 = vpack.c.b16 %v1499, %v1491
    %v1628 = vpack.c.b16 %v1500, %v1492
    %v1629 = vpack.c.b16 %v1501, %v1493
    %v1630 = vpack.c.b16 %v1502, %v1494
    %v1631 = vpack.c.b16 %v1503, %v1495
    %v1632 = vpack.c.b16 %v1504, %v1496
    %v1633 = vpack.c.b16 %v1505, %v1497
    %v1634 = vpack.c.b16 %v1506, %v1498
    %1763 = vmatpush.bf16.msra.mxu0 %v1563
    %1764 = vmatpush.bf16.msra.mxu0 %v1555
    %1765 = vmatpush.bf16.msra.mxu0 %v1547
    %1766 = vmatpush.bf16.msra.mxu0 %v1539
    %1767 = vmatpush.bf16.msra.mxu0 %v1531
    %1768 = vmatpush.bf16.msra.mxu0 %v1523
    %1769 = vmatpush.bf16.msra.mxu0 %v1515
    %1770 = vmatpush.bf16.msra.mxu0 %v1507
    %1771 = vmatmul.bf16.gmra.mxu0 %v972
    %v1772 = vpop.f32.mrf.mxu0
    %v1773 = vadd.f32 %v1107, %v1772
    %v1774 = vpop.f32.mrf.mxu0
    %1775 = vdwg.mxu0
    %1776 = vmatpush.bf16.msra.mxu0 %v1627
    %1777 = vmatpush.bf16.msra.mxu0 %v1619
    %1778 = vmatpush.bf16.msra.mxu0 %v1611
    %1779 = vmatpush.bf16.msra.mxu0 %v1603
    %1780 = vmatpush.bf16.msra.mxu0 %v1595
    %1781 = vmatpush.bf16.msra.mxu0 %v1587
    %1782 = vmatpush.bf16.msra.mxu0 %v1579
    %1783 = vmatpush.bf16.msra.mxu0 %v1571
    %1784 = vmatmul.bf16.gmra.mxu0 %v973
    %v1785 = vpop.f32.mrf.mxu0
    %v1786 = vadd.f32 %v1773, %v1785
    %v1787 = vpop.f32.mrf.mxu0
    %1788 = vdwg.mxu0
    %1789 = vmatpush.bf16.msra.mxu0 %v1564
    %1790 = vmatpush.bf16.msra.mxu0 %v1556
    %1791 = vmatpush.bf16.msra.mxu0 %v1548
    %1792 = vmatpush.bf16.msra.mxu0 %v1540
    %1793 = vmatpush.bf16.msra.mxu0 %v1532
    %1794 = vmatpush.bf16.msra.mxu0 %v1524
    %1795 = vmatpush.bf16.msra.mxu0 %v1516
    %1796 = vmatpush.bf16.msra.mxu0 %v1508
    %1797 = vmatmul.bf16.gmra.mxu0 %v972
    %v1798 = vpop.f32.mrf.mxu0
    %v1799 = vadd.f32 %v1108, %v1798
    %v1800 = vpop.f32.mrf.mxu0
    %1801 = vdwg.mxu0
    %1802 = vmatpush.bf16.msra.mxu0 %v1628
    %1803 = vmatpush.bf16.msra.mxu0 %v1620
    %1804 = vmatpush.bf16.msra.mxu0 %v1612
    %1805 = vmatpush.bf16.msra.mxu0 %v1604
    %1806 = vmatpush.bf16.msra.mxu0 %v1596
    %1807 = vmatpush.bf16.msra.mxu0 %v1588
    %1808 = vmatpush.bf16.msra.mxu0 %v1580
    %1809 = vmatpush.bf16.msra.mxu0 %v1572
    %1810 = vmatmul.bf16.gmra.mxu0 %v973
    %v1811 = vpop.f32.mrf.mxu0
    %v1812 = vadd.f32 %v1799, %v1811
    %v1813 = vpop.f32.mrf.mxu0
    %1814 = vdwg.mxu0
    %1815 = vmatpush.bf16.msra.mxu0 %v1565
    %1816 = vmatpush.bf16.msra.mxu0 %v1557
    %1817 = vmatpush.bf16.msra.mxu0 %v1549
    %1818 = vmatpush.bf16.msra.mxu0 %v1541
    %1819 = vmatpush.bf16.msra.mxu0 %v1533
    %1820 = vmatpush.bf16.msra.mxu0 %v1525
    %1821 = vmatpush.bf16.msra.mxu0 %v1517
    %1822 = vmatpush.bf16.msra.mxu0 %v1509
    %1823 = vmatmul.bf16.gmra.mxu0 %v972
    %v1824 = vpop.f32.mrf.mxu0
    %v1825 = vadd.f32 %v1109, %v1824
    %v1826 = vpop.f32.mrf.mxu0
    %1827 = vdwg.mxu0
    %1828 = vmatpush.bf16.msra.mxu0 %v1629
    %1829 = vmatpush.bf16.msra.mxu0 %v1621
    %1830 = vmatpush.bf16.msra.mxu0 %v1613
    %1831 = vmatpush.bf16.msra.mxu0 %v1605
    %1832 = vmatpush.bf16.msra.mxu0 %v1597
    %1833 = vmatpush.bf16.msra.mxu0 %v1589
    %1834 = vmatpush.bf16.msra.mxu0 %v1581
    %1835 = vmatpush.bf16.msra.mxu0 %v1573
    %1836 = vmatmul.bf16.gmra.mxu0 %v973
    %v1837 = vpop.f32.mrf.mxu0
    %v1838 = vadd.f32 %v1825, %v1837
    %v1839 = vpop.f32.mrf.mxu0
    %1840 = vdwg.mxu0
    %1841 = vmatpush.bf16.msra.mxu0 %v1566
    %1842 = vmatpush.bf16.msra.mxu0 %v1558
    %1843 = vmatpush.bf16.msra.mxu0 %v1550
    %1844 = vmatpush.bf16.msra.mxu0 %v1542
    %1845 = vmatpush.bf16.msra.mxu0 %v1534
    %1846 = vmatpush.bf16.msra.mxu0 %v1526
    %1847 = vmatpush.bf16.msra.mxu0 %v1518
    %1848 = vmatpush.bf16.msra.mxu0 %v1510
    %1849 = vmatmul.bf16.gmra.mxu0 %v972
    %v1850 = vpop.f32.mrf.mxu0
    %v1851 = vadd.f32 %v1110, %v1850
    %v1852 = vpop.f32.mrf.mxu0
    %1853 = vdwg.mxu0
    %1854 = vmatpush.bf16.msra.mxu0 %v1630
    %1855 = vmatpush.bf16.msra.mxu0 %v1622
    %1856 = vmatpush.bf16.msra.mxu0 %v1614
    %1857 = vmatpush.bf16.msra.mxu0 %v1606
    %1858 = vmatpush.bf16.msra.mxu0 %v1598
    %1859 = vmatpush.bf16.msra.mxu0 %v1590
    %1860 = vmatpush.bf16.msra.mxu0 %v1582
    %1861 = vmatpush.bf16.msra.mxu0 %v1574
    %1862 = vmatmul.bf16.gmra.mxu0 %v973
    %v1863 = vpop.f32.mrf.mxu0
    %v1864 = vadd.f32 %v1851, %v1863
    %v1865 = vpop.f32.mrf.mxu0
    %1866 = vdwg.mxu0
    %1867 = vmatpush.bf16.msra.mxu0 %v1567
    %1868 = vmatpush.bf16.msra.mxu0 %v1559
    %1869 = vmatpush.bf16.msra.mxu0 %v1551
    %1870 = vmatpush.bf16.msra.mxu0 %v1543
    %1871 = vmatpush.bf16.msra.mxu0 %v1535
    %1872 = vmatpush.bf16.msra.mxu0 %v1527
    %1873 = vmatpush.bf16.msra.mxu0 %v1519
    %1874 = vmatpush.bf16.msra.mxu0 %v1511
    %1875 = vmatmul.bf16.gmra.mxu0 %v972
    %v1876 = vpop.f32.mrf.mxu0
    %v1877 = vadd.f32 %v1111, %v1876
    %v1878 = vpop.f32.mrf.mxu0
    %1879 = vdwg.mxu0
    %1880 = vmatpush.bf16.msra.mxu0 %v1631
    %1881 = vmatpush.bf16.msra.mxu0 %v1623
    %1882 = vmatpush.bf16.msra.mxu0 %v1615
    %1883 = vmatpush.bf16.msra.mxu0 %v1607
    %1884 = vmatpush.bf16.msra.mxu0 %v1599
    %1885 = vmatpush.bf16.msra.mxu0 %v1591
    %1886 = vmatpush.bf16.msra.mxu0 %v1583
    %1887 = vmatpush.bf16.msra.mxu0 %v1575
    %1888 = vmatmul.bf16.gmra.mxu0 %v973
    %v1889 = vpop.f32.mrf.mxu0
    %v1890 = vadd.f32 %v1877, %v1889
    %v1891 = vpop.f32.mrf.mxu0
    %1892 = vdwg.mxu0
    %1893 = vmatpush.bf16.msra.mxu0 %v1568
    %1894 = vmatpush.bf16.msra.mxu0 %v1560
    %1895 = vmatpush.bf16.msra.mxu0 %v1552
    %1896 = vmatpush.bf16.msra.mxu0 %v1544
    %1897 = vmatpush.bf16.msra.mxu0 %v1536
    %1898 = vmatpush.bf16.msra.mxu0 %v1528
    %1899 = vmatpush.bf16.msra.mxu0 %v1520
    %1900 = vmatpush.bf16.msra.mxu0 %v1512
    %1901 = vmatmul.bf16.gmra.mxu0 %v972
    %v1902 = vpop.f32.mrf.mxu0
    %v1903 = vadd.f32 %v1112, %v1902
    %v1904 = vpop.f32.mrf.mxu0
    %1905 = vdwg.mxu0
    %1906 = vmatpush.bf16.msra.mxu0 %v1632
    %1907 = vmatpush.bf16.msra.mxu0 %v1624
    %1908 = vmatpush.bf16.msra.mxu0 %v1616
    %1909 = vmatpush.bf16.msra.mxu0 %v1608
    %1910 = vmatpush.bf16.msra.mxu0 %v1600
    %1911 = vmatpush.bf16.msra.mxu0 %v1592
    %1912 = vmatpush.bf16.msra.mxu0 %v1584
    %1913 = vmatpush.bf16.msra.mxu0 %v1576
    %1914 = vmatmul.bf16.gmra.mxu0 %v973
    %v1915 = vpop.f32.mrf.mxu0
    %v1916 = vadd.f32 %v1903, %v1915
    %v1917 = vpop.f32.mrf.mxu0
    %1918 = vdwg.mxu0
    %1919 = vmatpush.bf16.msra.mxu0 %v1569
    %1920 = vmatpush.bf16.msra.mxu0 %v1561
    %1921 = vmatpush.bf16.msra.mxu0 %v1553
    %1922 = vmatpush.bf16.msra.mxu0 %v1545
    %1923 = vmatpush.bf16.msra.mxu0 %v1537
    %1924 = vmatpush.bf16.msra.mxu0 %v1529
    %1925 = vmatpush.bf16.msra.mxu0 %v1521
    %1926 = vmatpush.bf16.msra.mxu0 %v1513
    %1927 = vmatmul.bf16.gmra.mxu0 %v972
    %v1928 = vpop.f32.mrf.mxu0
    %v1929 = vadd.f32 %v1113, %v1928
    %v1930 = vpop.f32.mrf.mxu0
    %1931 = vdwg.mxu0
    %1932 = vmatpush.bf16.msra.mxu0 %v1633
    %1933 = vmatpush.bf16.msra.mxu0 %v1625
    %1934 = vmatpush.bf16.msra.mxu0 %v1617
    %1935 = vmatpush.bf16.msra.mxu0 %v1609
    %1936 = vmatpush.bf16.msra.mxu0 %v1601
    %1937 = vmatpush.bf16.msra.mxu0 %v1593
    %1938 = vmatpush.bf16.msra.mxu0 %v1585
    %1939 = vmatpush.bf16.msra.mxu0 %v1577
    %1940 = vmatmul.bf16.gmra.mxu0 %v973
    %v1941 = vpop.f32.mrf.mxu0
    %v1942 = vadd.f32 %v1929, %v1941
    %v1943 = vpop.f32.mrf.mxu0
    %1944 = vdwg.mxu0
    %1945 = vmatpush.bf16.msra.mxu0 %v1570
    %1946 = vmatpush.bf16.msra.mxu0 %v1562
    %1947 = vmatpush.bf16.msra.mxu0 %v1554
    %1948 = vmatpush.bf16.msra.mxu0 %v1546
    %1949 = vmatpush.bf16.msra.mxu0 %v1538
    %1950 = vmatpush.bf16.msra.mxu0 %v1530
    %1951 = vmatpush.bf16.msra.mxu0 %v1522
    %1952 = vmatpush.bf16.msra.mxu0 %v1514
    %1953 = vmatmul.bf16.gmra.mxu0 %v972
    %v1954 = vpop.f32.mrf.mxu0
    %v1955 = vadd.f32 %v1114, %v1954
    %v1956 = vpop.f32.mrf.mxu0
    %1957 = vdwg.mxu0
    %1958 = vmatpush.bf16.msra.mxu0 %v1634
    %1959 = vmatpush.bf16.msra.mxu0 %v1626
    %1960 = vmatpush.bf16.msra.mxu0 %v1618
    %1961 = vmatpush.bf16.msra.mxu0 %v1610
    %1962 = vmatpush.bf16.msra.mxu0 %v1602
    %1963 = vmatpush.bf16.msra.mxu0 %v1594
    %1964 = vmatpush.bf16.msra.mxu0 %v1586
    %1965 = vmatpush.bf16.msra.mxu0 %v1578
    %1966 = vmatmul.bf16.gmra.mxu0 %v973
    %v1967 = vpop.f32.mrf.mxu0
    %v1968 = vadd.f32 %v1955, %v1967
    %v1969 = vpop.f32.mrf.mxu0
    %1970 = vdwg.mxu0
    %v1971 = vmul.f32 %v1786, 0.5
    %v1972 = vmul.f32 %v1812, 0.5
    %v1973 = vmul.f32 %v1838, 0.5
    %v1974 = vmul.f32 %v1864, 0.5
    %v1975 = vmul.f32 %v1890, 0.5
    %v1976 = vmul.f32 %v1916, 0.5
    %v1977 = vmul.f32 %v1942, 0.5
    %v1978 = vmul.f32 %v1968, 0.5
    %v1979 = vmul.f32 %v1786, 0.044715
    %v1980 = vmul.f32 %v1812, 0.044715
    %v1981 = vmul.f32 %v1838, 0.044715
    %v1982 = vmul.f32 %v1864, 0.044715
    %v1983 = vmul.f32 %v1890, 0.044715
    %v1984 = vmul.f32 %v1916, 0.044715
    %v1985 = vmul.f32 %v1942, 0.044715
    %v1986 = vmul.f32 %v1968, 0.044715
    %v1987 = vmul.f32 %v1979, %v1786
    %v1988 = vmul.f32 %v1980, %v1812
    %v1989 = vmul.f32 %v1981, %v1838
    %v1990 = vmul.f32 %v1982, %v1864
    %v1991 = vmul.f32 %v1983, %v1890
    %v1992 = vmul.f32 %v1984, %v1916
    %v1993 = vmul.f32 %v1985, %v1942
    %v1994 = vmul.f32 %v1986, %v1968
    %v1995 = vmul.f32 %v1987, %v1786
    %v1996 = vmul.f32 %v1988, %v1812
    %v1997 = vmul.f32 %v1989, %v1838
    %v1998 = vmul.f32 %v1990, %v1864
    %v1999 = vmul.f32 %v1991, %v1890
    %v2000 = vmul.f32 %v1992, %v1916
    %v2001 = vmul.f32 %v1993, %v1942
    %v2002 = vmul.f32 %v1994, %v1968
    %v2003 = vadd.f32 %v1786, %v1995
    %v2004 = vadd.f32 %v1812, %v1996
    %v2005 = vadd.f32 %v1838, %v1997
    %v2006 = vadd.f32 %v1864, %v1998
    %v2007 = vadd.f32 %v1890, %v1999
    %v2008 = vadd.f32 %v1916, %v2000
    %v2009 = vadd.f32 %v1942, %v2001
    %v2010 = vadd.f32 %v1968, %v2002
    %v2011 = vmul.f32 %v2003, 0.7978846
    %v2012 = vmul.f32 %v2004, 0.7978846
    %v2013 = vmul.f32 %v2005, 0.7978846
    %v2014 = vmul.f32 %v2006, 0.7978846
    %v2015 = vmul.f32 %v2007, 0.7978846
    %v2016 = vmul.f32 %v2008, 0.7978846
    %v2017 = vmul.f32 %v2009, 0.7978846
    %v2018 = vmul.f32 %v2010, 0.7978846
    %v2019 = vtanh.pop %v2011
    %v2020 = vtanh.pop %v2012
    %v2021 = vtanh.pop %v2013
    %v2022 = vtanh.pop %v2014
    %v2023 = vtanh.pop %v2015
    %v2024 = vtanh.pop %v2016
    %v2025 = vtanh.pop %v2017
    %v2026 = vtanh.pop %v2018
    %v2027 = vadd.f32 %v2019, 1.0
    %v2028 = vadd.f32 %v2020, 1.0
    %v2029 = vadd.f32 %v2021, 1.0
    %v2030 = vadd.f32 %v2022, 1.0
    %v2031 = vadd.f32 %v2023, 1.0
    %v2032 = vadd.f32 %v2024, 1.0
    %v2033 = vadd.f32 %v2025, 1.0
    %v2034 = vadd.f32 %v2026, 1.0
    %v2035 = vmul.f32 %v1971, %v2027
    %v2036 = vmul.f32 %v1972, %v2028
    %v2037 = vmul.f32 %v1973, %v2029
    %v2038 = vmul.f32 %v1974, %v2030
    %v2039 = vmul.f32 %v1975, %v2031
    %v2040 = vmul.f32 %v1976, %v2032
    %v2041 = vmul.f32 %v1977, %v2033
    %v2042 = vmul.f32 %v1978, %v2034
    %v2043 = vpack.c.bf16 %v2035, %v2035
    %v2044 = vpack.c.bf16 %v2036, %v2036
    %v2045 = vpack.c.bf16 %v2037, %v2037
    %v2046 = vpack.c.bf16 %v2038, %v2038
    %v2047 = vpack.c.bf16 %v2039, %v2039
    %v2048 = vpack.c.bf16 %v2040, %v2040
    %v2049 = vpack.c.bf16 %v2041, %v2041
    %v2050 = vpack.c.bf16 %v2042, %v2042
    %v2051 = vld [vmem:[#allocation8 + $0x290] sm:$0xff]
    %v2052 = vld [vmem:[#allocation8 + $0x298] sm:$0xff]
    %v2053 = vld [vmem:[#allocation8 + $0x2a0] sm:$0xff]
    %v2054 = vld [vmem:[#allocation8 + $0x2a8] sm:$0xff]
    %v2055 = vld [vmem:[#allocation8 + $0x2b0] sm:$0xff]
    %v2056 = vld [vmem:[#allocation8 + $0x2b8] sm:$0xff]
    %v2057 = vld [vmem:[#allocation8 + $0x2c0] sm:$0xff]
    %v2058 = vld [vmem:[#allocation8 + $0x2c8] sm:$0xff]
    %v2059 = vld [vmem:[#allocation8 + $0x2d0] sm:$0xff]
    %v2060 = vld [vmem:[#allocation8 + $0x2d8] sm:$0xff]
    %v2061 = vld [vmem:[#allocation8 + $0x2e0] sm:$0xff]
    %v2062 = vld [vmem:[#allocation8 + $0x2e8] sm:$0xff]
    %v2063 = vld [vmem:[#allocation8 + $0x2f0] sm:$0xff]
    %v2064 = vld [vmem:[#allocation8 + $0x2f8] sm:$0xff]
    %v2065 = vld [vmem:[#allocation8 + $0x300] sm:$0xff]
    %v2066 = vld [vmem:[#allocation8 + $0x308] sm:$0xff]
    %v2067 = vld [vmem:[#allocation8 + $0x310] sm:$0xff]
    %v2068 = vld [vmem:[#allocation8 + $0x318] sm:$0xff]
    %v2069 = vld [vmem:[#allocation8 + $0x320] sm:$0xff]
    %v2070 = vld [vmem:[#allocation8 + $0x328] sm:$0xff]
    %v2071 = vld [vmem:[#allocation8 + $0x330] sm:$0xff]
    %v2072 = vld [vmem:[#allocation8 + $0x338] sm:$0xff]
    %v2073 = vld [vmem:[#allocation8 + $0x340] sm:$0xff]
    %v2074 = vld [vmem:[#allocation8 + $0x348] sm:$0xff]
    %v2075 = vld [vmem:[#allocation8 + $0x350] sm:$0xff]
    %v2076 = vld [vmem:[#allocation8 + $0x358] sm:$0xff]
    %v2077 = vld [vmem:[#allocation8 + $0x360] sm:$0xff]
    %v2078 = vld [vmem:[#allocation8 + $0x368] sm:$0xff]
    %v2079 = vld [vmem:[#allocation8 + $0x370] sm:$0xff]
    %v2080 = vld [vmem:[#allocation8 + $0x378] sm:$0xff]
    %v2081 = vld [vmem:[#allocation8 + $0x380] sm:$0xff]
    %v2082 = vld [vmem:[#allocation8 + $0x388] sm:$0xff]
    %v2083 = vld [vmem:[#allocation8 + $0x390] sm:$0xff]
    %v2084 = vld [vmem:[#allocation8 + $0x398] sm:$0xff]
    %v2085 = vld [vmem:[#allocation8 + $0x3a0] sm:$0xff]
    %v2086 = vld [vmem:[#allocation8 + $0x3a8] sm:$0xff]
    %v2087 = vld [vmem:[#allocation8 + $0x3b0] sm:$0xff]
    %v2088 = vld [vmem:[#allocation8 + $0x3b8] sm:$0xff]
    %v2089 = vld [vmem:[#allocation8 + $0x3c0] sm:$0xff]
    %v2090 = vld [vmem:[#allocation8 + $0x3c8] sm:$0xff]
    %v2091 = vld [vmem:[#allocation8 + $0x3d0] sm:$0xff]
    %v2092 = vld [vmem:[#allocation8 + $0x3d8] sm:$0xff]
    %v2093 = vld [vmem:[#allocation8 + $0x3e0] sm:$0xff]
    %v2094 = vld [vmem:[#allocation8 + $0x3e8] sm:$0xff]
    %v2095 = vld [vmem:[#allocation8 + $0x3f0] sm:$0xff]
    %v2096 = vld [vmem:[#allocation8 + $0x3f8] sm:$0xff]
    %v2097 = vld [vmem:[#allocation8 + $0x400] sm:$0xff]
    %v2098 = vld [vmem:[#allocation8 + $0x408] sm:$0xff]
    %v2099 = vld [vmem:[#allocation8 + $0x410] sm:$0xff]
    %v2100 = vld [vmem:[#allocation8 + $0x418] sm:$0xff]
    %v2101 = vld [vmem:[#allocation8 + $0x420] sm:$0xff]
    %v2102 = vld [vmem:[#allocation8 + $0x428] sm:$0xff]
    %v2103 = vld [vmem:[#allocation8 + $0x430] sm:$0xff]
    %v2104 = vld [vmem:[#allocation8 + $0x438] sm:$0xff]
    %v2105 = vld [vmem:[#allocation8 + $0x440] sm:$0xff]
    %v2106 = vld [vmem:[#allocation8 + $0x448] sm:$0xff]
    %v2107 = vld [vmem:[#allocation8 + $0x450] sm:$0xff]
    %v2108 = vld [vmem:[#allocation8 + $0x458] sm:$0xff]
    %v2109 = vld [vmem:[#allocation8 + $0x460] sm:$0xff]
    %v2110 = vld [vmem:[#allocation8 + $0x468] sm:$0xff]
    %v2111 = vld [vmem:[#allocation8 + $0x470] sm:$0xff]
    %v2112 = vld [vmem:[#allocation8 + $0x478] sm:$0xff]
    %v2113 = vld [vmem:[#allocation8 + $0x480] sm:$0xff]
    %v2114 = vld [vmem:[#allocation8 + $0x488] sm:$0xff]
    %v2115 = vld [vmem:[#allocation8 + $0x490] sm:$0xff]
    %v2116 = vld [vmem:[#allocation8 + $0x498] sm:$0xff]
    %v2117 = vld [vmem:[#allocation8 + $0x4a0] sm:$0xff]
    %v2118 = vld [vmem:[#allocation8 + $0x4a8] sm:$0xff]
    %v2119 = vld [vmem:[#allocation8 + $0x4b0] sm:$0xff]
    %v2120 = vld [vmem:[#allocation8 + $0x4b8] sm:$0xff]
    %v2121 = vld [vmem:[#allocation8 + $0x4c0] sm:$0xff]
    %v2122 = vld [vmem:[#allocation8 + $0x4c8] sm:$0xff]
    %v2123 = vld [vmem:[#allocation8 + $0x4d0] sm:$0xff]
    %v2124 = vld [vmem:[#allocation8 + $0x4d8] sm:$0xff]
    %v2125 = vld [vmem:[#allocation8 + $0x4e0] sm:$0xff]
    %v2126 = vld [vmem:[#allocation8 + $0x4e8] sm:$0xff]
    %v2127 = vld [vmem:[#allocation8 + $0x4f0] sm:$0xff]
    %v2128 = vld [vmem:[#allocation8 + $0x4f8] sm:$0xff]
    %v2129 = vld [vmem:[#allocation8 + $0x500] sm:$0xff]
    %v2130 = vld [vmem:[#allocation8 + $0x508] sm:$0xff]
    %v2131 = vld [vmem:[#allocation8 + $0x510] sm:$0xff]
    %v2132 = vld [vmem:[#allocation8 + $0x518] sm:$0xff]
    %v2133 = vld [vmem:[#allocation8 + $0x520] sm:$0xff]
    %v2134 = vld [vmem:[#allocation8 + $0x528] sm:$0xff]
    %v2135 = vld [vmem:[#allocation8 + $0x530] sm:$0xff]
    %v2136 = vld [vmem:[#allocation8 + $0x538] sm:$0xff]
    %v2137 = vld [vmem:[#allocation8 + $0x540] sm:$0xff]
    %v2138 = vld [vmem:[#allocation8 + $0x548] sm:$0xff]
    %v2139 = vld [vmem:[#allocation8 + $0x550] sm:$0xff]
    %v2140 = vld [vmem:[#allocation8 + $0x558] sm:$0xff]
    %v2141 = vld [vmem:[#allocation8 + $0x560] sm:$0xff]
    %v2142 = vld [vmem:[#allocation8 + $0x568] sm:$0xff]
    %v2143 = vld [vmem:[#allocation8 + $0x570] sm:$0xff]
    %v2144 = vld [vmem:[#allocation8 + $0x578] sm:$0xff]
    %v2145 = vld [vmem:[#allocation8 + $0x580] sm:$0xff]
    %v2146 = vld [vmem:[#allocation8 + $0x588] sm:$0xff]
    %v2147 = vld [vmem:[#allocation8 + $0x590] sm:$0xff]
    %v2148 = vld [vmem:[#allocation8 + $0x598] sm:$0xff]
    %v2149 = vld [vmem:[#allocation8 + $0x5a0] sm:$0xff]
    %v2150 = vld [vmem:[#allocation8 + $0x5a8] sm:$0xff]
    %v2151 = vld [vmem:[#allocation8 + $0x5b0] sm:$0xff]
    %v2152 = vld [vmem:[#allocation8 + $0x5b8] sm:$0xff]
    %v2153 = vld [vmem:[#allocation8 + $0x5c0] sm:$0xff]
    %v2154 = vld [vmem:[#allocation8 + $0x5c8] sm:$0xff]
    %v2155 = vld [vmem:[#allocation8 + $0x5d0] sm:$0xff]
    %v2156 = vld [vmem:[#allocation8 + $0x5d8] sm:$0xff]
    %v2157 = vld [vmem:[#allocation8 + $0x5e0] sm:$0xff]
    %v2158 = vld [vmem:[#allocation8 + $0x5e8] sm:$0xff]
    %v2159 = vld [vmem:[#allocation8 + $0x5f0] sm:$0xff]
    %v2160 = vld [vmem:[#allocation8 + $0x5f8] sm:$0xff]
    %v2161 = vld [vmem:[#allocation8 + $0x600] sm:$0xff]
    %v2162 = vld [vmem:[#allocation8 + $0x608] sm:$0xff]
    %v2163 = vld [vmem:[#allocation8 + $0x610] sm:$0xff]
    %v2164 = vld [vmem:[#allocation8 + $0x618] sm:$0xff]
    %v2165 = vld [vmem:[#allocation8 + $0x620] sm:$0xff]
    %v2166 = vld [vmem:[#allocation8 + $0x628] sm:$0xff]
    %v2167 = vld [vmem:[#allocation8 + $0x630] sm:$0xff]
    %v2168 = vld [vmem:[#allocation8 + $0x638] sm:$0xff]
    %v2169 = vld [vmem:[#allocation8 + $0x640] sm:$0xff]
    %v2170 = vld [vmem:[#allocation8 + $0x648] sm:$0xff]
    %v2171 = vld [vmem:[#allocation8 + $0x650] sm:$0xff]
    %v2172 = vld [vmem:[#allocation8 + $0x658] sm:$0xff]
    %v2173 = vld [vmem:[#allocation8 + $0x660] sm:$0xff]
    %v2174 = vld [vmem:[#allocation8 + $0x668] sm:$0xff]
    %v2175 = vld [vmem:[#allocation8 + $0x670] sm:$0xff]
    %v2176 = vld [vmem:[#allocation8 + $0x678] sm:$0xff]
    %v2177 = vld [vmem:[#allocation8 + $0x680] sm:$0xff]
    %v2178 = vld [vmem:[#allocation8 + $0x688] sm:$0xff]
    %s2179 = scalar_lea.vmem [#allocation5], 68
    %v2180 = vld [vmem:[%s2179] ss:$8 sm:$0x3]
    %v2182 = vperm.slane %v2180, 0
    %v2183 = vperm.slane %v2180, 1
    %v2314 = vunpack.c.l.b16 %v2051
    %v2315 = vunpack.c.h.b16 %v2051
    %v2316 = vunpack.c.l.b16 %v2052
    %v2317 = vunpack.c.h.b16 %v2052
    %v2318 = vunpack.c.l.b16 %v2053
    %v2319 = vunpack.c.h.b16 %v2053
    %v2320 = vunpack.c.l.b16 %v2054
    %v2321 = vunpack.c.h.b16 %v2054
    %v2322 = vunpack.c.l.b16 %v2055
    %v2323 = vunpack.c.h.b16 %v2055
    %v2324 = vunpack.c.l.b16 %v2056
    %v2325 = vunpack.c.h.b16 %v2056
    %v2326 = vunpack.c.l.b16 %v2057
    %v2327 = vunpack.c.h.b16 %v2057
    %v2328 = vunpack.c.l.b16 %v2058
    %v2329 = vunpack.c.h.b16 %v2058
    %v2330 = vunpack.c.l.b16 %v2059
    %v2331 = vunpack.c.h.b16 %v2059
    %v2332 = vunpack.c.l.b16 %v2060
    %v2333 = vunpack.c.h.b16 %v2060
    %v2334 = vunpack.c.l.b16 %v2061
    %v2335 = vunpack.c.h.b16 %v2061
    %v2336 = vunpack.c.l.b16 %v2062
    %v2337 = vunpack.c.h.b16 %v2062
    %v2338 = vunpack.c.l.b16 %v2063
    %v2339 = vunpack.c.h.b16 %v2063
    %v2340 = vunpack.c.l.b16 %v2064
    %v2341 = vunpack.c.h.b16 %v2064
    %v2342 = vunpack.c.l.b16 %v2065
    %v2343 = vunpack.c.h.b16 %v2065
    %v2344 = vunpack.c.l.b16 %v2066
    %v2345 = vunpack.c.h.b16 %v2066
    %v2346 = vunpack.c.l.b16 %v2067
    %v2347 = vunpack.c.h.b16 %v2067
    %v2348 = vunpack.c.l.b16 %v2068
    %v2349 = vunpack.c.h.b16 %v2068
    %v2350 = vunpack.c.l.b16 %v2069
    %v2351 = vunpack.c.h.b16 %v2069
    %v2352 = vunpack.c.l.b16 %v2070
    %v2353 = vunpack.c.h.b16 %v2070
    %v2354 = vunpack.c.l.b16 %v2071
    %v2355 = vunpack.c.h.b16 %v2071
    %v2356 = vunpack.c.l.b16 %v2072
    %v2357 = vunpack.c.h.b16 %v2072
    %v2358 = vunpack.c.l.b16 %v2073
    %v2359 = vunpack.c.h.b16 %v2073
    %v2360 = vunpack.c.l.b16 %v2074
    %v2361 = vunpack.c.h.b16 %v2074
    %v2362 = vunpack.c.l.b16 %v2075
    %v2363 = vunpack.c.h.b16 %v2075
    %v2364 = vunpack.c.l.b16 %v2076
    %v2365 = vunpack.c.h.b16 %v2076
    %v2366 = vunpack.c.l.b16 %v2077
    %v2367 = vunpack.c.h.b16 %v2077
    %v2368 = vunpack.c.l.b16 %v2078
    %v2369 = vunpack.c.h.b16 %v2078
    %v2370 = vunpack.c.l.b16 %v2079
    %v2371 = vunpack.c.h.b16 %v2079
    %v2372 = vunpack.c.l.b16 %v2080
    %v2373 = vunpack.c.h.b16 %v2080
    %v2374 = vunpack.c.l.b16 %v2081
    %v2375 = vunpack.c.h.b16 %v2081
    %v2376 = vunpack.c.l.b16 %v2082
    %v2377 = vunpack.c.h.b16 %v2082
    %v2378 = vunpack.c.l.b16 %v2083
    %v2379 = vunpack.c.h.b16 %v2083
    %v2380 = vunpack.c.l.b16 %v2084
    %v2381 = vunpack.c.h.b16 %v2084
    %v2382 = vunpack.c.l.b16 %v2085
    %v2383 = vunpack.c.h.b16 %v2085
    %v2384 = vunpack.c.l.b16 %v2086
    %v2385 = vunpack.c.h.b16 %v2086
    %v2386 = vunpack.c.l.b16 %v2087
    %v2387 = vunpack.c.h.b16 %v2087
    %v2388 = vunpack.c.l.b16 %v2088
    %v2389 = vunpack.c.h.b16 %v2088
    %v2390 = vunpack.c.l.b16 %v2089
    %v2391 = vunpack.c.h.b16 %v2089
    %v2392 = vunpack.c.l.b16 %v2090
    %v2393 = vunpack.c.h.b16 %v2090
    %v2394 = vunpack.c.l.b16 %v2091
    %v2395 = vunpack.c.h.b16 %v2091
    %v2396 = vunpack.c.l.b16 %v2092
    %v2397 = vunpack.c.h.b16 %v2092
    %v2398 = vunpack.c.l.b16 %v2093
    %v2399 = vunpack.c.h.b16 %v2093
    %v2400 = vunpack.c.l.b16 %v2094
    %v2401 = vunpack.c.h.b16 %v2094
    %v2402 = vunpack.c.l.b16 %v2095
    %v2403 = vunpack.c.h.b16 %v2095
    %v2404 = vunpack.c.l.b16 %v2096
    %v2405 = vunpack.c.h.b16 %v2096
    %v2406 = vunpack.c.l.b16 %v2097
    %v2407 = vunpack.c.h.b16 %v2097
    %v2408 = vunpack.c.l.b16 %v2098
    %v2409 = vunpack.c.h.b16 %v2098
    %v2410 = vunpack.c.l.b16 %v2099
    %v2411 = vunpack.c.h.b16 %v2099
    %v2412 = vunpack.c.l.b16 %v2100
    %v2413 = vunpack.c.h.b16 %v2100
    %v2414 = vunpack.c.l.b16 %v2101
    %v2415 = vunpack.c.h.b16 %v2101
    %v2416 = vunpack.c.l.b16 %v2102
    %v2417 = vunpack.c.h.b16 %v2102
    %v2418 = vunpack.c.l.b16 %v2103
    %v2419 = vunpack.c.h.b16 %v2103
    %v2420 = vunpack.c.l.b16 %v2104
    %v2421 = vunpack.c.h.b16 %v2104
    %v2422 = vunpack.c.l.b16 %v2105
    %v2423 = vunpack.c.h.b16 %v2105
    %v2424 = vunpack.c.l.b16 %v2106
    %v2425 = vunpack.c.h.b16 %v2106
    %v2426 = vunpack.c.l.b16 %v2107
    %v2427 = vunpack.c.h.b16 %v2107
    %v2428 = vunpack.c.l.b16 %v2108
    %v2429 = vunpack.c.h.b16 %v2108
    %v2430 = vunpack.c.l.b16 %v2109
    %v2431 = vunpack.c.h.b16 %v2109
    %v2432 = vunpack.c.l.b16 %v2110
    %v2433 = vunpack.c.h.b16 %v2110
    %v2434 = vunpack.c.l.b16 %v2111
    %v2435 = vunpack.c.h.b16 %v2111
    %v2436 = vunpack.c.l.b16 %v2112
    %v2437 = vunpack.c.h.b16 %v2112
    %v2438 = vunpack.c.l.b16 %v2113
    %v2439 = vunpack.c.h.b16 %v2113
    %v2440 = vunpack.c.l.b16 %v2114
    %v2441 = vunpack.c.h.b16 %v2114
    %v2442 = vunpack.c.l.b16 %v2115
    %v2443 = vunpack.c.h.b16 %v2115
    %v2444 = vunpack.c.l.b16 %v2116
    %v2445 = vunpack.c.h.b16 %v2116
    %v2446 = vunpack.c.l.b16 %v2117
    %v2447 = vunpack.c.h.b16 %v2117
    %v2448 = vunpack.c.l.b16 %v2118
    %v2449 = vunpack.c.h.b16 %v2118
    %v2450 = vunpack.c.l.b16 %v2119
    %v2451 = vunpack.c.h.b16 %v2119
    %v2452 = vunpack.c.l.b16 %v2120
    %v2453 = vunpack.c.h.b16 %v2120
    %v2454 = vunpack.c.l.b16 %v2121
    %v2455 = vunpack.c.h.b16 %v2121
    %v2456 = vunpack.c.l.b16 %v2122
    %v2457 = vunpack.c.h.b16 %v2122
    %v2458 = vunpack.c.l.b16 %v2123
    %v2459 = vunpack.c.h.b16 %v2123
    %v2460 = vunpack.c.l.b16 %v2124
    %v2461 = vunpack.c.h.b16 %v2124
    %v2462 = vunpack.c.l.b16 %v2125
    %v2463 = vunpack.c.h.b16 %v2125
    %v2464 = vunpack.c.l.b16 %v2126
    %v2465 = vunpack.c.h.b16 %v2126
    %v2466 = vunpack.c.l.b16 %v2127
    %v2467 = vunpack.c.h.b16 %v2127
    %v2468 = vunpack.c.l.b16 %v2128
    %v2469 = vunpack.c.h.b16 %v2128
    %v2470 = vunpack.c.l.b16 %v2129
    %v2471 = vunpack.c.h.b16 %v2129
    %v2472 = vunpack.c.l.b16 %v2130
    %v2473 = vunpack.c.h.b16 %v2130
    %v2474 = vunpack.c.l.b16 %v2131
    %v2475 = vunpack.c.h.b16 %v2131
    %v2476 = vunpack.c.l.b16 %v2132
    %v2477 = vunpack.c.h.b16 %v2132
    %v2478 = vunpack.c.l.b16 %v2133
    %v2479 = vunpack.c.h.b16 %v2133
    %v2480 = vunpack.c.l.b16 %v2134
    %v2481 = vunpack.c.h.b16 %v2134
    %v2482 = vunpack.c.l.b16 %v2135
    %v2483 = vunpack.c.h.b16 %v2135
    %v2484 = vunpack.c.l.b16 %v2136
    %v2485 = vunpack.c.h.b16 %v2136
    %v2486 = vunpack.c.l.b16 %v2137
    %v2487 = vunpack.c.h.b16 %v2137
    %v2488 = vunpack.c.l.b16 %v2138
    %v2489 = vunpack.c.h.b16 %v2138
    %v2490 = vunpack.c.l.b16 %v2139
    %v2491 = vunpack.c.h.b16 %v2139
    %v2492 = vunpack.c.l.b16 %v2140
    %v2493 = vunpack.c.h.b16 %v2140
    %v2494 = vunpack.c.l.b16 %v2141
    %v2495 = vunpack.c.h.b16 %v2141
    %v2496 = vunpack.c.l.b16 %v2142
    %v2497 = vunpack.c.h.b16 %v2142
    %v2498 = vunpack.c.l.b16 %v2143
    %v2499 = vunpack.c.h.b16 %v2143
    %v2500 = vunpack.c.l.b16 %v2144
    %v2501 = vunpack.c.h.b16 %v2144
    %v2502 = vunpack.c.l.b16 %v2145
    %v2503 = vunpack.c.h.b16 %v2145
    %v2504 = vunpack.c.l.b16 %v2146
    %v2505 = vunpack.c.h.b16 %v2146
    %v2506 = vunpack.c.l.b16 %v2147
    %v2507 = vunpack.c.h.b16 %v2147
    %v2508 = vunpack.c.l.b16 %v2148
    %v2509 = vunpack.c.h.b16 %v2148
    %v2510 = vunpack.c.l.b16 %v2149
    %v2511 = vunpack.c.h.b16 %v2149
    %v2512 = vunpack.c.l.b16 %v2150
    %v2513 = vunpack.c.h.b16 %v2150
    %v2514 = vunpack.c.l.b16 %v2151
    %v2515 = vunpack.c.h.b16 %v2151
    %v2516 = vunpack.c.l.b16 %v2152
    %v2517 = vunpack.c.h.b16 %v2152
    %v2518 = vunpack.c.l.b16 %v2153
    %v2519 = vunpack.c.h.b16 %v2153
    %v2520 = vunpack.c.l.b16 %v2154
    %v2521 = vunpack.c.h.b16 %v2154
    %v2522 = vunpack.c.l.b16 %v2155
    %v2523 = vunpack.c.h.b16 %v2155
    %v2524 = vunpack.c.l.b16 %v2156
    %v2525 = vunpack.c.h.b16 %v2156
    %v2526 = vunpack.c.l.b16 %v2157
    %v2527 = vunpack.c.h.b16 %v2157
    %v2528 = vunpack.c.l.b16 %v2158
    %v2529 = vunpack.c.h.b16 %v2158
    %v2530 = vunpack.c.l.b16 %v2159
    %v2531 = vunpack.c.h.b16 %v2159
    %v2532 = vunpack.c.l.b16 %v2160
    %v2533 = vunpack.c.h.b16 %v2160
    %v2534 = vunpack.c.l.b16 %v2161
    %v2535 = vunpack.c.h.b16 %v2161
    %v2536 = vunpack.c.l.b16 %v2162
    %v2537 = vunpack.c.h.b16 %v2162
    %v2538 = vunpack.c.l.b16 %v2163
    %v2539 = vunpack.c.h.b16 %v2163
    %v2540 = vunpack.c.l.b16 %v2164
    %v2541 = vunpack.c.h.b16 %v2164
    %v2542 = vunpack.c.l.b16 %v2165
    %v2543 = vunpack.c.h.b16 %v2165
    %v2544 = vunpack.c.l.b16 %v2166
    %v2545 = vunpack.c.h.b16 %v2166
    %v2546 = vunpack.c.l.b16 %v2167
    %v2547 = vunpack.c.h.b16 %v2167
    %v2548 = vunpack.c.l.b16 %v2168
    %v2549 = vunpack.c.h.b16 %v2168
    %v2550 = vunpack.c.l.b16 %v2169
    %v2551 = vunpack.c.h.b16 %v2169
    %v2552 = vunpack.c.l.b16 %v2170
    %v2553 = vunpack.c.h.b16 %v2170
    %v2554 = vunpack.c.l.b16 %v2171
    %v2555 = vunpack.c.h.b16 %v2171
    %v2556 = vunpack.c.l.b16 %v2172
    %v2557 = vunpack.c.h.b16 %v2172
    %v2558 = vunpack.c.l.b16 %v2173
    %v2559 = vunpack.c.h.b16 %v2173
    %v2560 = vunpack.c.l.b16 %v2174
    %v2561 = vunpack.c.h.b16 %v2174
    %v2562 = vunpack.c.l.b16 %v2175
    %v2563 = vunpack.c.h.b16 %v2175
    %v2564 = vunpack.c.l.b16 %v2176
    %v2565 = vunpack.c.h.b16 %v2176
    %v2566 = vunpack.c.l.b16 %v2177
    %v2567 = vunpack.c.h.b16 %v2177
    %v2568 = vunpack.c.l.b16 %v2178
    %v2569 = vunpack.c.h.b16 %v2178
    %v2570 = vpack.c.b16 %v2316, %v2314
    %v2571 = vpack.c.b16 %v2317, %v2315
    %v2572 = vpack.c.b16 %v2320, %v2318
    %v2573 = vpack.c.b16 %v2321, %v2319
    %v2574 = vpack.c.b16 %v2324, %v2322
    %v2575 = vpack.c.b16 %v2325, %v2323
    %v2576 = vpack.c.b16 %v2328, %v2326
    %v2577 = vpack.c.b16 %v2329, %v2327
    %v2578 = vpack.c.b16 %v2332, %v2330
    %v2579 = vpack.c.b16 %v2333, %v2331
    %v2580 = vpack.c.b16 %v2336, %v2334
    %v2581 = vpack.c.b16 %v2337, %v2335
    %v2582 = vpack.c.b16 %v2340, %v2338
    %v2583 = vpack.c.b16 %v2341, %v2339
    %v2584 = vpack.c.b16 %v2344, %v2342
    %v2585 = vpack.c.b16 %v2345, %v2343
    %v2586 = vpack.c.b16 %v2348, %v2346
    %v2587 = vpack.c.b16 %v2349, %v2347
    %v2588 = vpack.c.b16 %v2352, %v2350
    %v2589 = vpack.c.b16 %v2353, %v2351
    %v2590 = vpack.c.b16 %v2356, %v2354
    %v2591 = vpack.c.b16 %v2357, %v2355
    %v2592 = vpack.c.b16 %v2360, %v2358
    %v2593 = vpack.c.b16 %v2361, %v2359
    %v2594 = vpack.c.b16 %v2364, %v2362
    %v2595 = vpack.c.b16 %v2365, %v2363
    %v2596 = vpack.c.b16 %v2368, %v2366
    %v2597 = vpack.c.b16 %v2369, %v2367
    %v2598 = vpack.c.b16 %v2372, %v2370
    %v2599 = vpack.c.b16 %v2373, %v2371
    %v2600 = vpack.c.b16 %v2376, %v2374
    %v2601 = vpack.c.b16 %v2377, %v2375
    %v2602 = vpack.c.b16 %v2380, %v2378
    %v2603 = vpack.c.b16 %v2381, %v2379
    %v2604 = vpack.c.b16 %v2384, %v2382
    %v2605 = vpack.c.b16 %v2385, %v2383
    %v2606 = vpack.c.b16 %v2388, %v2386
    %v2607 = vpack.c.b16 %v2389, %v2387
    %v2608 = vpack.c.b16 %v2392, %v2390
    %v2609 = vpack.c.b16 %v2393, %v2391
    %v2610 = vpack.c.b16 %v2396, %v2394
    %v2611 = vpack.c.b16 %v2397, %v2395
    %v2612 = vpack.c.b16 %v2400, %v2398
    %v2613 = vpack.c.b16 %v2401, %v2399
    %v2614 = vpack.c.b16 %v2404, %v2402
    %v2615 = vpack.c.b16 %v2405, %v2403
    %v2616 = vpack.c.b16 %v2408, %v2406
    %v2617 = vpack.c.b16 %v2409, %v2407
    %v2618 = vpack.c.b16 %v2412, %v2410
    %v2619 = vpack.c.b16 %v2413, %v2411
    %v2620 = vpack.c.b16 %v2416, %v2414
    %v2621 = vpack.c.b16 %v2417, %v2415
    %v2622 = vpack.c.b16 %v2420, %v2418
    %v2623 = vpack.c.b16 %v2421, %v2419
    %v2624 = vpack.c.b16 %v2424, %v2422
    %v2625 = vpack.c.b16 %v2425, %v2423
    %v2626 = vpack.c.b16 %v2428, %v2426
    %v2627 = vpack.c.b16 %v2429, %v2427
    %v2628 = vpack.c.b16 %v2432, %v2430
    %v2629 = vpack.c.b16 %v2433, %v2431
    %v2630 = vpack.c.b16 %v2436, %v2434
    %v2631 = vpack.c.b16 %v2437, %v2435
    %v2632 = vpack.c.b16 %v2440, %v2438
    %v2633 = vpack.c.b16 %v2441, %v2439
    %v2634 = vpack.c.b16 %v2444, %v2442
    %v2635 = vpack.c.b16 %v2445, %v2443
    %v2636 = vpack.c.b16 %v2448, %v2446
    %v2637 = vpack.c.b16 %v2449, %v2447
    %v2638 = vpack.c.b16 %v2452, %v2450
    %v2639 = vpack.c.b16 %v2453, %v2451
    %v2640 = vpack.c.b16 %v2456, %v2454
    %v2641 = vpack.c.b16 %v2457, %v2455
    %v2642 = vpack.c.b16 %v2460, %v2458
    %v2643 = vpack.c.b16 %v2461, %v2459
    %v2644 = vpack.c.b16 %v2464, %v2462
    %v2645 = vpack.c.b16 %v2465, %v2463
    %v2646 = vpack.c.b16 %v2468, %v2466
    %v2647 = vpack.c.b16 %v2469, %v2467
    %v2648 = vpack.c.b16 %v2472, %v2470
    %v2649 = vpack.c.b16 %v2473, %v2471
    %v2650 = vpack.c.b16 %v2476, %v2474
    %v2651 = vpack.c.b16 %v2477, %v2475
    %v2652 = vpack.c.b16 %v2480, %v2478
    %v2653 = vpack.c.b16 %v2481, %v2479
    %v2654 = vpack.c.b16 %v2484, %v2482
    %v2655 = vpack.c.b16 %v2485, %v2483
    %v2656 = vpack.c.b16 %v2488, %v2486
    %v2657 = vpack.c.b16 %v2489, %v2487
    %v2658 = vpack.c.b16 %v2492, %v2490
    %v2659 = vpack.c.b16 %v2493, %v2491
    %v2660 = vpack.c.b16 %v2496, %v2494
    %v2661 = vpack.c.b16 %v2497, %v2495
    %v2662 = vpack.c.b16 %v2500, %v2498
    %v2663 = vpack.c.b16 %v2501, %v2499
    %v2664 = vpack.c.b16 %v2504, %v2502
    %v2665 = vpack.c.b16 %v2505, %v2503
    %v2666 = vpack.c.b16 %v2508, %v2506
    %v2667 = vpack.c.b16 %v2509, %v2507
    %v2668 = vpack.c.b16 %v2512, %v2510
    %v2669 = vpack.c.b16 %v2513, %v2511
    %v2670 = vpack.c.b16 %v2516, %v2514
    %v2671 = vpack.c.b16 %v2517, %v2515
    %v2672 = vpack.c.b16 %v2520, %v2518
    %v2673 = vpack.c.b16 %v2521, %v2519
    %v2674 = vpack.c.b16 %v2524, %v2522
    %v2675 = vpack.c.b16 %v2525, %v2523
    %v2676 = vpack.c.b16 %v2528, %v2526
    %v2677 = vpack.c.b16 %v2529, %v2527
    %v2678 = vpack.c.b16 %v2532, %v2530
    %v2679 = vpack.c.b16 %v2533, %v2531
    %v2680 = vpack.c.b16 %v2536, %v2534
    %v2681 = vpack.c.b16 %v2537, %v2535
    %v2682 = vpack.c.b16 %v2540, %v2538
    %v2683 = vpack.c.b16 %v2541, %v2539
    %v2684 = vpack.c.b16 %v2544, %v2542
    %v2685 = vpack.c.b16 %v2545, %v2543
    %v2686 = vpack.c.b16 %v2548, %v2546
    %v2687 = vpack.c.b16 %v2549, %v2547
    %v2688 = vpack.c.b16 %v2552, %v2550
    %v2689 = vpack.c.b16 %v2553, %v2551
    %v2690 = vpack.c.b16 %v2556, %v2554
    %v2691 = vpack.c.b16 %v2557, %v2555
    %v2692 = vpack.c.b16 %v2560, %v2558
    %v2693 = vpack.c.b16 %v2561, %v2559
    %v2694 = vpack.c.b16 %v2564, %v2562
    %v2695 = vpack.c.b16 %v2565, %v2563
    %v2696 = vpack.c.b16 %v2568, %v2566
    %v2697 = vpack.c.b16 %v2569, %v2567
    %2826 = vmatpush.bf16.msra.mxu0 %v2584
    %2827 = vmatpush.bf16.msra.mxu0 %v2582
    %2828 = vmatpush.bf16.msra.mxu0 %v2580
    %2829 = vmatpush.bf16.msra.mxu0 %v2578
    %2830 = vmatpush.bf16.msra.mxu0 %v2576
    %2831 = vmatpush.bf16.msra.mxu0 %v2574
    %2832 = vmatpush.bf16.msra.mxu0 %v2572
    %2833 = vmatpush.bf16.msra.mxu0 %v2570
    %2834 = vmatmul.bf16.gmra.mxu0 %v2043
    %v2835 = vpop.f32.mrf.mxu0
    %v2836 = vadd.f32 %v2182, %v2835
    %v2837 = vpop.f32.mrf.mxu0
    %2838 = vdwg.mxu0
    %2839 = vmatpush.bf16.msra.mxu0 %v2600
    %2840 = vmatpush.bf16.msra.mxu0 %v2598
    %2841 = vmatpush.bf16.msra.mxu0 %v2596
    %2842 = vmatpush.bf16.msra.mxu0 %v2594
    %2843 = vmatpush.bf16.msra.mxu0 %v2592
    %2844 = vmatpush.bf16.msra.mxu0 %v2590
    %2845 = vmatpush.bf16.msra.mxu0 %v2588
    %2846 = vmatpush.bf16.msra.mxu0 %v2586
    %2847 = vmatmul.bf16.gmra.mxu0 %v2044
    %v2848 = vpop.f32.mrf.mxu0
    %v2849 = vadd.f32 %v2836, %v2848
    %v2850 = vpop.f32.mrf.mxu0
    %2851 = vdwg.mxu0
    %2852 = vmatpush.bf16.msra.mxu0 %v2616
    %2853 = vmatpush.bf16.msra.mxu0 %v2614
    %2854 = vmatpush.bf16.msra.mxu0 %v2612
    %2855 = vmatpush.bf16.msra.mxu0 %v2610
    %2856 = vmatpush.bf16.msra.mxu0 %v2608
    %2857 = vmatpush.bf16.msra.mxu0 %v2606
    %2858 = vmatpush.bf16.msra.mxu0 %v2604
    %2859 = vmatpush.bf16.msra.mxu0 %v2602
    %2860 = vmatmul.bf16.gmra.mxu0 %v2045
    %v2861 = vpop.f32.mrf.mxu0
    %v2862 = vadd.f32 %v2849, %v2861
    %v2863 = vpop.f32.mrf.mxu0
    %2864 = vdwg.mxu0
    %2865 = vmatpush.bf16.msra.mxu0 %v2632
    %2866 = vmatpush.bf16.msra.mxu0 %v2630
    %2867 = vmatpush.bf16.msra.mxu0 %v2628
    %2868 = vmatpush.bf16.msra.mxu0 %v2626
    %2869 = vmatpush.bf16.msra.mxu0 %v2624
    %2870 = vmatpush.bf16.msra.mxu0 %v2622
    %2871 = vmatpush.bf16.msra.mxu0 %v2620
    %2872 = vmatpush.bf16.msra.mxu0 %v2618
    %2873 = vmatmul.bf16.gmra.mxu0 %v2046
    %v2874 = vpop.f32.mrf.mxu0
    %v2875 = vadd.f32 %v2862, %v2874
    %v2876 = vpop.f32.mrf.mxu0
    %2877 = vdwg.mxu0
    %2878 = vmatpush.bf16.msra.mxu0 %v2648
    %2879 = vmatpush.bf16.msra.mxu0 %v2646
    %2880 = vmatpush.bf16.msra.mxu0 %v2644
    %2881 = vmatpush.bf16.msra.mxu0 %v2642
    %2882 = vmatpush.bf16.msra.mxu0 %v2640
    %2883 = vmatpush.bf16.msra.mxu0 %v2638
    %2884 = vmatpush.bf16.msra.mxu0 %v2636
    %2885 = vmatpush.bf16.msra.mxu0 %v2634
    %2886 = vmatmul.bf16.gmra.mxu0 %v2047
    %v2887 = vpop.f32.mrf.mxu0
    %v2888 = vadd.f32 %v2875, %v2887
    %v2889 = vpop.f32.mrf.mxu0
    %2890 = vdwg.mxu0
    %2891 = vmatpush.bf16.msra.mxu0 %v2664
    %2892 = vmatpush.bf16.msra.mxu0 %v2662
    %2893 = vmatpush.bf16.msra.mxu0 %v2660
    %2894 = vmatpush.bf16.msra.mxu0 %v2658
    %2895 = vmatpush.bf16.msra.mxu0 %v2656
    %2896 = vmatpush.bf16.msra.mxu0 %v2654
    %2897 = vmatpush.bf16.msra.mxu0 %v2652
    %2898 = vmatpush.bf16.msra.mxu0 %v2650
    %2899 = vmatmul.bf16.gmra.mxu0 %v2048
    %v2900 = vpop.f32.mrf.mxu0
    %v2901 = vadd.f32 %v2888, %v2900
    %v2902 = vpop.f32.mrf.mxu0
    %2903 = vdwg.mxu0
    %2904 = vmatpush.bf16.msra.mxu0 %v2680
    %2905 = vmatpush.bf16.msra.mxu0 %v2678
    %2906 = vmatpush.bf16.msra.mxu0 %v2676
    %2907 = vmatpush.bf16.msra.mxu0 %v2674
    %2908 = vmatpush.bf16.msra.mxu0 %v2672
    %2909 = vmatpush.bf16.msra.mxu0 %v2670
    %2910 = vmatpush.bf16.msra.mxu0 %v2668
    %2911 = vmatpush.bf16.msra.mxu0 %v2666
    %2912 = vmatmul.bf16.gmra.mxu0 %v2049
    %v2913 = vpop.f32.mrf.mxu0
    %v2914 = vadd.f32 %v2901, %v2913
    %v2915 = vpop.f32.mrf.mxu0
    %2916 = vdwg.mxu0
    %2917 = vmatpush.bf16.msra.mxu0 %v2696
    %2918 = vmatpush.bf16.msra.mxu0 %v2694
    %2919 = vmatpush.bf16.msra.mxu0 %v2692
    %2920 = vmatpush.bf16.msra.mxu0 %v2690
    %2921 = vmatpush.bf16.msra.mxu0 %v2688
    %2922 = vmatpush.bf16.msra.mxu0 %v2686
    %2923 = vmatpush.bf16.msra.mxu0 %v2684
    %2924 = vmatpush.bf16.msra.mxu0 %v2682
    %2925 = vmatmul.bf16.gmra.mxu0 %v2050
    %v2926 = vpop.f32.mrf.mxu0
    %v2927 = vadd.f32 %v2914, %v2926
    %v2928 = vpop.f32.mrf.mxu0
    %2929 = vdwg.mxu0
    %2930 = vmatpush.bf16.msra.mxu0 %v2585
    %2931 = vmatpush.bf16.msra.mxu0 %v2583
    %2932 = vmatpush.bf16.msra.mxu0 %v2581
    %2933 = vmatpush.bf16.msra.mxu0 %v2579
    %2934 = vmatpush.bf16.msra.mxu0 %v2577
    %2935 = vmatpush.bf16.msra.mxu0 %v2575
    %2936 = vmatpush.bf16.msra.mxu0 %v2573
    %2937 = vmatpush.bf16.msra.mxu0 %v2571
    %2938 = vmatmul.bf16.gmra.mxu0 %v2043
    %v2939 = vpop.f32.mrf.mxu0
    %v2940 = vadd.f32 %v2183, %v2939
    %v2941 = vpop.f32.mrf.mxu0
    %2942 = vdwg.mxu0
    %2943 = vmatpush.bf16.msra.mxu0 %v2601
    %2944 = vmatpush.bf16.msra.mxu0 %v2599
    %2945 = vmatpush.bf16.msra.mxu0 %v2597
    %2946 = vmatpush.bf16.msra.mxu0 %v2595
    %2947 = vmatpush.bf16.msra.mxu0 %v2593
    %2948 = vmatpush.bf16.msra.mxu0 %v2591
    %2949 = vmatpush.bf16.msra.mxu0 %v2589
    %2950 = vmatpush.bf16.msra.mxu0 %v2587
    %2951 = vmatmul.bf16.gmra.mxu0 %v2044
    %v2952 = vpop.f32.mrf.mxu0
    %v2953 = vadd.f32 %v2940, %v2952
    %v2954 = vpop.f32.mrf.mxu0
    %2955 = vdwg.mxu0
    %2956 = vmatpush.bf16.msra.mxu0 %v2617
    %2957 = vmatpush.bf16.msra.mxu0 %v2615
    %2958 = vmatpush.bf16.msra.mxu0 %v2613
    %2959 = vmatpush.bf16.msra.mxu0 %v2611
    %2960 = vmatpush.bf16.msra.mxu0 %v2609
    %2961 = vmatpush.bf16.msra.mxu0 %v2607
    %2962 = vmatpush.bf16.msra.mxu0 %v2605
    %2963 = vmatpush.bf16.msra.mxu0 %v2603
    %2964 = vmatmul.bf16.gmra.mxu0 %v2045
    %v2965 = vpop.f32.mrf.mxu0
    %v2966 = vadd.f32 %v2953, %v2965
    %v2967 = vpop.f32.mrf.mxu0
    %2968 = vdwg.mxu0
    %2969 = vmatpush.bf16.msra.mxu0 %v2633
    %2970 = vmatpush.bf16.msra.mxu0 %v2631
    %2971 = vmatpush.bf16.msra.mxu0 %v2629
    %2972 = vmatpush.bf16.msra.mxu0 %v2627
    %2973 = vmatpush.bf16.msra.mxu0 %v2625
    %2974 = vmatpush.bf16.msra.mxu0 %v2623
    %2975 = vmatpush.bf16.msra.mxu0 %v2621
    %2976 = vmatpush.bf16.msra.mxu0 %v2619
    %2977 = vmatmul.bf16.gmra.mxu0 %v2046
    %v2978 = vpop.f32.mrf.mxu0
    %v2979 = vadd.f32 %v2966, %v2978
    %v2980 = vpop.f32.mrf.mxu0
    %2981 = vdwg.mxu0
    %2982 = vmatpush.bf16.msra.mxu0 %v2649
    %2983 = vmatpush.bf16.msra.mxu0 %v2647
    %2984 = vmatpush.bf16.msra.mxu0 %v2645
    %2985 = vmatpush.bf16.msra.mxu0 %v2643
    %2986 = vmatpush.bf16.msra.mxu0 %v2641
    %2987 = vmatpush.bf16.msra.mxu0 %v2639
    %2988 = vmatpush.bf16.msra.mxu0 %v2637
    %2989 = vmatpush.bf16.msra.mxu0 %v2635
    %2990 = vmatmul.bf16.gmra.mxu0 %v2047
    %v2991 = vpop.f32.mrf.mxu0
    %v2992 = vadd.f32 %v2979, %v2991
    %v2993 = vpop.f32.mrf.mxu0
    %2994 = vdwg.mxu0
    %2995 = vmatpush.bf16.msra.mxu0 %v2665
    %2996 = vmatpush.bf16.msra.mxu0 %v2663
    %2997 = vmatpush.bf16.msra.mxu0 %v2661
    %2998 = vmatpush.bf16.msra.mxu0 %v2659
    %2999 = vmatpush.bf16.msra.mxu0 %v2657
    %3000 = vmatpush.bf16.msra.mxu0 %v2655
    %3001 = vmatpush.bf16.msra.mxu0 %v2653
    %3002 = vmatpush.bf16.msra.mxu0 %v2651
    %3003 = vmatmul.bf16.gmra.mxu0 %v2048
    %v3004 = vpop.f32.mrf.mxu0
    %v3005 = vadd.f32 %v2992, %v3004
    %v3006 = vpop.f32.mrf.mxu0
    %3007 = vdwg.mxu0
    %3008 = vmatpush.bf16.msra.mxu0 %v2681
    %3009 = vmatpush.bf16.msra.mxu0 %v2679
    %3010 = vmatpush.bf16.msra.mxu0 %v2677
    %3011 = vmatpush.bf16.msra.mxu0 %v2675
    %3012 = vmatpush.bf16.msra.mxu0 %v2673
    %3013 = vmatpush.bf16.msra.mxu0 %v2671
    %3014 = vmatpush.bf16.msra.mxu0 %v2669
    %3015 = vmatpush.bf16.msra.mxu0 %v2667
    %3016 = vmatmul.bf16.gmra.mxu0 %v2049
    %v3017 = vpop.f32.mrf.mxu0
    %v3018 = vadd.f32 %v3005, %v3017
    %v3019 = vpop.f32.mrf.mxu0
    %3020 = vdwg.mxu0
    %3021 = vmatpush.bf16.msra.mxu0 %v2697
    %3022 = vmatpush.bf16.msra.mxu0 %v2695
    %3023 = vmatpush.bf16.msra.mxu0 %v2693
    %3024 = vmatpush.bf16.msra.mxu0 %v2691
    %3025 = vmatpush.bf16.msra.mxu0 %v2689
    %3026 = vmatpush.bf16.msra.mxu0 %v2687
    %3027 = vmatpush.bf16.msra.mxu0 %v2685
    %3028 = vmatpush.bf16.msra.mxu0 %v2683
    %3029 = vmatmul.bf16.gmra.mxu0 %v2050
    %v3030 = vpop.f32.mrf.mxu0
    %v3031 = vadd.f32 %v3018, %v3030
    %v3032 = vpop.f32.mrf.mxu0
    %3033 = vdwg.mxu0
    %v3034 = vadd.f32 %v923, %v2927
    %v3035 = vadd.f32 %v924, %v3031
    %v3036 = vsel %vm615, %v3034, 0.0
    %v3037 = vsel %vm615, %v3035, 0.0
    %v3038 = vadd.f32 %v3036, %v3037
    %3039 = vadd.xlane.f32.xlu0 %v3038
    %v3040 = vpop.xlane.xlu0 %3039
    %v3041 = vmul.f32 %v3040, %v627
    %v3042 = vsub.f32 %v3034, %v3041
    %v3043 = vsub.f32 %v3035, %v3041
    %v3044 = vmul.f32 %v3042, %v3042
    %v3045 = vmul.f32 %v3043, %v3043
    %v3046 = vsel %vm615, %v3044, 0.0
    %v3047 = vsel %vm615, %v3045, 0.0
    %v3048 = vadd.f32 %v3046, %v3047
    %3049 = vadd.xlane.f32.xlu0 %v3048
    %v3050 = vpop.xlane.xlu0 %3049
    %v3051 = vmul.f32 %v3050, %v627
    %v3052 = vadd.f32 %v3051, 1e-06
    %v3053 = vrsqrt.pop %v3052
    %v3054 = vmul.f32 %v3053, %v3052
    %v3055 = vmul.f32 %v3054, %v3053
    %v3056 = vmul.f32 0.5, %v3055
    %v3057 = vsub.f32 1.5, %v3056
    %v3058 = vmul.f32 %v3053, %v3057
    %vm3059 = vweird.f32 %v3052
    %vm3060 = vweird.f32 %v3053
    %vm3061 = vmor %vm3059, %vm3060
    %v3062 = vsel %vm3061, %v3053, %v3058
    %v3063 = vmul.f32 %v3042, %v3062
    %v3064 = vmul.f32 %v3043, %v3062
    %s3065 = scalar_lea.vmem [#allocation5], 69
    %v3066 = vld [vmem:[%s3065] ss:$8 sm:$0x3]
    %v3068 = vperm.slane %v3066, 0
    %v3069 = vperm.slane %v3066, 1
    %v3072 = vmul.f32 %v3063, %v3068
    %v3073 = vmul.f32 %v3064, %v3069
    %s3074 = scalar_lea.vmem [#allocation5], 70
    %v3075 = vld [vmem:[%s3074] ss:$8 sm:$0x3]
    %v3077 = vperm.slane %v3075, 0
    %v3078 = vperm.slane %v3075, 1
    %v3081 = vadd.f32 %v3072, %v3077
    %v3082 = vadd.f32 %v3073, %v3078
    %v3083 = vpack.c.bf16 %v3081, %v3081
    %v3084 = vpack.c.bf16 %v3082, %v3082
    %v3085 = vld [vmem:[#allocation8 + $0x690] sm:$0xff]
    %v3086 = vld [vmem:[#allocation8 + $0x698] sm:$0xff]
    %v3087 = vld [vmem:[#allocation8 + $0x6a0] sm:$0xff]
    %v3088 = vld [vmem:[#allocation8 + $0x6a8] sm:$0xff]
    %v3089 = vld [vmem:[#allocation8 + $0x6b0] sm:$0xff]
    %v3090 = vld [vmem:[#allocation8 + $0x6b8] sm:$0xff]
    %v3091 = vld [vmem:[#allocation8 + $0x6c0] sm:$0xff]
    %v3092 = vld [vmem:[#allocation8 + $0x6c8] sm:$0xff]
    %v3093 = vld [vmem:[#allocation8 + $0x6d0] sm:$0xff]
    %v3094 = vld [vmem:[#allocation8 + $0x6d8] sm:$0xff]
    %v3095 = vld [vmem:[#allocation8 + $0x6e0] sm:$0xff]
    %v3096 = vld [vmem:[#allocation8 + $0x6e8] sm:$0xff]
    %v3097 = vld [vmem:[#allocation8 + $0x6f0] sm:$0xff]
    %v3098 = vld [vmem:[#allocation8 + $0x6f8] sm:$0xff]
    %v3099 = vld [vmem:[#allocation8 + $0x700] sm:$0xff]
    %v3100 = vld [vmem:[#allocation8 + $0x708] sm:$0xff]
    %v3101 = vld [vmem:[#allocation8 + $0x710] sm:$0xff]
    %v3102 = vld [vmem:[#allocation8 + $0x718] sm:$0xff]
    %v3103 = vld [vmem:[#allocation8 + $0x720] sm:$0xff]
    %v3104 = vld [vmem:[#allocation8 + $0x728] sm:$0xff]
    %v3105 = vld [vmem:[#allocation8 + $0x730] sm:$0xff]
    %v3106 = vld [vmem:[#allocation8 + $0x738] sm:$0xff]
    %v3107 = vld [vmem:[#allocation8 + $0x740] sm:$0xff]
    %v3108 = vld [vmem:[#allocation8 + $0x748] sm:$0xff]
    %v3109 = vld [vmem:[#allocation8 + $0x750] sm:$0xff]
    %v3110 = vld [vmem:[#allocation8 + $0x758] sm:$0xff]
    %v3111 = vld [vmem:[#allocation8 + $0x760] sm:$0xff]
    %v3112 = vld [vmem:[#allocation8 + $0x768] sm:$0xff]
    %v3113 = vld [vmem:[#allocation8 + $0x770] sm:$0xff]
    %v3114 = vld [vmem:[#allocation8 + $0x778] sm:$0xff]
    %v3115 = vld [vmem:[#allocation8 + $0x780] sm:$0xff]
    %v3116 = vld [vmem:[#allocation8 + $0x788] sm:$0xff]
    %s3117 = scalar_lea.vmem [#allocation5], 71
    %v3118 = vld [vmem:[%s3117] ss:$8 sm:$0x3]
    %v3120 = vperm.slane %v3118, 0
    %v3121 = vperm.slane %v3118, 1
    %v3156 = vunpack.c.l.b16 %v3085
    %v3157 = vunpack.c.h.b16 %v3085
    %v3158 = vunpack.c.l.b16 %v3086
    %v3159 = vunpack.c.h.b16 %v3086
    %v3160 = vunpack.c.l.b16 %v3087
    %v3161 = vunpack.c.h.b16 %v3087
    %v3162 = vunpack.c.l.b16 %v3088
    %v3163 = vunpack.c.h.b16 %v3088
    %v3164 = vunpack.c.l.b16 %v3089
    %v3165 = vunpack.c.h.b16 %v3089
    %v3166 = vunpack.c.l.b16 %v3090
    %v3167 = vunpack.c.h.b16 %v3090
    %v3168 = vunpack.c.l.b16 %v3091
    %v3169 = vunpack.c.h.b16 %v3091
    %v3170 = vunpack.c.l.b16 %v3092
    %v3171 = vunpack.c.h.b16 %v3092
    %v3172 = vunpack.c.l.b16 %v3093
    %v3173 = vunpack.c.h.b16 %v3093
    %v3174 = vunpack.c.l.b16 %v3094
    %v3175 = vunpack.c.h.b16 %v3094
    %v3176 = vunpack.c.l.b16 %v3095
    %v3177 = vunpack.c.h.b16 %v3095
    %v3178 = vunpack.c.l.b16 %v3096
    %v3179 = vunpack.c.h.b16 %v3096
    %v3180 = vunpack.c.l.b16 %v3097
    %v3181 = vunpack.c.h.b16 %v3097
    %v3182 = vunpack.c.l.b16 %v3098
    %v3183 = vunpack.c.h.b16 %v3098
    %v3184 = vunpack.c.l.b16 %v3099
    %v3185 = vunpack.c.h.b16 %v3099
    %v3186 = vunpack.c.l.b16 %v3100
    %v3187 = vunpack.c.h.b16 %v3100
    %v3188 = vunpack.c.l.b16 %v3101
    %v3189 = vunpack.c.h.b16 %v3101
    %v3190 = vunpack.c.l.b16 %v3102
    %v3191 = vunpack.c.h.b16 %v3102
    %v3192 = vunpack.c.l.b16 %v3103
    %v3193 = vunpack.c.h.b16 %v3103
    %v3194 = vunpack.c.l.b16 %v3104
    %v3195 = vunpack.c.h.b16 %v3104
    %v3196 = vunpack.c.l.b16 %v3105
    %v3197 = vunpack.c.h.b16 %v3105
    %v3198 = vunpack.c.l.b16 %v3106
    %v3199 = vunpack.c.h.b16 %v3106
    %v3200 = vunpack.c.l.b16 %v3107
    %v3201 = vunpack.c.h.b16 %v3107
    %v3202 = vunpack.c.l.b16 %v3108
    %v3203 = vunpack.c.h.b16 %v3108
    %v3204 = vunpack.c.l.b16 %v3109
    %v3205 = vunpack.c.h.b16 %v3109
    %v3206 = vunpack.c.l.b16 %v3110
    %v3207 = vunpack.c.h.b16 %v3110
    %v3208 = vunpack.c.l.b16 %v3111
    %v3209 = vunpack.c.h.b16 %v3111
    %v3210 = vunpack.c.l.b16 %v3112
    %v3211 = vunpack.c.h.b16 %v3112
    %v3212 = vunpack.c.l.b16 %v3113
    %v3213 = vunpack.c.h.b16 %v3113
    %v3214 = vunpack.c.l.b16 %v3114
    %v3215 = vunpack.c.h.b16 %v3114
    %v3216 = vunpack.c.l.b16 %v3115
    %v3217 = vunpack.c.h.b16 %v3115
    %v3218 = vunpack.c.l.b16 %v3116
    %v3219 = vunpack.c.h.b16 %v3116
    %v3220 = vpack.c.b16 %v3158, %v3156
    %v3221 = vpack.c.b16 %v3159, %v3157
    %v3222 = vpack.c.b16 %v3162, %v3160
    %v3223 = vpack.c.b16 %v3163, %v3161
    %v3224 = vpack.c.b16 %v3166, %v3164
    %v3225 = vpack.c.b16 %v3167, %v3165
    %v3226 = vpack.c.b16 %v3170, %v3168
    %v3227 = vpack.c.b16 %v3171, %v3169
    %v3228 = vpack.c.b16 %v3174, %v3172
    %v3229 = vpack.c.b16 %v3175, %v3173
    %v3230 = vpack.c.b16 %v3178, %v3176
    %v3231 = vpack.c.b16 %v3179, %v3177
    %v3232 = vpack.c.b16 %v3182, %v3180
    %v3233 = vpack.c.b16 %v3183, %v3181
    %v3234 = vpack.c.b16 %v3186, %v3184
    %v3235 = vpack.c.b16 %v3187, %v3185
    %v3236 = vpack.c.b16 %v3190, %v3188
    %v3237 = vpack.c.b16 %v3191, %v3189
    %v3238 = vpack.c.b16 %v3194, %v3192
    %v3239 = vpack.c.b16 %v3195, %v3193
    %v3240 = vpack.c.b16 %v3198, %v3196
    %v3241 = vpack.c.b16 %v3199, %v3197
    %v3242 = vpack.c.b16 %v3202, %v3200
    %v3243 = vpack.c.b16 %v3203, %v3201
    %v3244 = vpack.c.b16 %v3206, %v3204
    %v3245 = vpack.c.b16 %v3207, %v3205
    %v3246 = vpack.c.b16 %v3210, %v3208
    %v3247 = vpack.c.b16 %v3211, %v3209
    %v3248 = vpack.c.b16 %v3214, %v3212
    %v3249 = vpack.c.b16 %v3215, %v3213
    %v3250 = vpack.c.b16 %v3218, %v3216
    %v3251 = vpack.c.b16 %v3219, %v3217
    %3284 = vmatpush.bf16.msra.mxu0 %v3234
    %3285 = vmatpush.bf16.msra.mxu0 %v3232
    %3286 = vmatpush.bf16.msra.mxu0 %v3230
    %3287 = vmatpush.bf16.msra.mxu0 %v3228
    %3288 = vmatpush.bf16.msra.mxu0 %v3226
    %3289 = vmatpush.bf16.msra.mxu0 %v3224
    %3290 = vmatpush.bf16.msra.mxu0 %v3222
    %3291 = vmatpush.bf16.msra.mxu0 %v3220
    %3292 = vmatmul.bf16.gmra.mxu0 %v3083
    %v3293 = vpop.f32.mrf.mxu0
    %v3294 = vadd.f32 %v3120, %v3293
    %v3295 = vpop.f32.mrf.mxu0
    %3296 = vdwg.mxu0
    %3297 = vmatpush.bf16.msra.mxu0 %v3250
    %3298 = vmatpush.bf16.msra.mxu0 %v3248
    %3299 = vmatpush.bf16.msra.mxu0 %v3246
    %3300 = vmatpush.bf16.msra.mxu0 %v3244
    %3301 = vmatpush.bf16.msra.mxu0 %v3242
    %3302 = vmatpush.bf16.msra.mxu0 %v3240
    %3303 = vmatpush.bf16.msra.mxu0 %v3238
    %3304 = vmatpush.bf16.msra.mxu0 %v3236
    %3305 = vmatmul.bf16.gmra.mxu0 %v3084
    %v3306 = vpop.f32.mrf.mxu0
    %v3307 = vadd.f32 %v3294, %v3306
    %v3308 = vpop.f32.mrf.mxu0
    %3309 = vdwg.mxu0
    %3310 = vmatpush.bf16.msra.mxu0 %v3235
    %3311 = vmatpush.bf16.msra.mxu0 %v3233
    %3312 = vmatpush.bf16.msra.mxu0 %v3231
    %3313 = vmatpush.bf16.msra.mxu0 %v3229
    %3314 = vmatpush.bf16.msra.mxu0 %v3227
    %3315 = vmatpush.bf16.msra.mxu0 %v3225
    %3316 = vmatpush.bf16.msra.mxu0 %v3223
    %3317 = vmatpush.bf16.msra.mxu0 %v3221
    %3318 = vmatmul.bf16.gmra.mxu0 %v3083
    %v3319 = vpop.f32.mrf.mxu0
    %v3320 = vadd.f32 %v3121, %v3319
    %v3321 = vpop.f32.mrf.mxu0
    %3322 = vdwg.mxu0
    %3323 = vmatpush.bf16.msra.mxu0 %v3251
    %3324 = vmatpush.bf16.msra.mxu0 %v3249
    %3325 = vmatpush.bf16.msra.mxu0 %v3247
    %3326 = vmatpush.bf16.msra.mxu0 %v3245
    %3327 = vmatpush.bf16.msra.mxu0 %v3243
    %3328 = vmatpush.bf16.msra.mxu0 %v3241
    %3329 = vmatpush.bf16.msra.mxu0 %v3239
    %3330 = vmatpush.bf16.msra.mxu0 %v3237
    %3331 = vmatmul.bf16.gmra.mxu0 %v3084
    %v3332 = vpop.f32.mrf.mxu0
    %v3333 = vadd.f32 %v3320, %v3332
    %v3334 = vpop.f32.mrf.mxu0
    %3335 = vdwg.mxu0
    %v3336 = vadd.f32 %v3034, %v3307
    %v3337 = vadd.f32 %v3035, %v3333
    %v3338 = vsel %vm615, %v3336, 0.0
    %v3339 = vsel %vm615, %v3337, 0.0
    %v3340 = vadd.f32 %v3338, %v3339
    %3341 = vadd.xlane.f32.xlu0 %v3340
    %v3342 = vpop.xlane.xlu0 %3341
    %v3343 = vmul.f32 %v3342, %v627
    %v3344 = vsub.f32 %v3336, %v3343
    %v3345 = vsub.f32 %v3337, %v3343
    %v3346 = vmul.f32 %v3344, %v3344
    %v3347 = vmul.f32 %v3345, %v3345
    %v3348 = vsel %vm615, %v3346, 0.0
    %v3349 = vsel %vm615, %v3347, 0.0
    %v3350 = vadd.f32 %v3348, %v3349
    %3351 = vadd.xlane.f32.xlu0 %v3350
    %v3352 = vpop.xlane.xlu0 %3351
    %v3353 = vmul.f32 %v3352, %v627
    %v3354 = vadd.f32 %v3353, 1e-06
    %v3355 = vrsqrt.pop %v3354
    %v3356 = vmul.f32 %v3355, %v3354
    %v3357 = vmul.f32 %v3356, %v3355
    %v3358 = vmul.f32 0.5, %v3357
    %v3359 = vsub.f32 1.5, %v3358
    %v3360 = vmul.f32 %v3355, %v3359
    %vm3361 = vweird.f32 %v3354
    %vm3362 = vweird.f32 %v3355
    %vm3363 = vmor %vm3361, %vm3362
    %v3364 = vsel %vm3363, %v3355, %v3360
    %v3365 = vmul.f32 %v3344, %v3364
    %v3366 = vmul.f32 %v3345, %v3364
    %s3367 = scalar_lea.vmem [#allocation5], 128
    %v3368 = vld [vmem:[%s3367] ss:$8 sm:$0x3]
    %v3370 = vperm.slane %v3368, 0
    %v3371 = vperm.slane %v3368, 1
    %v3374 = vmul.f32 %v3365, %v3370
    %v3375 = vmul.f32 %v3366, %v3371
    %s3376 = scalar_lea.vmem [#allocation5], 129
    %v3377 = vld [vmem:[%s3376] ss:$8 sm:$0x3]
    %v3379 = vperm.slane %v3377, 0
    %v3380 = vperm.slane %v3377, 1
    %v3383 = vadd.f32 %v3374, %v3379
    %v3384 = vadd.f32 %v3375, %v3380
    %v3385 = vpack.c.bf16 %v3383, %v3383
    %v3386 = vpack.c.bf16 %v3384, %v3384
    %v3387 = vld [vmem:[#allocation10 + $0x400] sm:$0xff]
    %v3388 = vld [vmem:[#allocation10 + $0x408] sm:$0xff]
    %v3389 = vld [vmem:[#allocation10 + $0x410] sm:$0xff]
    %v3390 = vld [vmem:[#allocation10 + $0x418] sm:$0xff]
    %v3391 = vld [vmem:[#allocation10 + $0x420] sm:$0xff]
    %v3392 = vld [vmem:[#allocation10 + $0x428] sm:$0xff]
    %v3393 = vld [vmem:[#allocation10 + $0x430] sm:$0xff]
    %v3394 = vld [vmem:[#allocation10 + $0x438] sm:$0xff]
    %v3395 = vld [vmem:[#allocation10 + $0x440] sm:$0xff]
    %v3396 = vld [vmem:[#allocation10 + $0x448] sm:$0xff]
    %v3397 = vld [vmem:[#allocation10 + $0x450] sm:$0xff]
    %v3398 = vld [vmem:[#allocation10 + $0x458] sm:$0xff]
    %v3399 = vld [vmem:[#allocation10 + $0x460] sm:$0xff]
    %v3400 = vld [vmem:[#allocation10 + $0x468] sm:$0xff]
    %v3401 = vld [vmem:[#allocation10 + $0x470] sm:$0xff]
    %v3402 = vld [vmem:[#allocation10 + $0x478] sm:$0xff]
    %v3403 = vld [vmem:[#allocation10 + $0x480] sm:$0xff]
    %v3404 = vld [vmem:[#allocation10 + $0x488] sm:$0xff]
    %v3405 = vld [vmem:[#allocation10 + $0x490] sm:$0xff]
    %v3406 = vld [vmem:[#allocation10 + $0x498] sm:$0xff]
    %v3407 = vld [vmem:[#allocation10 + $0x4a0] sm:$0xff]
    %v3408 = vld [vmem:[#allocation10 + $0x4a8] sm:$0xff]
    %v3409 = vld [vmem:[#allocation10 + $0x4b0] sm:$0xff]
    %v3410 = vld [vmem:[#allocation10 + $0x4b8] sm:$0xff]
    %v3411 = vld [vmem:[#allocation10 + $0x4c0] sm:$0xff]
    %v3412 = vld [vmem:[#allocation10 + $0x4c8] sm:$0xff]
    %v3413 = vld [vmem:[#allocation10 + $0x4d0] sm:$0xff]
    %v3414 = vld [vmem:[#allocation10 + $0x4d8] sm:$0xff]
    %v3415 = vld [vmem:[#allocation10 + $0x4e0] sm:$0xff]
    %v3416 = vld [vmem:[#allocation10 + $0x4e8] sm:$0xff]
    %v3417 = vld [vmem:[#allocation10 + $0x4f0] sm:$0xff]
    %v3418 = vld [vmem:[#allocation10 + $0x4f8] sm:$0xff]
    %v3419 = vld [vmem:[#allocation10 + $0x500] sm:$0xff]
    %v3420 = vld [vmem:[#allocation10 + $0x508] sm:$0xff]
    %v3421 = vld [vmem:[#allocation10 + $0x510] sm:$0xff]
    %v3422 = vld [vmem:[#allocation10 + $0x518] sm:$0xff]
    %v3423 = vld [vmem:[#allocation10 + $0x520] sm:$0xff]
    %v3424 = vld [vmem:[#allocation10 + $0x528] sm:$0xff]
    %v3425 = vld [vmem:[#allocation10 + $0x530] sm:$0xff]
    %v3426 = vld [vmem:[#allocation10 + $0x538] sm:$0xff]
    %v3427 = vld [vmem:[#allocation10 + $0x540] sm:$0xff]
    %v3428 = vld [vmem:[#allocation10 + $0x548] sm:$0xff]
    %v3429 = vld [vmem:[#allocation10 + $0x550] sm:$0xff]
    %v3430 = vld [vmem:[#allocation10 + $0x558] sm:$0xff]
    %v3431 = vld [vmem:[#allocation10 + $0x560] sm:$0xff]
    %v3432 = vld [vmem:[#allocation10 + $0x568] sm:$0xff]
    %v3433 = vld [vmem:[#allocation10 + $0x570] sm:$0xff]
    %v3434 = vld [vmem:[#allocation10 + $0x578] sm:$0xff]
    %v3435 = vld [vmem:[#allocation10 + $0x580] sm:$0xff]
    %v3436 = vld [vmem:[#allocation10 + $0x588] sm:$0xff]
    %v3437 = vld [vmem:[#allocation10 + $0x590] sm:$0xff]
    %v3438 = vld [vmem:[#allocation10 + $0x598] sm:$0xff]
    %v3439 = vld [vmem:[#allocation10 + $0x5a0] sm:$0xff]
    %v3440 = vld [vmem:[#allocation10 + $0x5a8] sm:$0xff]
    %v3441 = vld [vmem:[#allocation10 + $0x5b0] sm:$0xff]
    %v3442 = vld [vmem:[#allocation10 + $0x5b8] sm:$0xff]
    %v3443 = vld [vmem:[#allocation10 + $0x5c0] sm:$0xff]
    %v3444 = vld [vmem:[#allocation10 + $0x5c8] sm:$0xff]
    %v3445 = vld [vmem:[#allocation10 + $0x5d0] sm:$0xff]
    %v3446 = vld [vmem:[#allocation10 + $0x5d8] sm:$0xff]
    %v3447 = vld [vmem:[#allocation10 + $0x5e0] sm:$0xff]
    %v3448 = vld [vmem:[#allocation10 + $0x5e8] sm:$0xff]
    %v3449 = vld [vmem:[#allocation10 + $0x5f0] sm:$0xff]
    %v3450 = vld [vmem:[#allocation10 + $0x5f8] sm:$0xff]
    %v3451 = vld [vmem:[#allocation10 + $0x600] sm:$0xff]
    %v3452 = vld [vmem:[#allocation10 + $0x608] sm:$0xff]
    %v3453 = vld [vmem:[#allocation10 + $0x610] sm:$0xff]
    %v3454 = vld [vmem:[#allocation10 + $0x618] sm:$0xff]
    %v3455 = vld [vmem:[#allocation10 + $0x620] sm:$0xff]
    %v3456 = vld [vmem:[#allocation10 + $0x628] sm:$0xff]
    %v3457 = vld [vmem:[#allocation10 + $0x630] sm:$0xff]
    %v3458 = vld [vmem:[#allocation10 + $0x638] sm:$0xff]
    %v3459 = vld [vmem:[#allocation10 + $0x640] sm:$0xff]
    %v3460 = vld [vmem:[#allocation10 + $0x648] sm:$0xff]
    %v3461 = vld [vmem:[#allocation10 + $0x650] sm:$0xff]
    %v3462 = vld [vmem:[#allocation10 + $0x658] sm:$0xff]
    %v3463 = vld [vmem:[#allocation10 + $0x660] sm:$0xff]
    %v3464 = vld [vmem:[#allocation10 + $0x668] sm:$0xff]
    %v3465 = vld [vmem:[#allocation10 + $0x670] sm:$0xff]
    %v3466 = vld [vmem:[#allocation10 + $0x678] sm:$0xff]
    %v3467 = vld [vmem:[#allocation10 + $0x680] sm:$0xff]
    %v3468 = vld [vmem:[#allocation10 + $0x688] sm:$0xff]
    %v3469 = vld [vmem:[#allocation10 + $0x690] sm:$0xff]
    %v3470 = vld [vmem:[#allocation10 + $0x698] sm:$0xff]
    %v3471 = vld [vmem:[#allocation10 + $0x6a0] sm:$0xff]
    %v3472 = vld [vmem:[#allocation10 + $0x6a8] sm:$0xff]
    %v3473 = vld [vmem:[#allocation10 + $0x6b0] sm:$0xff]
    %v3474 = vld [vmem:[#allocation10 + $0x6b8] sm:$0xff]
    %v3475 = vld [vmem:[#allocation10 + $0x6c0] sm:$0xff]
    %v3476 = vld [vmem:[#allocation10 + $0x6c8] sm:$0xff]
    %v3477 = vld [vmem:[#allocation10 + $0x6d0] sm:$0xff]
    %v3478 = vld [vmem:[#allocation10 + $0x6d8] sm:$0xff]
    %v3479 = vld [vmem:[#allocation10 + $0x6e0] sm:$0xff]
    %v3480 = vld [vmem:[#allocation10 + $0x6e8] sm:$0xff]
    %v3481 = vld [vmem:[#allocation10 + $0x6f0] sm:$0xff]
    %v3482 = vld [vmem:[#allocation10 + $0x6f8] sm:$0xff]
    %v3483 = vld [vmem:[#allocation10 + $0x700] sm:$0xff]
    %v3484 = vld [vmem:[#allocation10 + $0x708] sm:$0xff]
    %v3485 = vld [vmem:[#allocation10 + $0x710] sm:$0xff]
    %v3486 = vld [vmem:[#allocation10 + $0x718] sm:$0xff]
    %v3487 = vld [vmem:[#allocation10 + $0x720] sm:$0xff]
    %v3488 = vld [vmem:[#allocation10 + $0x728] sm:$0xff]
    %v3489 = vld [vmem:[#allocation10 + $0x730] sm:$0xff]
    %v3490 = vld [vmem:[#allocation10 + $0x738] sm:$0xff]
    %v3491 = vld [vmem:[#allocation10 + $0x740] sm:$0xff]
    %v3492 = vld [vmem:[#allocation10 + $0x748] sm:$0xff]
    %v3493 = vld [vmem:[#allocation10 + $0x750] sm:$0xff]
    %v3494 = vld [vmem:[#allocation10 + $0x758] sm:$0xff]
    %v3495 = vld [vmem:[#allocation10 + $0x760] sm:$0xff]
    %v3496 = vld [vmem:[#allocation10 + $0x768] sm:$0xff]
    %v3497 = vld [vmem:[#allocation10 + $0x770] sm:$0xff]
    %v3498 = vld [vmem:[#allocation10 + $0x778] sm:$0xff]
    %v3499 = vld [vmem:[#allocation10 + $0x780] sm:$0xff]
    %v3500 = vld [vmem:[#allocation10 + $0x788] sm:$0xff]
    %v3501 = vld [vmem:[#allocation10 + $0x790] sm:$0xff]
    %v3502 = vld [vmem:[#allocation10 + $0x798] sm:$0xff]
    %v3503 = vld [vmem:[#allocation10 + $0x7a0] sm:$0xff]
    %v3504 = vld [vmem:[#allocation10 + $0x7a8] sm:$0xff]
    %v3505 = vld [vmem:[#allocation10 + $0x7b0] sm:$0xff]
    %v3506 = vld [vmem:[#allocation10 + $0x7b8] sm:$0xff]
    %v3507 = vld [vmem:[#allocation10 + $0x7c0] sm:$0xff]
    %v3508 = vld [vmem:[#allocation10 + $0x7c8] sm:$0xff]
    %v3509 = vld [vmem:[#allocation10 + $0x7d0] sm:$0xff]
    %v3510 = vld [vmem:[#allocation10 + $0x7d8] sm:$0xff]
    %v3511 = vld [vmem:[#allocation10 + $0x7e0] sm:$0xff]
    %v3512 = vld [vmem:[#allocation10 + $0x7e8] sm:$0xff]
    %v3513 = vld [vmem:[#allocation10 + $0x7f0] sm:$0xff]
    %v3514 = vld [vmem:[#allocation10 + $0x7f8] sm:$0xff]
    %s3515 = scalar_lea.vmem [#allocation5], 130
    %v3516 = vld [vmem:[%s3515] ss:$8 sm:$0xf]
    %v3517 = vld [vmem:[%s3515] ss:$8 sm:$0xf0]
    %v3518 = vor.u32 %v3516, %v3517
    %v3520 = vperm.slane %v3518, 0
    %v3521 = vperm.slane %v3518, 1
    %v3522 = vperm.slane %v3518, 2
    %v3523 = vperm.slane %v3518, 3
    %v3524 = vperm.slane %v3518, 4
    %v3525 = vperm.slane %v3518, 5
    %v3526 = vperm.slane %v3518, 6
    %v3527 = vperm.slane %v3518, 7
    %v3664 = vunpack.c.l.b16 %v3387
    %v3665 = vunpack.c.h.b16 %v3387
    %v3666 = vunpack.c.l.b16 %v3388
    %v3667 = vunpack.c.h.b16 %v3388
    %v3668 = vunpack.c.l.b16 %v3389
    %v3669 = vunpack.c.h.b16 %v3389
    %v3670 = vunpack.c.l.b16 %v3390
    %v3671 = vunpack.c.h.b16 %v3390
    %v3672 = vunpack.c.l.b16 %v3391
    %v3673 = vunpack.c.h.b16 %v3391
    %v3674 = vunpack.c.l.b16 %v3392
    %v3675 = vunpack.c.h.b16 %v3392
    %v3676 = vunpack.c.l.b16 %v3393
    %v3677 = vunpack.c.h.b16 %v3393
    %v3678 = vunpack.c.l.b16 %v3394
    %v3679 = vunpack.c.h.b16 %v3394
    %v3680 = vunpack.c.l.b16 %v3395
    %v3681 = vunpack.c.h.b16 %v3395
    %v3682 = vunpack.c.l.b16 %v3396
    %v3683 = vunpack.c.h.b16 %v3396
    %v3684 = vunpack.c.l.b16 %v3397
    %v3685 = vunpack.c.h.b16 %v3397
    %v3686 = vunpack.c.l.b16 %v3398
    %v3687 = vunpack.c.h.b16 %v3398
    %v3688 = vunpack.c.l.b16 %v3399
    %v3689 = vunpack.c.h.b16 %v3399
    %v3690 = vunpack.c.l.b16 %v3400
    %v3691 = vunpack.c.h.b16 %v3400
    %v3692 = vunpack.c.l.b16 %v3401
    %v3693 = vunpack.c.h.b16 %v3401
    %v3694 = vunpack.c.l.b16 %v3402
    %v3695 = vunpack.c.h.b16 %v3402
    %v3696 = vunpack.c.l.b16 %v3403
    %v3697 = vunpack.c.h.b16 %v3403
    %v3698 = vunpack.c.l.b16 %v3404
    %v3699 = vunpack.c.h.b16 %v3404
    %v3700 = vunpack.c.l.b16 %v3405
    %v3701 = vunpack.c.h.b16 %v3405
    %v3702 = vunpack.c.l.b16 %v3406
    %v3703 = vunpack.c.h.b16 %v3406
    %v3704 = vunpack.c.l.b16 %v3407
    %v3705 = vunpack.c.h.b16 %v3407
    %v3706 = vunpack.c.l.b16 %v3408
    %v3707 = vunpack.c.h.b16 %v3408
    %v3708 = vunpack.c.l.b16 %v3409
    %v3709 = vunpack.c.h.b16 %v3409
    %v3710 = vunpack.c.l.b16 %v3410
    %v3711 = vunpack.c.h.b16 %v3410
    %v3712 = vunpack.c.l.b16 %v3411
    %v3713 = vunpack.c.h.b16 %v3411
    %v3714 = vunpack.c.l.b16 %v3412
    %v3715 = vunpack.c.h.b16 %v3412
    %v3716 = vunpack.c.l.b16 %v3413
    %v3717 = vunpack.c.h.b16 %v3413
    %v3718 = vunpack.c.l.b16 %v3414
    %v3719 = vunpack.c.h.b16 %v3414
    %v3720 = vunpack.c.l.b16 %v3415
    %v3721 = vunpack.c.h.b16 %v3415
    %v3722 = vunpack.c.l.b16 %v3416
    %v3723 = vunpack.c.h.b16 %v3416
    %v3724 = vunpack.c.l.b16 %v3417
    %v3725 = vunpack.c.h.b16 %v3417
    %v3726 = vunpack.c.l.b16 %v3418
    %v3727 = vunpack.c.h.b16 %v3418
    %v3728 = vunpack.c.l.b16 %v3419
    %v3729 = vunpack.c.h.b16 %v3419
    %v3730 = vunpack.c.l.b16 %v3420
    %v3731 = vunpack.c.h.b16 %v3420
    %v3732 = vunpack.c.l.b16 %v3421
    %v3733 = vunpack.c.h.b16 %v3421
    %v3734 = vunpack.c.l.b16 %v3422
    %v3735 = vunpack.c.h.b16 %v3422
    %v3736 = vunpack.c.l.b16 %v3423
    %v3737 = vunpack.c.h.b16 %v3423
    %v3738 = vunpack.c.l.b16 %v3424
    %v3739 = vunpack.c.h.b16 %v3424
    %v3740 = vunpack.c.l.b16 %v3425
    %v3741 = vunpack.c.h.b16 %v3425
    %v3742 = vunpack.c.l.b16 %v3426
    %v3743 = vunpack.c.h.b16 %v3426
    %v3744 = vunpack.c.l.b16 %v3427
    %v3745 = vunpack.c.h.b16 %v3427
    %v3746 = vunpack.c.l.b16 %v3428
    %v3747 = vunpack.c.h.b16 %v3428
    %v3748 = vunpack.c.l.b16 %v3429
    %v3749 = vunpack.c.h.b16 %v3429
    %v3750 = vunpack.c.l.b16 %v3430
    %v3751 = vunpack.c.h.b16 %v3430
    %v3752 = vunpack.c.l.b16 %v3431
    %v3753 = vunpack.c.h.b16 %v3431
    %v3754 = vunpack.c.l.b16 %v3432
    %v3755 = vunpack.c.h.b16 %v3432
    %v3756 = vunpack.c.l.b16 %v3433
    %v3757 = vunpack.c.h.b16 %v3433
    %v3758 = vunpack.c.l.b16 %v3434
    %v3759 = vunpack.c.h.b16 %v3434
    %v3760 = vunpack.c.l.b16 %v3435
    %v3761 = vunpack.c.h.b16 %v3435
    %v3762 = vunpack.c.l.b16 %v3436
    %v3763 = vunpack.c.h.b16 %v3436
    %v3764 = vunpack.c.l.b16 %v3437
    %v3765 = vunpack.c.h.b16 %v3437
    %v3766 = vunpack.c.l.b16 %v3438
    %v3767 = vunpack.c.h.b16 %v3438
    %v3768 = vunpack.c.l.b16 %v3439
    %v3769 = vunpack.c.h.b16 %v3439
    %v3770 = vunpack.c.l.b16 %v3440
    %v3771 = vunpack.c.h.b16 %v3440
    %v3772 = vunpack.c.l.b16 %v3441
    %v3773 = vunpack.c.h.b16 %v3441
    %v3774 = vunpack.c.l.b16 %v3442
    %v3775 = vunpack.c.h.b16 %v3442
    %v3776 = vunpack.c.l.b16 %v3443
    %v3777 = vunpack.c.h.b16 %v3443
    %v3778 = vunpack.c.l.b16 %v3444
    %v3779 = vunpack.c.h.b16 %v3444
    %v3780 = vunpack.c.l.b16 %v3445
    %v3781 = vunpack.c.h.b16 %v3445
    %v3782 = vunpack.c.l.b16 %v3446
    %v3783 = vunpack.c.h.b16 %v3446
    %v3784 = vunpack.c.l.b16 %v3447
    %v3785 = vunpack.c.h.b16 %v3447
    %v3786 = vunpack.c.l.b16 %v3448
    %v3787 = vunpack.c.h.b16 %v3448
    %v3788 = vunpack.c.l.b16 %v3449
    %v3789 = vunpack.c.h.b16 %v3449
    %v3790 = vunpack.c.l.b16 %v3450
    %v3791 = vunpack.c.h.b16 %v3450
    %v3792 = vunpack.c.l.b16 %v3451
    %v3793 = vunpack.c.h.b16 %v3451
    %v3794 = vunpack.c.l.b16 %v3452
    %v3795 = vunpack.c.h.b16 %v3452
    %v3796 = vunpack.c.l.b16 %v3453
    %v3797 = vunpack.c.h.b16 %v3453
    %v3798 = vunpack.c.l.b16 %v3454
    %v3799 = vunpack.c.h.b16 %v3454
    %v3800 = vunpack.c.l.b16 %v3455
    %v3801 = vunpack.c.h.b16 %v3455
    %v3802 = vunpack.c.l.b16 %v3456
    %v3803 = vunpack.c.h.b16 %v3456
    %v3804 = vunpack.c.l.b16 %v3457
    %v3805 = vunpack.c.h.b16 %v3457
    %v3806 = vunpack.c.l.b16 %v3458
    %v3807 = vunpack.c.h.b16 %v3458
    %v3808 = vunpack.c.l.b16 %v3459
    %v3809 = vunpack.c.h.b16 %v3459
    %v3810 = vunpack.c.l.b16 %v3460
    %v3811 = vunpack.c.h.b16 %v3460
    %v3812 = vunpack.c.l.b16 %v3461
    %v3813 = vunpack.c.h.b16 %v3461
    %v3814 = vunpack.c.l.b16 %v3462
    %v3815 = vunpack.c.h.b16 %v3462
    %v3816 = vunpack.c.l.b16 %v3463
    %v3817 = vunpack.c.h.b16 %v3463
    %v3818 = vunpack.c.l.b16 %v3464
    %v3819 = vunpack.c.h.b16 %v3464
    %v3820 = vunpack.c.l.b16 %v3465
    %v3821 = vunpack.c.h.b16 %v3465
    %v3822 = vunpack.c.l.b16 %v3466
    %v3823 = vunpack.c.h.b16 %v3466
    %v3824 = vunpack.c.l.b16 %v3467
    %v3825 = vunpack.c.h.b16 %v3467
    %v3826 = vunpack.c.l.b16 %v3468
    %v3827 = vunpack.c.h.b16 %v3468
    %v3828 = vunpack.c.l.b16 %v3469
    %v3829 = vunpack.c.h.b16 %v3469
    %v3830 = vunpack.c.l.b16 %v3470
    %v3831 = vunpack.c.h.b16 %v3470
    %v3832 = vunpack.c.l.b16 %v3471
    %v3833 = vunpack.c.h.b16 %v3471
    %v3834 = vunpack.c.l.b16 %v3472
    %v3835 = vunpack.c.h.b16 %v3472
    %v3836 = vunpack.c.l.b16 %v3473
    %v3837 = vunpack.c.h.b16 %v3473
    %v3838 = vunpack.c.l.b16 %v3474
    %v3839 = vunpack.c.h.b16 %v3474
    %v3840 = vunpack.c.l.b16 %v3475
    %v3841 = vunpack.c.h.b16 %v3475
    %v3842 = vunpack.c.l.b16 %v3476
    %v3843 = vunpack.c.h.b16 %v3476
    %v3844 = vunpack.c.l.b16 %v3477
    %v3845 = vunpack.c.h.b16 %v3477
    %v3846 = vunpack.c.l.b16 %v3478
    %v3847 = vunpack.c.h.b16 %v3478
    %v3848 = vunpack.c.l.b16 %v3479
    %v3849 = vunpack.c.h.b16 %v3479
    %v3850 = vunpack.c.l.b16 %v3480
    %v3851 = vunpack.c.h.b16 %v3480
    %v3852 = vunpack.c.l.b16 %v3481
    %v3853 = vunpack.c.h.b16 %v3481
    %v3854 = vunpack.c.l.b16 %v3482
    %v3855 = vunpack.c.h.b16 %v3482
    %v3856 = vunpack.c.l.b16 %v3483
    %v3857 = vunpack.c.h.b16 %v3483
    %v3858 = vunpack.c.l.b16 %v3484
    %v3859 = vunpack.c.h.b16 %v3484
    %v3860 = vunpack.c.l.b16 %v3485
    %v3861 = vunpack.c.h.b16 %v3485
    %v3862 = vunpack.c.l.b16 %v3486
    %v3863 = vunpack.c.h.b16 %v3486
    %v3864 = vunpack.c.l.b16 %v3487
    %v3865 = vunpack.c.h.b16 %v3487
    %v3866 = vunpack.c.l.b16 %v3488
    %v3867 = vunpack.c.h.b16 %v3488
    %v3868 = vunpack.c.l.b16 %v3489
    %v3869 = vunpack.c.h.b16 %v3489
    %v3870 = vunpack.c.l.b16 %v3490
    %v3871 = vunpack.c.h.b16 %v3490
    %v3872 = vunpack.c.l.b16 %v3491
    %v3873 = vunpack.c.h.b16 %v3491
    %v3874 = vunpack.c.l.b16 %v3492
    %v3875 = vunpack.c.h.b16 %v3492
    %v3876 = vunpack.c.l.b16 %v3493
    %v3877 = vunpack.c.h.b16 %v3493
    %v3878 = vunpack.c.l.b16 %v3494
    %v3879 = vunpack.c.h.b16 %v3494
    %v3880 = vunpack.c.l.b16 %v3495
    %v3881 = vunpack.c.h.b16 %v3495
    %v3882 = vunpack.c.l.b16 %v3496
    %v3883 = vunpack.c.h.b16 %v3496
    %v3884 = vunpack.c.l.b16 %v3497
    %v3885 = vunpack.c.h.b16 %v3497
    %v3886 = vunpack.c.l.b16 %v3498
    %v3887 = vunpack.c.h.b16 %v3498
    %v3888 = vunpack.c.l.b16 %v3499
    %v3889 = vunpack.c.h.b16 %v3499
    %v3890 = vunpack.c.l.b16 %v3500
    %v3891 = vunpack.c.h.b16 %v3500
    %v3892 = vunpack.c.l.b16 %v3501
    %v3893 = vunpack.c.h.b16 %v3501
    %v3894 = vunpack.c.l.b16 %v3502
    %v3895 = vunpack.c.h.b16 %v3502
    %v3896 = vunpack.c.l.b16 %v3503
    %v3897 = vunpack.c.h.b16 %v3503
    %v3898 = vunpack.c.l.b16 %v3504
    %v3899 = vunpack.c.h.b16 %v3504
    %v3900 = vunpack.c.l.b16 %v3505
    %v3901 = vunpack.c.h.b16 %v3505
    %v3902 = vunpack.c.l.b16 %v3506
    %v3903 = vunpack.c.h.b16 %v3506
    %v3904 = vunpack.c.l.b16 %v3507
    %v3905 = vunpack.c.h.b16 %v3507
    %v3906 = vunpack.c.l.b16 %v3508
    %v3907 = vunpack.c.h.b16 %v3508
    %v3908 = vunpack.c.l.b16 %v3509
    %v3909 = vunpack.c.h.b16 %v3509
    %v3910 = vunpack.c.l.b16 %v3510
    %v3911 = vunpack.c.h.b16 %v3510
    %v3912 = vunpack.c.l.b16 %v3511
    %v3913 = vunpack.c.h.b16 %v3511
    %v3914 = vunpack.c.l.b16 %v3512
    %v3915 = vunpack.c.h.b16 %v3512
    %v3916 = vunpack.c.l.b16 %v3513
    %v3917 = vunpack.c.h.b16 %v3513
    %v3918 = vunpack.c.l.b16 %v3514
    %v3919 = vunpack.c.h.b16 %v3514
    %v3920 = vpack.c.b16 %v3672, %v3664
    %v3921 = vpack.c.b16 %v3673, %v3665
    %v3922 = vpack.c.b16 %v3674, %v3666
    %v3923 = vpack.c.b16 %v3675, %v3667
    %v3924 = vpack.c.b16 %v3676, %v3668
    %v3925 = vpack.c.b16 %v3677, %v3669
    %v3926 = vpack.c.b16 %v3678, %v3670
    %v3927 = vpack.c.b16 %v3679, %v3671
    %v3928 = vpack.c.b16 %v3688, %v3680
    %v3929 = vpack.c.b16 %v3689, %v3681
    %v3930 = vpack.c.b16 %v3690, %v3682
    %v3931 = vpack.c.b16 %v3691, %v3683
    %v3932 = vpack.c.b16 %v3692, %v3684
    %v3933 = vpack.c.b16 %v3693, %v3685
    %v3934 = vpack.c.b16 %v3694, %v3686
    %v3935 = vpack.c.b16 %v3695, %v3687
    %v3936 = vpack.c.b16 %v3704, %v3696
    %v3937 = vpack.c.b16 %v3705, %v3697
    %v3938 = vpack.c.b16 %v3706, %v3698
    %v3939 = vpack.c.b16 %v3707, %v3699
    %v3940 = vpack.c.b16 %v3708, %v3700
    %v3941 = vpack.c.b16 %v3709, %v3701
    %v3942 = vpack.c.b16 %v3710, %v3702
    %v3943 = vpack.c.b16 %v3711, %v3703
    %v3944 = vpack.c.b16 %v3720, %v3712
    %v3945 = vpack.c.b16 %v3721, %v3713
    %v3946 = vpack.c.b16 %v3722, %v3714
    %v3947 = vpack.c.b16 %v3723, %v3715
    %v3948 = vpack.c.b16 %v3724, %v3716
    %v3949 = vpack.c.b16 %v3725, %v3717
    %v3950 = vpack.c.b16 %v3726, %v3718
    %v3951 = vpack.c.b16 %v3727, %v3719
    %v3952 = vpack.c.b16 %v3736, %v3728
    %v3953 = vpack.c.b16 %v3737, %v3729
    %v3954 = vpack.c.b16 %v3738, %v3730
    %v3955 = vpack.c.b16 %v3739, %v3731
    %v3956 = vpack.c.b16 %v3740, %v3732
    %v3957 = vpack.c.b16 %v3741, %v3733
    %v3958 = vpack.c.b16 %v3742, %v3734
    %v3959 = vpack.c.b16 %v3743, %v3735
    %v3960 = vpack.c.b16 %v3752, %v3744
    %v3961 = vpack.c.b16 %v3753, %v3745
    %v3962 = vpack.c.b16 %v3754, %v3746
    %v3963 = vpack.c.b16 %v3755, %v3747
    %v3964 = vpack.c.b16 %v3756, %v3748
    %v3965 = vpack.c.b16 %v3757, %v3749
    %v3966 = vpack.c.b16 %v3758, %v3750
    %v3967 = vpack.c.b16 %v3759, %v3751
    %v3968 = vpack.c.b16 %v3768, %v3760
    %v3969 = vpack.c.b16 %v3769, %v3761
    %v3970 = vpack.c.b16 %v3770, %v3762
    %v3971 = vpack.c.b16 %v3771, %v3763
    %v3972 = vpack.c.b16 %v3772, %v3764
    %v3973 = vpack.c.b16 %v3773, %v3765
    %v3974 = vpack.c.b16 %v3774, %v3766
    %v3975 = vpack.c.b16 %v3775, %v3767
    %v3976 = vpack.c.b16 %v3784, %v3776
    %v3977 = vpack.c.b16 %v3785, %v3777
    %v3978 = vpack.c.b16 %v3786, %v3778
    %v3979 = vpack.c.b16 %v3787, %v3779
    %v3980 = vpack.c.b16 %v3788, %v3780
    %v3981 = vpack.c.b16 %v3789, %v3781
    %v3982 = vpack.c.b16 %v3790, %v3782
    %v3983 = vpack.c.b16 %v3791, %v3783
    %v3984 = vpack.c.b16 %v3800, %v3792
    %v3985 = vpack.c.b16 %v3801, %v3793
    %v3986 = vpack.c.b16 %v3802, %v3794
    %v3987 = vpack.c.b16 %v3803, %v3795
    %v3988 = vpack.c.b16 %v3804, %v3796
    %v3989 = vpack.c.b16 %v3805, %v3797
    %v3990 = vpack.c.b16 %v3806, %v3798
    %v3991 = vpack.c.b16 %v3807, %v3799
    %v3992 = vpack.c.b16 %v3816, %v3808
    %v3993 = vpack.c.b16 %v3817, %v3809
    %v3994 = vpack.c.b16 %v3818, %v3810
    %v3995 = vpack.c.b16 %v3819, %v3811
    %v3996 = vpack.c.b16 %v3820, %v3812
    %v3997 = vpack.c.b16 %v3821, %v3813
    %v3998 = vpack.c.b16 %v3822, %v3814
    %v3999 = vpack.c.b16 %v3823, %v3815
    %v4000 = vpack.c.b16 %v3832, %v3824
    %v4001 = vpack.c.b16 %v3833, %v3825
    %v4002 = vpack.c.b16 %v3834, %v3826
    %v4003 = vpack.c.b16 %v3835, %v3827
    %v4004 = vpack.c.b16 %v3836, %v3828
    %v4005 = vpack.c.b16 %v3837, %v3829
    %v4006 = vpack.c.b16 %v3838, %v3830
    %v4007 = vpack.c.b16 %v3839, %v3831
    %v4008 = vpack.c.b16 %v3848, %v3840
    %v4009 = vpack.c.b16 %v3849, %v3841
    %v4010 = vpack.c.b16 %v3850, %v3842
    %v4011 = vpack.c.b16 %v3851, %v3843
    %v4012 = vpack.c.b16 %v3852, %v3844
    %v4013 = vpack.c.b16 %v3853, %v3845
    %v4014 = vpack.c.b16 %v3854, %v3846
    %v4015 = vpack.c.b16 %v3855, %v3847
    %v4016 = vpack.c.b16 %v3864, %v3856
    %v4017 = vpack.c.b16 %v3865, %v3857
    %v4018 = vpack.c.b16 %v3866, %v3858
    %v4019 = vpack.c.b16 %v3867, %v3859
    %v4020 = vpack.c.b16 %v3868, %v3860
    %v4021 = vpack.c.b16 %v3869, %v3861
    %v4022 = vpack.c.b16 %v3870, %v3862
    %v4023 = vpack.c.b16 %v3871, %v3863
    %v4024 = vpack.c.b16 %v3880, %v3872
    %v4025 = vpack.c.b16 %v3881, %v3873
    %v4026 = vpack.c.b16 %v3882, %v3874
    %v4027 = vpack.c.b16 %v3883, %v3875
    %v4028 = vpack.c.b16 %v3884, %v3876
    %v4029 = vpack.c.b16 %v3885, %v3877
    %v4030 = vpack.c.b16 %v3886, %v3878
    %v4031 = vpack.c.b16 %v3887, %v3879
    %v4032 = vpack.c.b16 %v3896, %v3888
    %v4033 = vpack.c.b16 %v3897, %v3889
    %v4034 = vpack.c.b16 %v3898, %v3890
    %v4035 = vpack.c.b16 %v3899, %v3891
    %v4036 = vpack.c.b16 %v3900, %v3892
    %v4037 = vpack.c.b16 %v3901, %v3893
    %v4038 = vpack.c.b16 %v3902, %v3894
    %v4039 = vpack.c.b16 %v3903, %v3895
    %v4040 = vpack.c.b16 %v3912, %v3904
    %v4041 = vpack.c.b16 %v3913, %v3905
    %v4042 = vpack.c.b16 %v3914, %v3906
    %v4043 = vpack.c.b16 %v3915, %v3907
    %v4044 = vpack.c.b16 %v3916, %v3908
    %v4045 = vpack.c.b16 %v3917, %v3909
    %v4046 = vpack.c.b16 %v3918, %v3910
    %v4047 = vpack.c.b16 %v3919, %v3911
    %4176 = vmatpush.bf16.msra.mxu0 %v3976
    %4177 = vmatpush.bf16.msra.mxu0 %v3968
    %4178 = vmatpush.bf16.msra.mxu0 %v3960
    %4179 = vmatpush.bf16.msra.mxu0 %v3952
    %4180 = vmatpush.bf16.msra.mxu0 %v3944
    %4181 = vmatpush.bf16.msra.mxu0 %v3936
    %4182 = vmatpush.bf16.msra.mxu0 %v3928
    %4183 = vmatpush.bf16.msra.mxu0 %v3920
    %4184 = vmatmul.bf16.gmra.mxu0 %v3385
    %v4185 = vpop.f32.mrf.mxu0
    %v4186 = vadd.f32 %v3520, %v4185
    %v4187 = vpop.f32.mrf.mxu0
    %4188 = vdwg.mxu0
    %4189 = vmatpush.bf16.msra.mxu0 %v4040
    %4190 = vmatpush.bf16.msra.mxu0 %v4032
    %4191 = vmatpush.bf16.msra.mxu0 %v4024
    %4192 = vmatpush.bf16.msra.mxu0 %v4016
    %4193 = vmatpush.bf16.msra.mxu0 %v4008
    %4194 = vmatpush.bf16.msra.mxu0 %v4000
    %4195 = vmatpush.bf16.msra.mxu0 %v3992
    %4196 = vmatpush.bf16.msra.mxu0 %v3984
    %4197 = vmatmul.bf16.gmra.mxu0 %v3386
    %v4198 = vpop.f32.mrf.mxu0
    %v4199 = vadd.f32 %v4186, %v4198
    %v4200 = vpop.f32.mrf.mxu0
    %4201 = vdwg.mxu0
    %4202 = vmatpush.bf16.msra.mxu0 %v3977
    %4203 = vmatpush.bf16.msra.mxu0 %v3969
    %4204 = vmatpush.bf16.msra.mxu0 %v3961
    %4205 = vmatpush.bf16.msra.mxu0 %v3953
    %4206 = vmatpush.bf16.msra.mxu0 %v3945
    %4207 = vmatpush.bf16.msra.mxu0 %v3937
    %4208 = vmatpush.bf16.msra.mxu0 %v3929
    %4209 = vmatpush.bf16.msra.mxu0 %v3921
    %4210 = vmatmul.bf16.gmra.mxu0 %v3385
    %v4211 = vpop.f32.mrf.mxu0
    %v4212 = vadd.f32 %v3521, %v4211
    %v4213 = vpop.f32.mrf.mxu0
    %4214 = vdwg.mxu0
    %4215 = vmatpush.bf16.msra.mxu0 %v4041
    %4216 = vmatpush.bf16.msra.mxu0 %v4033
    %4217 = vmatpush.bf16.msra.mxu0 %v4025
    %4218 = vmatpush.bf16.msra.mxu0 %v4017
    %4219 = vmatpush.bf16.msra.mxu0 %v4009
    %4220 = vmatpush.bf16.msra.mxu0 %v4001
    %4221 = vmatpush.bf16.msra.mxu0 %v3993
    %4222 = vmatpush.bf16.msra.mxu0 %v3985
    %4223 = vmatmul.bf16.gmra.mxu0 %v3386
    %v4224 = vpop.f32.mrf.mxu0
    %v4225 = vadd.f32 %v4212, %v4224
    %v4226 = vpop.f32.mrf.mxu0
    %4227 = vdwg.mxu0
    %4228 = vmatpush.bf16.msra.mxu0 %v3978
    %4229 = vmatpush.bf16.msra.mxu0 %v3970
    %4230 = vmatpush.bf16.msra.mxu0 %v3962
    %4231 = vmatpush.bf16.msra.mxu0 %v3954
    %4232 = vmatpush.bf16.msra.mxu0 %v3946
    %4233 = vmatpush.bf16.msra.mxu0 %v3938
    %4234 = vmatpush.bf16.msra.mxu0 %v3930
    %4235 = vmatpush.bf16.msra.mxu0 %v3922
    %4236 = vmatmul.bf16.gmra.mxu0 %v3385
    %v4237 = vpop.f32.mrf.mxu0
    %v4238 = vadd.f32 %v3522, %v4237
    %v4239 = vpop.f32.mrf.mxu0
    %4240 = vdwg.mxu0
    %4241 = vmatpush.bf16.msra.mxu0 %v4042
    %4242 = vmatpush.bf16.msra.mxu0 %v4034
    %4243 = vmatpush.bf16.msra.mxu0 %v4026
    %4244 = vmatpush.bf16.msra.mxu0 %v4018
    %4245 = vmatpush.bf16.msra.mxu0 %v4010
    %4246 = vmatpush.bf16.msra.mxu0 %v4002
    %4247 = vmatpush.bf16.msra.mxu0 %v3994
    %4248 = vmatpush.bf16.msra.mxu0 %v3986
    %4249 = vmatmul.bf16.gmra.mxu0 %v3386
    %v4250 = vpop.f32.mrf.mxu0
    %v4251 = vadd.f32 %v4238, %v4250
    %v4252 = vpop.f32.mrf.mxu0
    %4253 = vdwg.mxu0
    %4254 = vmatpush.bf16.msra.mxu0 %v3979
    %4255 = vmatpush.bf16.msra.mxu0 %v3971
    %4256 = vmatpush.bf16.msra.mxu0 %v3963
    %4257 = vmatpush.bf16.msra.mxu0 %v3955
    %4258 = vmatpush.bf16.msra.mxu0 %v3947
    %4259 = vmatpush.bf16.msra.mxu0 %v3939
    %4260 = vmatpush.bf16.msra.mxu0 %v3931
    %4261 = vmatpush.bf16.msra.mxu0 %v3923
    %4262 = vmatmul.bf16.gmra.mxu0 %v3385
    %v4263 = vpop.f32.mrf.mxu0
    %v4264 = vadd.f32 %v3523, %v4263
    %v4265 = vpop.f32.mrf.mxu0
    %4266 = vdwg.mxu0
    %4267 = vmatpush.bf16.msra.mxu0 %v4043
    %4268 = vmatpush.bf16.msra.mxu0 %v4035
    %4269 = vmatpush.bf16.msra.mxu0 %v4027
    %4270 = vmatpush.bf16.msra.mxu0 %v4019
    %4271 = vmatpush.bf16.msra.mxu0 %v4011
    %4272 = vmatpush.bf16.msra.mxu0 %v4003
    %4273 = vmatpush.bf16.msra.mxu0 %v3995
    %4274 = vmatpush.bf16.msra.mxu0 %v3987
    %4275 = vmatmul.bf16.gmra.mxu0 %v3386
    %v4276 = vpop.f32.mrf.mxu0
    %v4277 = vadd.f32 %v4264, %v4276
    %v4278 = vpop.f32.mrf.mxu0
    %4279 = vdwg.mxu0
    %4280 = vmatpush.bf16.msra.mxu0 %v3980
    %4281 = vmatpush.bf16.msra.mxu0 %v3972
    %4282 = vmatpush.bf16.msra.mxu0 %v3964
    %4283 = vmatpush.bf16.msra.mxu0 %v3956
    %4284 = vmatpush.bf16.msra.mxu0 %v3948
    %4285 = vmatpush.bf16.msra.mxu0 %v3940
    %4286 = vmatpush.bf16.msra.mxu0 %v3932
    %4287 = vmatpush.bf16.msra.mxu0 %v3924
    %4288 = vmatmul.bf16.gmra.mxu0 %v3385
    %v4289 = vpop.f32.mrf.mxu0
    %v4290 = vadd.f32 %v3524, %v4289
    %v4291 = vpop.f32.mrf.mxu0
    %4292 = vdwg.mxu0
    %4293 = vmatpush.bf16.msra.mxu0 %v4044
    %4294 = vmatpush.bf16.msra.mxu0 %v4036
    %4295 = vmatpush.bf16.msra.mxu0 %v4028
    %4296 = vmatpush.bf16.msra.mxu0 %v4020
    %4297 = vmatpush.bf16.msra.mxu0 %v4012
    %4298 = vmatpush.bf16.msra.mxu0 %v4004
    %4299 = vmatpush.bf16.msra.mxu0 %v3996
    %4300 = vmatpush.bf16.msra.mxu0 %v3988
    %4301 = vmatmul.bf16.gmra.mxu0 %v3386
    %v4302 = vpop.f32.mrf.mxu0
    %v4303 = vadd.f32 %v4290, %v4302
    %v4304 = vpop.f32.mrf.mxu0
    %4305 = vdwg.mxu0
    %4306 = vmatpush.bf16.msra.mxu0 %v3981
    %4307 = vmatpush.bf16.msra.mxu0 %v3973
    %4308 = vmatpush.bf16.msra.mxu0 %v3965
    %4309 = vmatpush.bf16.msra.mxu0 %v3957
    %4310 = vmatpush.bf16.msra.mxu0 %v3949
    %4311 = vmatpush.bf16.msra.mxu0 %v3941
    %4312 = vmatpush.bf16.msra.mxu0 %v3933
    %4313 = vmatpush.bf16.msra.mxu0 %v3925
    %4314 = vmatmul.bf16.gmra.mxu0 %v3385
    %v4315 = vpop.f32.mrf.mxu0
    %v4316 = vadd.f32 %v3525, %v4315
    %v4317 = vpop.f32.mrf.mxu0
    %4318 = vdwg.mxu0
    %4319 = vmatpush.bf16.msra.mxu0 %v4045
    %4320 = vmatpush.bf16.msra.mxu0 %v4037
    %4321 = vmatpush.bf16.msra.mxu0 %v4029
    %4322 = vmatpush.bf16.msra.mxu0 %v4021
    %4323 = vmatpush.bf16.msra.mxu0 %v4013
    %4324 = vmatpush.bf16.msra.mxu0 %v4005
    %4325 = vmatpush.bf16.msra.mxu0 %v3997
    %4326 = vmatpush.bf16.msra.mxu0 %v3989
    %4327 = vmatmul.bf16.gmra.mxu0 %v3386
    %v4328 = vpop.f32.mrf.mxu0
    %v4329 = vadd.f32 %v4316, %v4328
    %v4330 = vpop.f32.mrf.mxu0
    %4331 = vdwg.mxu0
    %4332 = vmatpush.bf16.msra.mxu0 %v3982
    %4333 = vmatpush.bf16.msra.mxu0 %v3974
    %4334 = vmatpush.bf16.msra.mxu0 %v3966
    %4335 = vmatpush.bf16.msra.mxu0 %v3958
    %4336 = vmatpush.bf16.msra.mxu0 %v3950
    %4337 = vmatpush.bf16.msra.mxu0 %v3942
    %4338 = vmatpush.bf16.msra.mxu0 %v3934
    %4339 = vmatpush.bf16.msra.mxu0 %v3926
    %4340 = vmatmul.bf16.gmra.mxu0 %v3385
    %v4341 = vpop.f32.mrf.mxu0
    %v4342 = vadd.f32 %v3526, %v4341
    %v4343 = vpop.f32.mrf.mxu0
    %4344 = vdwg.mxu0
    %4345 = vmatpush.bf16.msra.mxu0 %v4046
    %4346 = vmatpush.bf16.msra.mxu0 %v4038
    %4347 = vmatpush.bf16.msra.mxu0 %v4030
    %4348 = vmatpush.bf16.msra.mxu0 %v4022
    %4349 = vmatpush.bf16.msra.mxu0 %v4014
    %4350 = vmatpush.bf16.msra.mxu0 %v4006
    %4351 = vmatpush.bf16.msra.mxu0 %v3998
    %4352 = vmatpush.bf16.msra.mxu0 %v3990
    %4353 = vmatmul.bf16.gmra.mxu0 %v3386
    %v4354 = vpop.f32.mrf.mxu0
    %v4355 = vadd.f32 %v4342, %v4354
    %v4356 = vpop.f32.mrf.mxu0
    %4357 = vdwg.mxu0
    %4358 = vmatpush.bf16.msra.mxu0 %v3983
    %4359 = vmatpush.bf16.msra.mxu0 %v3975
    %4360 = vmatpush.bf16.msra.mxu0 %v3967
    %4361 = vmatpush.bf16.msra.mxu0 %v3959
    %4362 = vmatpush.bf16.msra.mxu0 %v3951
    %4363 = vmatpush.bf16.msra.mxu0 %v3943
    %4364 = vmatpush.bf16.msra.mxu0 %v3935
    %4365 = vmatpush.bf16.msra.mxu0 %v3927
    %4366 = vmatmul.bf16.gmra.mxu0 %v3385
    %v4367 = vpop.f32.mrf.mxu0
    %v4368 = vadd.f32 %v3527, %v4367
    %v4369 = vpop.f32.mrf.mxu0
    %4370 = vdwg.mxu0
    %4371 = vmatpush.bf16.msra.mxu0 %v4047
    %4372 = vmatpush.bf16.msra.mxu0 %v4039
    %4373 = vmatpush.bf16.msra.mxu0 %v4031
    %4374 = vmatpush.bf16.msra.mxu0 %v4023
    %4375 = vmatpush.bf16.msra.mxu0 %v4015
    %4376 = vmatpush.bf16.msra.mxu0 %v4007
    %4377 = vmatpush.bf16.msra.mxu0 %v3999
    %4378 = vmatpush.bf16.msra.mxu0 %v3991
    %4379 = vmatmul.bf16.gmra.mxu0 %v3386
    %v4380 = vpop.f32.mrf.mxu0
    %v4381 = vadd.f32 %v4368, %v4380
    %v4382 = vpop.f32.mrf.mxu0
    %4383 = vdwg.mxu0
    %v4384 = vmul.f32 %v4199, 0.5
    %v4385 = vmul.f32 %v4225, 0.5
    %v4386 = vmul.f32 %v4251, 0.5
    %v4387 = vmul.f32 %v4277, 0.5
    %v4388 = vmul.f32 %v4303, 0.5
    %v4389 = vmul.f32 %v4329, 0.5
    %v4390 = vmul.f32 %v4355, 0.5
    %v4391 = vmul.f32 %v4381, 0.5
    %v4392 = vmul.f32 %v4199, 0.044715
    %v4393 = vmul.f32 %v4225, 0.044715
    %v4394 = vmul.f32 %v4251, 0.044715
    %v4395 = vmul.f32 %v4277, 0.044715
    %v4396 = vmul.f32 %v4303, 0.044715
    %v4397 = vmul.f32 %v4329, 0.044715
    %v4398 = vmul.f32 %v4355, 0.044715
    %v4399 = vmul.f32 %v4381, 0.044715
    %v4400 = vmul.f32 %v4392, %v4199
    %v4401 = vmul.f32 %v4393, %v4225
    %v4402 = vmul.f32 %v4394, %v4251
    %v4403 = vmul.f32 %v4395, %v4277
    %v4404 = vmul.f32 %v4396, %v4303
    %v4405 = vmul.f32 %v4397, %v4329
    %v4406 = vmul.f32 %v4398, %v4355
    %v4407 = vmul.f32 %v4399, %v4381
    %v4408 = vmul.f32 %v4400, %v4199
    %v4409 = vmul.f32 %v4401, %v4225
    %v4410 = vmul.f32 %v4402, %v4251
    %v4411 = vmul.f32 %v4403, %v4277
    %v4412 = vmul.f32 %v4404, %v4303
    %v4413 = vmul.f32 %v4405, %v4329
    %v4414 = vmul.f32 %v4406, %v4355
    %v4415 = vmul.f32 %v4407, %v4381
    %v4416 = vadd.f32 %v4199, %v4408
    %v4417 = vadd.f32 %v4225, %v4409
    %v4418 = vadd.f32 %v4251, %v4410
    %v4419 = vadd.f32 %v4277, %v4411
    %v4420 = vadd.f32 %v4303, %v4412
    %v4421 = vadd.f32 %v4329, %v4413
    %v4422 = vadd.f32 %v4355, %v4414
    %v4423 = vadd.f32 %v4381, %v4415
    %v4424 = vmul.f32 %v4416, 0.7978846
    %v4425 = vmul.f32 %v4417, 0.7978846
    %v4426 = vmul.f32 %v4418, 0.7978846
    %v4427 = vmul.f32 %v4419, 0.7978846
    %v4428 = vmul.f32 %v4420, 0.7978846
    %v4429 = vmul.f32 %v4421, 0.7978846
    %v4430 = vmul.f32 %v4422, 0.7978846
    %v4431 = vmul.f32 %v4423, 0.7978846
    %v4432 = vtanh.pop %v4424
    %v4433 = vtanh.pop %v4425
    %v4434 = vtanh.pop %v4426
    %v4435 = vtanh.pop %v4427
    %v4436 = vtanh.pop %v4428
    %v4437 = vtanh.pop %v4429
    %v4438 = vtanh.pop %v4430
    %v4439 = vtanh.pop %v4431
    %v4440 = vadd.f32 %v4432, 1.0
    %v4441 = vadd.f32 %v4433, 1.0
    %v4442 = vadd.f32 %v4434, 1.0
    %v4443 = vadd.f32 %v4435, 1.0
    %v4444 = vadd.f32 %v4436, 1.0
    %v4445 = vadd.f32 %v4437, 1.0
    %v4446 = vadd.f32 %v4438, 1.0
    %v4447 = vadd.f32 %v4439, 1.0
    %v4448 = vmul.f32 %v4384, %v4440
    %v4449 = vmul.f32 %v4385, %v4441
    %v4450 = vmul.f32 %v4386, %v4442
    %v4451 = vmul.f32 %v4387, %v4443
    %v4452 = vmul.f32 %v4388, %v4444
    %v4453 = vmul.f32 %v4389, %v4445
    %v4454 = vmul.f32 %v4390, %v4446
    %v4455 = vmul.f32 %v4391, %v4447
    %v4456 = vpack.c.bf16 %v4448, %v4448
    %v4457 = vpack.c.bf16 %v4449, %v4449
    %v4458 = vpack.c.bf16 %v4450, %v4450
    %v4459 = vpack.c.bf16 %v4451, %v4451
    %v4460 = vpack.c.bf16 %v4452, %v4452
    %v4461 = vpack.c.bf16 %v4453, %v4453
    %v4462 = vpack.c.bf16 %v4454, %v4454
    %v4463 = vpack.c.bf16 %v4455, %v4455
    %v4464 = vld [vmem:[#allocation8 + $0x790] sm:$0xff]
    %v4465 = vld [vmem:[#allocation8 + $0x798] sm:$0xff]
    %v4466 = vld [vmem:[#allocation8 + $0x7a0] sm:$0xff]
    %v4467 = vld [vmem:[#allocation8 + $0x7a8] sm:$0xff]
    %v4468 = vld [vmem:[#allocation8 + $0x7b0] sm:$0xff]
    %v4469 = vld [vmem:[#allocation8 + $0x7b8] sm:$0xff]
    %v4470 = vld [vmem:[#allocation8 + $0x7c0] sm:$0xff]
    %v4471 = vld [vmem:[#allocation8 + $0x7c8] sm:$0xff]
    %v4472 = vld [vmem:[#allocation8 + $0x7d0] sm:$0xff]
    %v4473 = vld [vmem:[#allocation8 + $0x7d8] sm:$0xff]
    %v4474 = vld [vmem:[#allocation8 + $0x7e0] sm:$0xff]
    %v4475 = vld [vmem:[#allocation8 + $0x7e8] sm:$0xff]
    %v4476 = vld [vmem:[#allocation8 + $0x7f0] sm:$0xff]
    %v4477 = vld [vmem:[#allocation8 + $0x7f8] sm:$0xff]
    %v4478 = vld [vmem:[#allocation8 + $0x800] sm:$0xff]
    %v4479 = vld [vmem:[#allocation8 + $0x808] sm:$0xff]
    %v4480 = vld [vmem:[#allocation8 + $0x810] sm:$0xff]
    %v4481 = vld [vmem:[#allocation8 + $0x818] sm:$0xff]
    %v4482 = vld [vmem:[#allocation8 + $0x820] sm:$0xff]
    %v4483 = vld [vmem:[#allocation8 + $0x828] sm:$0xff]
    %v4484 = vld [vmem:[#allocation8 + $0x830] sm:$0xff]
    %v4485 = vld [vmem:[#allocation8 + $0x838] sm:$0xff]
    %v4486 = vld [vmem:[#allocation8 + $0x840] sm:$0xff]
    %v4487 = vld [vmem:[#allocation8 + $0x848] sm:$0xff]
    %v4488 = vld [vmem:[#allocation8 + $0x850] sm:$0xff]
    %v4489 = vld [vmem:[#allocation8 + $0x858] sm:$0xff]
    %v4490 = vld [vmem:[#allocation8 + $0x860] sm:$0xff]
    %v4491 = vld [vmem:[#allocation8 + $0x868] sm:$0xff]
    %v4492 = vld [vmem:[#allocation8 + $0x870] sm:$0xff]
    %v4493 = vld [vmem:[#allocation8 + $0x878] sm:$0xff]
    %v4494 = vld [vmem:[#allocation8 + $0x880] sm:$0xff]
    %v4495 = vld [vmem:[#allocation8 + $0x888] sm:$0xff]
    %v4496 = vld [vmem:[#allocation8 + $0x890] sm:$0xff]
    %v4497 = vld [vmem:[#allocation8 + $0x898] sm:$0xff]
    %v4498 = vld [vmem:[#allocation8 + $0x8a0] sm:$0xff]
    %v4499 = vld [vmem:[#allocation8 + $0x8a8] sm:$0xff]
    %v4500 = vld [vmem:[#allocation8 + $0x8b0] sm:$0xff]
    %v4501 = vld [vmem:[#allocation8 + $0x8b8] sm:$0xff]
    %v4502 = vld [vmem:[#allocation8 + $0x8c0] sm:$0xff]
    %v4503 = vld [vmem:[#allocation8 + $0x8c8] sm:$0xff]
    %v4504 = vld [vmem:[#allocation8 + $0x8d0] sm:$0xff]
    %v4505 = vld [vmem:[#allocation8 + $0x8d8] sm:$0xff]
    %v4506 = vld [vmem:[#allocation8 + $0x8e0] sm:$0xff]
    %v4507 = vld [vmem:[#allocation8 + $0x8e8] sm:$0xff]
    %v4508 = vld [vmem:[#allocation8 + $0x8f0] sm:$0xff]
    %v4509 = vld [vmem:[#allocation8 + $0x8f8] sm:$0xff]
    %v4510 = vld [vmem:[#allocation8 + $0x900] sm:$0xff]
    %v4511 = vld [vmem:[#allocation8 + $0x908] sm:$0xff]
    %v4512 = vld [vmem:[#allocation8 + $0x910] sm:$0xff]
    %v4513 = vld [vmem:[#allocation8 + $0x918] sm:$0xff]
    %v4514 = vld [vmem:[#allocation8 + $0x920] sm:$0xff]
    %v4515 = vld [vmem:[#allocation8 + $0x928] sm:$0xff]
    %v4516 = vld [vmem:[#allocation8 + $0x930] sm:$0xff]
    %v4517 = vld [vmem:[#allocation8 + $0x938] sm:$0xff]
    %v4518 = vld [vmem:[#allocation8 + $0x940] sm:$0xff]
    %v4519 = vld [vmem:[#allocation8 + $0x948] sm:$0xff]
    %v4520 = vld [vmem:[#allocation8 + $0x950] sm:$0xff]
    %v4521 = vld [vmem:[#allocation8 + $0x958] sm:$0xff]
    %v4522 = vld [vmem:[#allocation8 + $0x960] sm:$0xff]
    %v4523 = vld [vmem:[#allocation8 + $0x968] sm:$0xff]
    %v4524 = vld [vmem:[#allocation8 + $0x970] sm:$0xff]
    %v4525 = vld [vmem:[#allocation8 + $0x978] sm:$0xff]
    %v4526 = vld [vmem:[#allocation8 + $0x980] sm:$0xff]
    %v4527 = vld [vmem:[#allocation8 + $0x988] sm:$0xff]
    %v4528 = vld [vmem:[#allocation8 + $0x990] sm:$0xff]
    %v4529 = vld [vmem:[#allocation8 + $0x998] sm:$0xff]
    %v4530 = vld [vmem:[#allocation8 + $0x9a0] sm:$0xff]
    %v4531 = vld [vmem:[#allocation8 + $0x9a8] sm:$0xff]
    %v4532 = vld [vmem:[#allocation8 + $0x9b0] sm:$0xff]
    %v4533 = vld [vmem:[#allocation8 + $0x9b8] sm:$0xff]
    %v4534 = vld [vmem:[#allocation8 + $0x9c0] sm:$0xff]
    %v4535 = vld [vmem:[#allocation8 + $0x9c8] sm:$0xff]
    %v4536 = vld [vmem:[#allocation8 + $0x9d0] sm:$0xff]
    %v4537 = vld [vmem:[#allocation8 + $0x9d8] sm:$0xff]
    %v4538 = vld [vmem:[#allocation8 + $0x9e0] sm:$0xff]
    %v4539 = vld [vmem:[#allocation8 + $0x9e8] sm:$0xff]
    %v4540 = vld [vmem:[#allocation8 + $0x9f0] sm:$0xff]
    %v4541 = vld [vmem:[#allocation8 + $0x9f8] sm:$0xff]
    %v4542 = vld [vmem:[#allocation8 + $0xa00] sm:$0xff]
    %v4543 = vld [vmem:[#allocation8 + $0xa08] sm:$0xff]
    %v4544 = vld [vmem:[#allocation8 + $0xa10] sm:$0xff]
    %v4545 = vld [vmem:[#allocation8 + $0xa18] sm:$0xff]
    %v4546 = vld [vmem:[#allocation8 + $0xa20] sm:$0xff]
    %v4547 = vld [vmem:[#allocation8 + $0xa28] sm:$0xff]
    %v4548 = vld [vmem:[#allocation8 + $0xa30] sm:$0xff]
    %v4549 = vld [vmem:[#allocation8 + $0xa38] sm:$0xff]
    %v4550 = vld [vmem:[#allocation8 + $0xa40] sm:$0xff]
    %v4551 = vld [vmem:[#allocation8 + $0xa48] sm:$0xff]
    %v4552 = vld [vmem:[#allocation8 + $0xa50] sm:$0xff]
    %v4553 = vld [vmem:[#allocation8 + $0xa58] sm:$0xff]
    %v4554 = vld [vmem:[#allocation8 + $0xa60] sm:$0xff]
    %v4555 = vld [vmem:[#allocation8 + $0xa68] sm:$0xff]
    %v4556 = vld [vmem:[#allocation8 + $0xa70] sm:$0xff]
    %v4557 = vld [vmem:[#allocation8 + $0xa78] sm:$0xff]
    %v4558 = vld [vmem:[#allocation8 + $0xa80] sm:$0xff]
    %v4559 = vld [vmem:[#allocation8 + $0xa88] sm:$0xff]
    %v4560 = vld [vmem:[#allocation8 + $0xa90] sm:$0xff]
    %v4561 = vld [vmem:[#allocation8 + $0xa98] sm:$0xff]
    %v4562 = vld [vmem:[#allocation8 + $0xaa0] sm:$0xff]
    %v4563 = vld [vmem:[#allocation8 + $0xaa8] sm:$0xff]
    %v4564 = vld [vmem:[#allocation8 + $0xab0] sm:$0xff]
    %v4565 = vld [vmem:[#allocation8 + $0xab8] sm:$0xff]
    %v4566 = vld [vmem:[#allocation8 + $0xac0] sm:$0xff]
    %v4567 = vld [vmem:[#allocation8 + $0xac8] sm:$0xff]
    %v4568 = vld [vmem:[#allocation8 + $0xad0] sm:$0xff]
    %v4569 = vld [vmem:[#allocation8 + $0xad8] sm:$0xff]
    %v4570 = vld [vmem:[#allocation8 + $0xae0] sm:$0xff]
    %v4571 = vld [vmem:[#allocation8 + $0xae8] sm:$0xff]
    %v4572 = vld [vmem:[#allocation8 + $0xaf0] sm:$0xff]
    %v4573 = vld [vmem:[#allocation8 + $0xaf8] sm:$0xff]
    %v4574 = vld [vmem:[#allocation8 + $0xb00] sm:$0xff]
    %v4575 = vld [vmem:[#allocation8 + $0xb08] sm:$0xff]
    %v4576 = vld [vmem:[#allocation8 + $0xb10] sm:$0xff]
    %v4577 = vld [vmem:[#allocation8 + $0xb18] sm:$0xff]
    %v4578 = vld [vmem:[#allocation8 + $0xb20] sm:$0xff]
    %v4579 = vld [vmem:[#allocation8 + $0xb28] sm:$0xff]
    %v4580 = vld [vmem:[#allocation8 + $0xb30] sm:$0xff]
    %v4581 = vld [vmem:[#allocation8 + $0xb38] sm:$0xff]
    %v4582 = vld [vmem:[#allocation8 + $0xb40] sm:$0xff]
    %v4583 = vld [vmem:[#allocation8 + $0xb48] sm:$0xff]
    %v4584 = vld [vmem:[#allocation8 + $0xb50] sm:$0xff]
    %v4585 = vld [vmem:[#allocation8 + $0xb58] sm:$0xff]
    %v4586 = vld [vmem:[#allocation8 + $0xb60] sm:$0xff]
    %v4587 = vld [vmem:[#allocation8 + $0xb68] sm:$0xff]
    %v4588 = vld [vmem:[#allocation8 + $0xb70] sm:$0xff]
    %v4589 = vld [vmem:[#allocation8 + $0xb78] sm:$0xff]
    %v4590 = vld [vmem:[#allocation8 + $0xb80] sm:$0xff]
    %v4591 = vld [vmem:[#allocation8 + $0xb88] sm:$0xff]
    %s4592 = scalar_lea.vmem [#allocation5], 131
    %v4593 = vld [vmem:[%s4592] ss:$8 sm:$0x3]
    %v4595 = vperm.slane %v4593, 0
    %v4596 = vperm.slane %v4593, 1
    %v4727 = vunpack.c.l.b16 %v4464
    %v4728 = vunpack.c.h.b16 %v4464
    %v4729 = vunpack.c.l.b16 %v4465
    %v4730 = vunpack.c.h.b16 %v4465
    %v4731 = vunpack.c.l.b16 %v4466
    %v4732 = vunpack.c.h.b16 %v4466
    %v4733 = vunpack.c.l.b16 %v4467
    %v4734 = vunpack.c.h.b16 %v4467
    %v4735 = vunpack.c.l.b16 %v4468
    %v4736 = vunpack.c.h.b16 %v4468
    %v4737 = vunpack.c.l.b16 %v4469
    %v4738 = vunpack.c.h.b16 %v4469
    %v4739 = vunpack.c.l.b16 %v4470
    %v4740 = vunpack.c.h.b16 %v4470
    %v4741 = vunpack.c.l.b16 %v4471
    %v4742 = vunpack.c.h.b16 %v4471
    %v4743 = vunpack.c.l.b16 %v4472
    %v4744 = vunpack.c.h.b16 %v4472
    %v4745 = vunpack.c.l.b16 %v4473
    %v4746 = vunpack.c.h.b16 %v4473
    %v4747 = vunpack.c.l.b16 %v4474
    %v4748 = vunpack.c.h.b16 %v4474
    %v4749 = vunpack.c.l.b16 %v4475
    %v4750 = vunpack.c.h.b16 %v4475
    %v4751 = vunpack.c.l.b16 %v4476
    %v4752 = vunpack.c.h.b16 %v4476
    %v4753 = vunpack.c.l.b16 %v4477
    %v4754 = vunpack.c.h.b16 %v4477
    %v4755 = vunpack.c.l.b16 %v4478
    %v4756 = vunpack.c.h.b16 %v4478
    %v4757 = vunpack.c.l.b16 %v4479
    %v4758 = vunpack.c.h.b16 %v4479
    %v4759 = vunpack.c.l.b16 %v4480
    %v4760 = vunpack.c.h.b16 %v4480
    %v4761 = vunpack.c.l.b16 %v4481
    %v4762 = vunpack.c.h.b16 %v4481
    %v4763 = vunpack.c.l.b16 %v4482
    %v4764 = vunpack.c.h.b16 %v4482
    %v4765 = vunpack.c.l.b16 %v4483
    %v4766 = vunpack.c.h.b16 %v4483
    %v4767 = vunpack.c.l.b16 %v4484
    %v4768 = vunpack.c.h.b16 %v4484
    %v4769 = vunpack.c.l.b16 %v4485
    %v4770 = vunpack.c.h.b16 %v4485
    %v4771 = vunpack.c.l.b16 %v4486
    %v4772 = vunpack.c.h.b16 %v4486
    %v4773 = vunpack.c.l.b16 %v4487
    %v4774 = vunpack.c.h.b16 %v4487
    %v4775 = vunpack.c.l.b16 %v4488
    %v4776 = vunpack.c.h.b16 %v4488
    %v4777 = vunpack.c.l.b16 %v4489
    %v4778 = vunpack.c.h.b16 %v4489
    %v4779 = vunpack.c.l.b16 %v4490
    %v4780 = vunpack.c.h.b16 %v4490
    %v4781 = vunpack.c.l.b16 %v4491
    %v4782 = vunpack.c.h.b16 %v4491
    %v4783 = vunpack.c.l.b16 %v4492
    %v4784 = vunpack.c.h.b16 %v4492
    %v4785 = vunpack.c.l.b16 %v4493
    %v4786 = vunpack.c.h.b16 %v4493
    %v4787 = vunpack.c.l.b16 %v4494
    %v4788 = vunpack.c.h.b16 %v4494
    %v4789 = vunpack.c.l.b16 %v4495
    %v4790 = vunpack.c.h.b16 %v4495
    %v4791 = vunpack.c.l.b16 %v4496
    %v4792 = vunpack.c.h.b16 %v4496
    %v4793 = vunpack.c.l.b16 %v4497
    %v4794 = vunpack.c.h.b16 %v4497
    %v4795 = vunpack.c.l.b16 %v4498
    %v4796 = vunpack.c.h.b16 %v4498
    %v4797 = vunpack.c.l.b16 %v4499
    %v4798 = vunpack.c.h.b16 %v4499
    %v4799 = vunpack.c.l.b16 %v4500
    %v4800 = vunpack.c.h.b16 %v4500
    %v4801 = vunpack.c.l.b16 %v4501
    %v4802 = vunpack.c.h.b16 %v4501
    %v4803 = vunpack.c.l.b16 %v4502
    %v4804 = vunpack.c.h.b16 %v4502
    %v4805 = vunpack.c.l.b16 %v4503
    %v4806 = vunpack.c.h.b16 %v4503
    %v4807 = vunpack.c.l.b16 %v4504
    %v4808 = vunpack.c.h.b16 %v4504
    %v4809 = vunpack.c.l.b16 %v4505
    %v4810 = vunpack.c.h.b16 %v4505
    %v4811 = vunpack.c.l.b16 %v4506
    %v4812 = vunpack.c.h.b16 %v4506
    %v4813 = vunpack.c.l.b16 %v4507
    %v4814 = vunpack.c.h.b16 %v4507
    %v4815 = vunpack.c.l.b16 %v4508
    %v4816 = vunpack.c.h.b16 %v4508
    %v4817 = vunpack.c.l.b16 %v4509
    %v4818 = vunpack.c.h.b16 %v4509
    %v4819 = vunpack.c.l.b16 %v4510
    %v4820 = vunpack.c.h.b16 %v4510
    %v4821 = vunpack.c.l.b16 %v4511
    %v4822 = vunpack.c.h.b16 %v4511
    %v4823 = vunpack.c.l.b16 %v4512
    %v4824 = vunpack.c.h.b16 %v4512
    %v4825 = vunpack.c.l.b16 %v4513
    %v4826 = vunpack.c.h.b16 %v4513
    %v4827 = vunpack.c.l.b16 %v4514
    %v4828 = vunpack.c.h.b16 %v4514
    %v4829 = vunpack.c.l.b16 %v4515
    %v4830 = vunpack.c.h.b16 %v4515
    %v4831 = vunpack.c.l.b16 %v4516
    %v4832 = vunpack.c.h.b16 %v4516
    %v4833 = vunpack.c.l.b16 %v4517
    %v4834 = vunpack.c.h.b16 %v4517
    %v4835 = vunpack.c.l.b16 %v4518
    %v4836 = vunpack.c.h.b16 %v4518
    %v4837 = vunpack.c.l.b16 %v4519
    %v4838 = vunpack.c.h.b16 %v4519
    %v4839 = vunpack.c.l.b16 %v4520
    %v4840 = vunpack.c.h.b16 %v4520
    %v4841 = vunpack.c.l.b16 %v4521
    %v4842 = vunpack.c.h.b16 %v4521
    %v4843 = vunpack.c.l.b16 %v4522
    %v4844 = vunpack.c.h.b16 %v4522
    %v4845 = vunpack.c.l.b16 %v4523
    %v4846 = vunpack.c.h.b16 %v4523
    %v4847 = vunpack.c.l.b16 %v4524
    %v4848 = vunpack.c.h.b16 %v4524
    %v4849 = vunpack.c.l.b16 %v4525
    %v4850 = vunpack.c.h.b16 %v4525
    %v4851 = vunpack.c.l.b16 %v4526
    %v4852 = vunpack.c.h.b16 %v4526
    %v4853 = vunpack.c.l.b16 %v4527
    %v4854 = vunpack.c.h.b16 %v4527
    %v4855 = vunpack.c.l.b16 %v4528
    %v4856 = vunpack.c.h.b16 %v4528
    %v4857 = vunpack.c.l.b16 %v4529
    %v4858 = vunpack.c.h.b16 %v4529
    %v4859 = vunpack.c.l.b16 %v4530
    %v4860 = vunpack.c.h.b16 %v4530
    %v4861 = vunpack.c.l.b16 %v4531
    %v4862 = vunpack.c.h.b16 %v4531
    %v4863 = vunpack.c.l.b16 %v4532
    %v4864 = vunpack.c.h.b16 %v4532
    %v4865 = vunpack.c.l.b16 %v4533
    %v4866 = vunpack.c.h.b16 %v4533
    %v4867 = vunpack.c.l.b16 %v4534
    %v4868 = vunpack.c.h.b16 %v4534
    %v4869 = vunpack.c.l.b16 %v4535
    %v4870 = vunpack.c.h.b16 %v4535
    %v4871 = vunpack.c.l.b16 %v4536
    %v4872 = vunpack.c.h.b16 %v4536
    %v4873 = vunpack.c.l.b16 %v4537
    %v4874 = vunpack.c.h.b16 %v4537
    %v4875 = vunpack.c.l.b16 %v4538
    %v4876 = vunpack.c.h.b16 %v4538
    %v4877 = vunpack.c.l.b16 %v4539
    %v4878 = vunpack.c.h.b16 %v4539
    %v4879 = vunpack.c.l.b16 %v4540
    %v4880 = vunpack.c.h.b16 %v4540
    %v4881 = vunpack.c.l.b16 %v4541
    %v4882 = vunpack.c.h.b16 %v4541
    %v4883 = vunpack.c.l.b16 %v4542
    %v4884 = vunpack.c.h.b16 %v4542
    %v4885 = vunpack.c.l.b16 %v4543
    %v4886 = vunpack.c.h.b16 %v4543
    %v4887 = vunpack.c.l.b16 %v4544
    %v4888 = vunpack.c.h.b16 %v4544
    %v4889 = vunpack.c.l.b16 %v4545
    %v4890 = vunpack.c.h.b16 %v4545
    %v4891 = vunpack.c.l.b16 %v4546
    %v4892 = vunpack.c.h.b16 %v4546
    %v4893 = vunpack.c.l.b16 %v4547
    %v4894 = vunpack.c.h.b16 %v4547
    %v4895 = vunpack.c.l.b16 %v4548
    %v4896 = vunpack.c.h.b16 %v4548
    %v4897 = vunpack.c.l.b16 %v4549
    %v4898 = vunpack.c.h.b16 %v4549
    %v4899 = vunpack.c.l.b16 %v4550
    %v4900 = vunpack.c.h.b16 %v4550
    %v4901 = vunpack.c.l.b16 %v4551
    %v4902 = vunpack.c.h.b16 %v4551
    %v4903 = vunpack.c.l.b16 %v4552
    %v4904 = vunpack.c.h.b16 %v4552
    %v4905 = vunpack.c.l.b16 %v4553
    %v4906 = vunpack.c.h.b16 %v4553
    %v4907 = vunpack.c.l.b16 %v4554
    %v4908 = vunpack.c.h.b16 %v4554
    %v4909 = vunpack.c.l.b16 %v4555
    %v4910 = vunpack.c.h.b16 %v4555
    %v4911 = vunpack.c.l.b16 %v4556
    %v4912 = vunpack.c.h.b16 %v4556
    %v4913 = vunpack.c.l.b16 %v4557
    %v4914 = vunpack.c.h.b16 %v4557
    %v4915 = vunpack.c.l.b16 %v4558
    %v4916 = vunpack.c.h.b16 %v4558
    %v4917 = vunpack.c.l.b16 %v4559
    %v4918 = vunpack.c.h.b16 %v4559
    %v4919 = vunpack.c.l.b16 %v4560
    %v4920 = vunpack.c.h.b16 %v4560
    %v4921 = vunpack.c.l.b16 %v4561
    %v4922 = vunpack.c.h.b16 %v4561
    %v4923 = vunpack.c.l.b16 %v4562
    %v4924 = vunpack.c.h.b16 %v4562
    %v4925 = vunpack.c.l.b16 %v4563
    %v4926 = vunpack.c.h.b16 %v4563
    %v4927 = vunpack.c.l.b16 %v4564
    %v4928 = vunpack.c.h.b16 %v4564
    %v4929 = vunpack.c.l.b16 %v4565
    %v4930 = vunpack.c.h.b16 %v4565
    %v4931 = vunpack.c.l.b16 %v4566
    %v4932 = vunpack.c.h.b16 %v4566
    %v4933 = vunpack.c.l.b16 %v4567
    %v4934 = vunpack.c.h.b16 %v4567
    %v4935 = vunpack.c.l.b16 %v4568
    %v4936 = vunpack.c.h.b16 %v4568
    %v4937 = vunpack.c.l.b16 %v4569
    %v4938 = vunpack.c.h.b16 %v4569
    %v4939 = vunpack.c.l.b16 %v4570
    %v4940 = vunpack.c.h.b16 %v4570
    %v4941 = vunpack.c.l.b16 %v4571
    %v4942 = vunpack.c.h.b16 %v4571
    %v4943 = vunpack.c.l.b16 %v4572
    %v4944 = vunpack.c.h.b16 %v4572
    %v4945 = vunpack.c.l.b16 %v4573
    %v4946 = vunpack.c.h.b16 %v4573
    %v4947 = vunpack.c.l.b16 %v4574
    %v4948 = vunpack.c.h.b16 %v4574
    %v4949 = vunpack.c.l.b16 %v4575
    %v4950 = vunpack.c.h.b16 %v4575
    %v4951 = vunpack.c.l.b16 %v4576
    %v4952 = vunpack.c.h.b16 %v4576
    %v4953 = vunpack.c.l.b16 %v4577
    %v4954 = vunpack.c.h.b16 %v4577
    %v4955 = vunpack.c.l.b16 %v4578
    %v4956 = vunpack.c.h.b16 %v4578
    %v4957 = vunpack.c.l.b16 %v4579
    %v4958 = vunpack.c.h.b16 %v4579
    %v4959 = vunpack.c.l.b16 %v4580
    %v4960 = vunpack.c.h.b16 %v4580
    %v4961 = vunpack.c.l.b16 %v4581
    %v4962 = vunpack.c.h.b16 %v4581
    %v4963 = vunpack.c.l.b16 %v4582
    %v4964 = vunpack.c.h.b16 %v4582
    %v4965 = vunpack.c.l.b16 %v4583
    %v4966 = vunpack.c.h.b16 %v4583
    %v4967 = vunpack.c.l.b16 %v4584
    %v4968 = vunpack.c.h.b16 %v4584
    %v4969 = vunpack.c.l.b16 %v4585
    %v4970 = vunpack.c.h.b16 %v4585
    %v4971 = vunpack.c.l.b16 %v4586
    %v4972 = vunpack.c.h.b16 %v4586
    %v4973 = vunpack.c.l.b16 %v4587
    %v4974 = vunpack.c.h.b16 %v4587
    %v4975 = vunpack.c.l.b16 %v4588
    %v4976 = vunpack.c.h.b16 %v4588
    %v4977 = vunpack.c.l.b16 %v4589
    %v4978 = vunpack.c.h.b16 %v4589
    %v4979 = vunpack.c.l.b16 %v4590
    %v4980 = vunpack.c.h.b16 %v4590
    %v4981 = vunpack.c.l.b16 %v4591
    %v4982 = vunpack.c.h.b16 %v4591
    %v4983 = vpack.c.b16 %v4729, %v4727
    %v4984 = vpack.c.b16 %v4730, %v4728
    %v4985 = vpack.c.b16 %v4733, %v4731
    %v4986 = vpack.c.b16 %v4734, %v4732
    %v4987 = vpack.c.b16 %v4737, %v4735
    %v4988 = vpack.c.b16 %v4738, %v4736
    %v4989 = vpack.c.b16 %v4741, %v4739
    %v4990 = vpack.c.b16 %v4742, %v4740
    %v4991 = vpack.c.b16 %v4745, %v4743
    %v4992 = vpack.c.b16 %v4746, %v4744
    %v4993 = vpack.c.b16 %v4749, %v4747
    %v4994 = vpack.c.b16 %v4750, %v4748
    %v4995 = vpack.c.b16 %v4753, %v4751
    %v4996 = vpack.c.b16 %v4754, %v4752
    %v4997 = vpack.c.b16 %v4757, %v4755
    %v4998 = vpack.c.b16 %v4758, %v4756
    %v4999 = vpack.c.b16 %v4761, %v4759
    %v5000 = vpack.c.b16 %v4762, %v4760
    %v5001 = vpack.c.b16 %v4765, %v4763
    %v5002 = vpack.c.b16 %v4766, %v4764
    %v5003 = vpack.c.b16 %v4769, %v4767
    %v5004 = vpack.c.b16 %v4770, %v4768
    %v5005 = vpack.c.b16 %v4773, %v4771
    %v5006 = vpack.c.b16 %v4774, %v4772
    %v5007 = vpack.c.b16 %v4777, %v4775
    %v5008 = vpack.c.b16 %v4778, %v4776
    %v5009 = vpack.c.b16 %v4781, %v4779
    %v5010 = vpack.c.b16 %v4782, %v4780
    %v5011 = vpack.c.b16 %v4785, %v4783
    %v5012 = vpack.c.b16 %v4786, %v4784
    %v5013 = vpack.c.b16 %v4789, %v4787
    %v5014 = vpack.c.b16 %v4790, %v4788
    %v5015 = vpack.c.b16 %v4793, %v4791
    %v5016 = vpack.c.b16 %v4794, %v4792
    %v5017 = vpack.c.b16 %v4797, %v4795
    %v5018 = vpack.c.b16 %v4798, %v4796
    %v5019 = vpack.c.b16 %v4801, %v4799
    %v5020 = vpack.c.b16 %v4802, %v4800
    %v5021 = vpack.c.b16 %v4805, %v4803
    %v5022 = vpack.c.b16 %v4806, %v4804
    %v5023 = vpack.c.b16 %v4809, %v4807
    %v5024 = vpack.c.b16 %v4810, %v4808
    %v5025 = vpack.c.b16 %v4813, %v4811
    %v5026 = vpack.c.b16 %v4814, %v4812
    %v5027 = vpack.c.b16 %v4817, %v4815
    %v5028 = vpack.c.b16 %v4818, %v4816
    %v5029 = vpack.c.b16 %v4821, %v4819
    %v5030 = vpack.c.b16 %v4822, %v4820
    %v5031 = vpack.c.b16 %v4825, %v4823
    %v5032 = vpack.c.b16 %v4826, %v4824
    %v5033 = vpack.c.b16 %v4829, %v4827
    %v5034 = vpack.c.b16 %v4830, %v4828
    %v5035 = vpack.c.b16 %v4833, %v4831
    %v5036 = vpack.c.b16 %v4834, %v4832
    %v5037 = vpack.c.b16 %v4837, %v4835
    %v5038 = vpack.c.b16 %v4838, %v4836
    %v5039 = vpack.c.b16 %v4841, %v4839
    %v5040 = vpack.c.b16 %v4842, %v4840
    %v5041 = vpack.c.b16 %v4845, %v4843
    %v5042 = vpack.c.b16 %v4846, %v4844
    %v5043 = vpack.c.b16 %v4849, %v4847
    %v5044 = vpack.c.b16 %v4850, %v4848
    %v5045 = vpack.c.b16 %v4853, %v4851
    %v5046 = vpack.c.b16 %v4854, %v4852
    %v5047 = vpack.c.b16 %v4857, %v4855
    %v5048 = vpack.c.b16 %v4858, %v4856
    %v5049 = vpack.c.b16 %v4861, %v4859
    %v5050 = vpack.c.b16 %v4862, %v4860
    %v5051 = vpack.c.b16 %v4865, %v4863
    %v5052 = vpack.c.b16 %v4866, %v4864
    %v5053 = vpack.c.b16 %v4869, %v4867
    %v5054 = vpack.c.b16 %v4870, %v4868
    %v5055 = vpack.c.b16 %v4873, %v4871
    %v5056 = vpack.c.b16 %v4874, %v4872
    %v5057 = vpack.c.b16 %v4877, %v4875
    %v5058 = vpack.c.b16 %v4878, %v4876
    %v5059 = vpack.c.b16 %v4881, %v4879
    %v5060 = vpack.c.b16 %v4882, %v4880
    %v5061 = vpack.c.b16 %v4885, %v4883
    %v5062 = vpack.c.b16 %v4886, %v4884
    %v5063 = vpack.c.b16 %v4889, %v4887
    %v5064 = vpack.c.b16 %v4890, %v4888
    %v5065 = vpack.c.b16 %v4893, %v4891
    %v5066 = vpack.c.b16 %v4894, %v4892
    %v5067 = vpack.c.b16 %v4897, %v4895
    %v5068 = vpack.c.b16 %v4898, %v4896
    %v5069 = vpack.c.b16 %v4901, %v4899
    %v5070 = vpack.c.b16 %v4902, %v4900
    %v5071 = vpack.c.b16 %v4905, %v4903
    %v5072 = vpack.c.b16 %v4906, %v4904
    %v5073 = vpack.c.b16 %v4909, %v4907
    %v5074 = vpack.c.b16 %v4910, %v4908
    %v5075 = vpack.c.b16 %v4913, %v4911
    %v5076 = vpack.c.b16 %v4914, %v4912
    %v5077 = vpack.c.b16 %v4917, %v4915
    %v5078 = vpack.c.b16 %v4918, %v4916
    %v5079 = vpack.c.b16 %v4921, %v4919
    %v5080 = vpack.c.b16 %v4922, %v4920
    %v5081 = vpack.c.b16 %v4925, %v4923
    %v5082 = vpack.c.b16 %v4926, %v4924
    %v5083 = vpack.c.b16 %v4929, %v4927
    %v5084 = vpack.c.b16 %v4930, %v4928
    %v5085 = vpack.c.b16 %v4933, %v4931
    %v5086 = vpack.c.b16 %v4934, %v4932
    %v5087 = vpack.c.b16 %v4937, %v4935
    %v5088 = vpack.c.b16 %v4938, %v4936
    %v5089 = vpack.c.b16 %v4941, %v4939
    %v5090 = vpack.c.b16 %v4942, %v4940
    %v5091 = vpack.c.b16 %v4945, %v4943
    %v5092 = vpack.c.b16 %v4946, %v4944
    %v5093 = vpack.c.b16 %v4949, %v4947
    %v5094 = vpack.c.b16 %v4950, %v4948
    %v5095 = vpack.c.b16 %v4953, %v4951
    %v5096 = vpack.c.b16 %v4954, %v4952
    %v5097 = vpack.c.b16 %v4957, %v4955
    %v5098 = vpack.c.b16 %v4958, %v4956
    %v5099 = vpack.c.b16 %v4961, %v4959
    %v5100 = vpack.c.b16 %v4962, %v4960
    %v5101 = vpack.c.b16 %v4965, %v4963
    %v5102 = vpack.c.b16 %v4966, %v4964
    %v5103 = vpack.c.b16 %v4969, %v4967
    %v5104 = vpack.c.b16 %v4970, %v4968
    %v5105 = vpack.c.b16 %v4973, %v4971
    %v5106 = vpack.c.b16 %v4974, %v4972
    %v5107 = vpack.c.b16 %v4977, %v4975
    %v5108 = vpack.c.b16 %v4978, %v4976
    %v5109 = vpack.c.b16 %v4981, %v4979
    %v5110 = vpack.c.b16 %v4982, %v4980
    %5239 = vmatpush.bf16.msra.mxu0 %v4997
    %5240 = vmatpush.bf16.msra.mxu0 %v4995
    %5241 = vmatpush.bf16.msra.mxu0 %v4993
    %5242 = vmatpush.bf16.msra.mxu0 %v4991
    %5243 = vmatpush.bf16.msra.mxu0 %v4989
    %5244 = vmatpush.bf16.msra.mxu0 %v4987
    %5245 = vmatpush.bf16.msra.mxu0 %v4985
    %5246 = vmatpush.bf16.msra.mxu0 %v4983
    %5247 = vmatmul.bf16.gmra.mxu0 %v4456
    %v5248 = vpop.f32.mrf.mxu0
    %v5249 = vadd.f32 %v4595, %v5248
    %v5250 = vpop.f32.mrf.mxu0
    %5251 = vdwg.mxu0
    %5252 = vmatpush.bf16.msra.mxu0 %v5013
    %5253 = vmatpush.bf16.msra.mxu0 %v5011
    %5254 = vmatpush.bf16.msra.mxu0 %v5009
    %5255 = vmatpush.bf16.msra.mxu0 %v5007
    %5256 = vmatpush.bf16.msra.mxu0 %v5005
    %5257 = vmatpush.bf16.msra.mxu0 %v5003
    %5258 = vmatpush.bf16.msra.mxu0 %v5001
    %5259 = vmatpush.bf16.msra.mxu0 %v4999
    %5260 = vmatmul.bf16.gmra.mxu0 %v4457
    %v5261 = vpop.f32.mrf.mxu0
    %v5262 = vadd.f32 %v5249, %v5261
    %v5263 = vpop.f32.mrf.mxu0
    %5264 = vdwg.mxu0
    %5265 = vmatpush.bf16.msra.mxu0 %v5029
    %5266 = vmatpush.bf16.msra.mxu0 %v5027
    %5267 = vmatpush.bf16.msra.mxu0 %v5025
    %5268 = vmatpush.bf16.msra.mxu0 %v5023
    %5269 = vmatpush.bf16.msra.mxu0 %v5021
    %5270 = vmatpush.bf16.msra.mxu0 %v5019
    %5271 = vmatpush.bf16.msra.mxu0 %v5017
    %5272 = vmatpush.bf16.msra.mxu0 %v5015
    %5273 = vmatmul.bf16.gmra.mxu0 %v4458
    %v5274 = vpop.f32.mrf.mxu0
    %v5275 = vadd.f32 %v5262, %v5274
    %v5276 = vpop.f32.mrf.mxu0
    %5277 = vdwg.mxu0
    %5278 = vmatpush.bf16.msra.mxu0 %v5045
    %5279 = vmatpush.bf16.msra.mxu0 %v5043
    %5280 = vmatpush.bf16.msra.mxu0 %v5041
    %5281 = vmatpush.bf16.msra.mxu0 %v5039
    %5282 = vmatpush.bf16.msra.mxu0 %v5037
    %5283 = vmatpush.bf16.msra.mxu0 %v5035
    %5284 = vmatpush.bf16.msra.mxu0 %v5033
    %5285 = vmatpush.bf16.msra.mxu0 %v5031
    %5286 = vmatmul.bf16.gmra.mxu0 %v4459
    %v5287 = vpop.f32.mrf.mxu0
    %v5288 = vadd.f32 %v5275, %v5287
    %v5289 = vpop.f32.mrf.mxu0
    %5290 = vdwg.mxu0
    %5291 = vmatpush.bf16.msra.mxu0 %v5061
    %5292 = vmatpush.bf16.msra.mxu0 %v5059
    %5293 = vmatpush.bf16.msra.mxu0 %v5057
    %5294 = vmatpush.bf16.msra.mxu0 %v5055
    %5295 = vmatpush.bf16.msra.mxu0 %v5053
    %5296 = vmatpush.bf16.msra.mxu0 %v5051
    %5297 = vmatpush.bf16.msra.mxu0 %v5049
    %5298 = vmatpush.bf16.msra.mxu0 %v5047
    %5299 = vmatmul.bf16.gmra.mxu0 %v4460
    %v5300 = vpop.f32.mrf.mxu0
    %v5301 = vadd.f32 %v5288, %v5300
    %v5302 = vpop.f32.mrf.mxu0
    %5303 = vdwg.mxu0
    %5304 = vmatpush.bf16.msra.mxu0 %v5077
    %5305 = vmatpush.bf16.msra.mxu0 %v5075
    %5306 = vmatpush.bf16.msra.mxu0 %v5073
    %5307 = vmatpush.bf16.msra.mxu0 %v5071
    %5308 = vmatpush.bf16.msra.mxu0 %v5069
    %5309 = vmatpush.bf16.msra.mxu0 %v5067
    %5310 = vmatpush.bf16.msra.mxu0 %v5065
    %5311 = vmatpush.bf16.msra.mxu0 %v5063
    %5312 = vmatmul.bf16.gmra.mxu0 %v4461
    %v5313 = vpop.f32.mrf.mxu0
    %v5314 = vadd.f32 %v5301, %v5313
    %v5315 = vpop.f32.mrf.mxu0
    %5316 = vdwg.mxu0
    %5317 = vmatpush.bf16.msra.mxu0 %v5093
    %5318 = vmatpush.bf16.msra.mxu0 %v5091
    %5319 = vmatpush.bf16.msra.mxu0 %v5089
    %5320 = vmatpush.bf16.msra.mxu0 %v5087
    %5321 = vmatpush.bf16.msra.mxu0 %v5085
    %5322 = vmatpush.bf16.msra.mxu0 %v5083
    %5323 = vmatpush.bf16.msra.mxu0 %v5081
    %5324 = vmatpush.bf16.msra.mxu0 %v5079
    %5325 = vmatmul.bf16.gmra.mxu0 %v4462
    %v5326 = vpop.f32.mrf.mxu0
    %v5327 = vadd.f32 %v5314, %v5326
    %v5328 = vpop.f32.mrf.mxu0
    %5329 = vdwg.mxu0
    %5330 = vmatpush.bf16.msra.mxu0 %v5109
    %5331 = vmatpush.bf16.msra.mxu0 %v5107
    %5332 = vmatpush.bf16.msra.mxu0 %v5105
    %5333 = vmatpush.bf16.msra.mxu0 %v5103
    %5334 = vmatpush.bf16.msra.mxu0 %v5101
    %5335 = vmatpush.bf16.msra.mxu0 %v5099
    %5336 = vmatpush.bf16.msra.mxu0 %v5097
    %5337 = vmatpush.bf16.msra.mxu0 %v5095
    %5338 = vmatmul.bf16.gmra.mxu0 %v4463
    %v5339 = vpop.f32.mrf.mxu0
    %v5340 = vadd.f32 %v5327, %v5339
    %v5341 = vpop.f32.mrf.mxu0
    %5342 = vdwg.mxu0
    %5343 = vmatpush.bf16.msra.mxu0 %v4998
    %5344 = vmatpush.bf16.msra.mxu0 %v4996
    %5345 = vmatpush.bf16.msra.mxu0 %v4994
    %5346 = vmatpush.bf16.msra.mxu0 %v4992
    %5347 = vmatpush.bf16.msra.mxu0 %v4990
    %5348 = vmatpush.bf16.msra.mxu0 %v4988
    %5349 = vmatpush.bf16.msra.mxu0 %v4986
    %5350 = vmatpush.bf16.msra.mxu0 %v4984
    %5351 = vmatmul.bf16.gmra.mxu0 %v4456
    %v5352 = vpop.f32.mrf.mxu0
    %v5353 = vadd.f32 %v4596, %v5352
    %v5354 = vpop.f32.mrf.mxu0
    %5355 = vdwg.mxu0
    %5356 = vmatpush.bf16.msra.mxu0 %v5014
    %5357 = vmatpush.bf16.msra.mxu0 %v5012
    %5358 = vmatpush.bf16.msra.mxu0 %v5010
    %5359 = vmatpush.bf16.msra.mxu0 %v5008
    %5360 = vmatpush.bf16.msra.mxu0 %v5006
    %5361 = vmatpush.bf16.msra.mxu0 %v5004
    %5362 = vmatpush.bf16.msra.mxu0 %v5002
    %5363 = vmatpush.bf16.msra.mxu0 %v5000
    %5364 = vmatmul.bf16.gmra.mxu0 %v4457
    %v5365 = vpop.f32.mrf.mxu0
    %v5366 = vadd.f32 %v5353, %v5365
    %v5367 = vpop.f32.mrf.mxu0
    %5368 = vdwg.mxu0
    %5369 = vmatpush.bf16.msra.mxu0 %v5030
    %5370 = vmatpush.bf16.msra.mxu0 %v5028
    %5371 = vmatpush.bf16.msra.mxu0 %v5026
    %5372 = vmatpush.bf16.msra.mxu0 %v5024
    %5373 = vmatpush.bf16.msra.mxu0 %v5022
    %5374 = vmatpush.bf16.msra.mxu0 %v5020
    %5375 = vmatpush.bf16.msra.mxu0 %v5018
    %5376 = vmatpush.bf16.msra.mxu0 %v5016
    %5377 = vmatmul.bf16.gmra.mxu0 %v4458
    %v5378 = vpop.f32.mrf.mxu0
    %v5379 = vadd.f32 %v5366, %v5378
    %v5380 = vpop.f32.mrf.mxu0
    %5381 = vdwg.mxu0
    %5382 = vmatpush.bf16.msra.mxu0 %v5046
    %5383 = vmatpush.bf16.msra.mxu0 %v5044
    %5384 = vmatpush.bf16.msra.mxu0 %v5042
    %5385 = vmatpush.bf16.msra.mxu0 %v5040
    %5386 = vmatpush.bf16.msra.mxu0 %v5038
    %5387 = vmatpush.bf16.msra.mxu0 %v5036
    %5388 = vmatpush.bf16.msra.mxu0 %v5034
    %5389 = vmatpush.bf16.msra.mxu0 %v5032
    %5390 = vmatmul.bf16.gmra.mxu0 %v4459
    %v5391 = vpop.f32.mrf.mxu0
    %v5392 = vadd.f32 %v5379, %v5391
    %v5393 = vpop.f32.mrf.mxu0
    %5394 = vdwg.mxu0
    %5395 = vmatpush.bf16.msra.mxu0 %v5062
    %5396 = vmatpush.bf16.msra.mxu0 %v5060
    %5397 = vmatpush.bf16.msra.mxu0 %v5058
    %5398 = vmatpush.bf16.msra.mxu0 %v5056
    %5399 = vmatpush.bf16.msra.mxu0 %v5054
    %5400 = vmatpush.bf16.msra.mxu0 %v5052
    %5401 = vmatpush.bf16.msra.mxu0 %v5050
    %5402 = vmatpush.bf16.msra.mxu0 %v5048
    %5403 = vmatmul.bf16.gmra.mxu0 %v4460
    %v5404 = vpop.f32.mrf.mxu0
    %v5405 = vadd.f32 %v5392, %v5404
    %v5406 = vpop.f32.mrf.mxu0
    %5407 = vdwg.mxu0
    %5408 = vmatpush.bf16.msra.mxu0 %v5078
    %5409 = vmatpush.bf16.msra.mxu0 %v5076
    %5410 = vmatpush.bf16.msra.mxu0 %v5074
    %5411 = vmatpush.bf16.msra.mxu0 %v5072
    %5412 = vmatpush.bf16.msra.mxu0 %v5070
    %5413 = vmatpush.bf16.msra.mxu0 %v5068
    %5414 = vmatpush.bf16.msra.mxu0 %v5066
    %5415 = vmatpush.bf16.msra.mxu0 %v5064
    %5416 = vmatmul.bf16.gmra.mxu0 %v4461
    %v5417 = vpop.f32.mrf.mxu0
    %v5418 = vadd.f32 %v5405, %v5417
    %v5419 = vpop.f32.mrf.mxu0
    %5420 = vdwg.mxu0
    %5421 = vmatpush.bf16.msra.mxu0 %v5094
    %5422 = vmatpush.bf16.msra.mxu0 %v5092
    %5423 = vmatpush.bf16.msra.mxu0 %v5090
    %5424 = vmatpush.bf16.msra.mxu0 %v5088
    %5425 = vmatpush.bf16.msra.mxu0 %v5086
    %5426 = vmatpush.bf16.msra.mxu0 %v5084
    %5427 = vmatpush.bf16.msra.mxu0 %v5082
    %5428 = vmatpush.bf16.msra.mxu0 %v5080
    %5429 = vmatmul.bf16.gmra.mxu0 %v4462
    %v5430 = vpop.f32.mrf.mxu0
    %v5431 = vadd.f32 %v5418, %v5430
    %v5432 = vpop.f32.mrf.mxu0
    %5433 = vdwg.mxu0
    %5434 = vmatpush.bf16.msra.mxu0 %v5110
    %5435 = vmatpush.bf16.msra.mxu0 %v5108
    %5436 = vmatpush.bf16.msra.mxu0 %v5106
    %5437 = vmatpush.bf16.msra.mxu0 %v5104
    %5438 = vmatpush.bf16.msra.mxu0 %v5102
    %5439 = vmatpush.bf16.msra.mxu0 %v5100
    %5440 = vmatpush.bf16.msra.mxu0 %v5098
    %5441 = vmatpush.bf16.msra.mxu0 %v5096
    %5442 = vmatmul.bf16.gmra.mxu0 %v4463
    %v5443 = vpop.f32.mrf.mxu0
    %v5444 = vadd.f32 %v5431, %v5443
    %v5445 = vpop.f32.mrf.mxu0
    %5446 = vdwg.mxu0
    %v5447 = vadd.f32 %v3336, %v5340
    %v5448 = vadd.f32 %v3337, %v5444
    %v5449 = vadd.f32 %v5447, %v602
    %v5450 = vadd.f32 %v5448, %v603
    %v5451 = vpack.c.bf16 %v5449, %v5449
    %v5452 = vpack.c.bf16 %v5450, %v5450
    %v5453 = vld [vmem:[#allocation8 + $0xb90] sm:$0xff]
    %v5454 = vld [vmem:[#allocation8 + $0xb98] sm:$0xff]
    %v5455 = vld [vmem:[#allocation8 + $0xba0] sm:$0xff]
    %v5456 = vld [vmem:[#allocation8 + $0xba8] sm:$0xff]
    %v5457 = vld [vmem:[#allocation8 + $0xbb0] sm:$0xff]
    %v5458 = vld [vmem:[#allocation8 + $0xbb8] sm:$0xff]
    %v5459 = vld [vmem:[#allocation8 + $0xbc0] sm:$0xff]
    %v5460 = vld [vmem:[#allocation8 + $0xbc8] sm:$0xff]
    %v5461 = vld [vmem:[#allocation8 + $0xbd0] sm:$0xff]
    %v5462 = vld [vmem:[#allocation8 + $0xbd8] sm:$0xff]
    %v5463 = vld [vmem:[#allocation8 + $0xbe0] sm:$0xff]
    %v5464 = vld [vmem:[#allocation8 + $0xbe8] sm:$0xff]
    %v5465 = vld [vmem:[#allocation8 + $0xbf0] sm:$0xff]
    %v5466 = vld [vmem:[#allocation8 + $0xbf8] sm:$0xff]
    %v5467 = vld [vmem:[#allocation8 + $0xc00] sm:$0xff]
    %v5468 = vld [vmem:[#allocation8 + $0xc08] sm:$0xff]
    %v5469 = vld [vmem:[#allocation8 + $0xc10] sm:$0xff]
    %v5470 = vld [vmem:[#allocation8 + $0xc18] sm:$0xff]
    %v5471 = vld [vmem:[#allocation8 + $0xc20] sm:$0xff]
    %v5472 = vld [vmem:[#allocation8 + $0xc28] sm:$0xff]
    %v5473 = vld [vmem:[#allocation8 + $0xc30] sm:$0xff]
    %v5474 = vld [vmem:[#allocation8 + $0xc38] sm:$0xff]
    %v5475 = vld [vmem:[#allocation8 + $0xc40] sm:$0xff]
    %v5476 = vld [vmem:[#allocation8 + $0xc48] sm:$0xff]
    %v5477 = vld [vmem:[#allocation8 + $0xc50] sm:$0xff]
    %v5478 = vld [vmem:[#allocation8 + $0xc58] sm:$0xff]
    %v5479 = vld [vmem:[#allocation8 + $0xc60] sm:$0xff]
    %v5480 = vld [vmem:[#allocation8 + $0xc68] sm:$0xff]
    %v5481 = vld [vmem:[#allocation8 + $0xc70] sm:$0xff]
    %v5482 = vld [vmem:[#allocation8 + $0xc78] sm:$0xff]
    %v5483 = vld [vmem:[#allocation8 + $0xc80] sm:$0xff]
    %v5484 = vld [vmem:[#allocation8 + $0xc88] sm:$0xff]
    %s5485 = scalar_lea.vmem [#allocation5], 132
    %v5486 = vld [vmem:[%s5485] ss:$8 sm:$0x3]
    %v5488 = vperm.slane %v5486, 0
    %v5489 = vperm.slane %v5486, 1
    %v5524 = vunpack.c.l.b16 %v5453
    %v5525 = vunpack.c.h.b16 %v5453
    %v5526 = vunpack.c.l.b16 %v5454
    %v5527 = vunpack.c.h.b16 %v5454
    %v5528 = vunpack.c.l.b16 %v5455
    %v5529 = vunpack.c.h.b16 %v5455
    %v5530 = vunpack.c.l.b16 %v5456
    %v5531 = vunpack.c.h.b16 %v5456
    %v5532 = vunpack.c.l.b16 %v5457
    %v5533 = vunpack.c.h.b16 %v5457
    %v5534 = vunpack.c.l.b16 %v5458
    %v5535 = vunpack.c.h.b16 %v5458
    %v5536 = vunpack.c.l.b16 %v5459
    %v5537 = vunpack.c.h.b16 %v5459
    %v5538 = vunpack.c.l.b16 %v5460
    %v5539 = vunpack.c.h.b16 %v5460
    %v5540 = vunpack.c.l.b16 %v5461
    %v5541 = vunpack.c.h.b16 %v5461
    %v5542 = vunpack.c.l.b16 %v5462
    %v5543 = vunpack.c.h.b16 %v5462
    %v5544 = vunpack.c.l.b16 %v5463
    %v5545 = vunpack.c.h.b16 %v5463
    %v5546 = vunpack.c.l.b16 %v5464
    %v5547 = vunpack.c.h.b16 %v5464
    %v5548 = vunpack.c.l.b16 %v5465
    %v5549 = vunpack.c.h.b16 %v5465
    %v5550 = vunpack.c.l.b16 %v5466
    %v5551 = vunpack.c.h.b16 %v5466
    %v5552 = vunpack.c.l.b16 %v5467
    %v5553 = vunpack.c.h.b16 %v5467
    %v5554 = vunpack.c.l.b16 %v5468
    %v5555 = vunpack.c.h.b16 %v5468
    %v5556 = vunpack.c.l.b16 %v5469
    %v5557 = vunpack.c.h.b16 %v5469
    %v5558 = vunpack.c.l.b16 %v5470
    %v5559 = vunpack.c.h.b16 %v5470
    %v5560 = vunpack.c.l.b16 %v5471
    %v5561 = vunpack.c.h.b16 %v5471
    %v5562 = vunpack.c.l.b16 %v5472
    %v5563 = vunpack.c.h.b16 %v5472
    %v5564 = vunpack.c.l.b16 %v5473
    %v5565 = vunpack.c.h.b16 %v5473
    %v5566 = vunpack.c.l.b16 %v5474
    %v5567 = vunpack.c.h.b16 %v5474
    %v5568 = vunpack.c.l.b16 %v5475
    %v5569 = vunpack.c.h.b16 %v5475
    %v5570 = vunpack.c.l.b16 %v5476
    %v5571 = vunpack.c.h.b16 %v5476
    %v5572 = vunpack.c.l.b16 %v5477
    %v5573 = vunpack.c.h.b16 %v5477
    %v5574 = vunpack.c.l.b16 %v5478
    %v5575 = vunpack.c.h.b16 %v5478
    %v5576 = vunpack.c.l.b16 %v5479
    %v5577 = vunpack.c.h.b16 %v5479
    %v5578 = vunpack.c.l.b16 %v5480
    %v5579 = vunpack.c.h.b16 %v5480
    %v5580 = vunpack.c.l.b16 %v5481
    %v5581 = vunpack.c.h.b16 %v5481
    %v5582 = vunpack.c.l.b16 %v5482
    %v5583 = vunpack.c.h.b16 %v5482
    %v5584 = vunpack.c.l.b16 %v5483
    %v5585 = vunpack.c.h.b16 %v5483
    %v5586 = vunpack.c.l.b16 %v5484
    %v5587 = vunpack.c.h.b16 %v5484
    %v5588 = vpack.c.b16 %v5526, %v5524
    %v5589 = vpack.c.b16 %v5527, %v5525
    %v5590 = vpack.c.b16 %v5530, %v5528
    %v5591 = vpack.c.b16 %v5531, %v5529
    %v5592 = vpack.c.b16 %v5534, %v5532
    %v5593 = vpack.c.b16 %v5535, %v5533
    %v5594 = vpack.c.b16 %v5538, %v5536
    %v5595 = vpack.c.b16 %v5539, %v5537
    %v5596 = vpack.c.b16 %v5542, %v5540
    %v5597 = vpack.c.b16 %v5543, %v5541
    %v5598 = vpack.c.b16 %v5546, %v5544
    %v5599 = vpack.c.b16 %v5547, %v5545
    %v5600 = vpack.c.b16 %v5550, %v5548
    %v5601 = vpack.c.b16 %v5551, %v5549
    %v5602 = vpack.c.b16 %v5554, %v5552
    %v5603 = vpack.c.b16 %v5555, %v5553
    %v5604 = vpack.c.b16 %v5558, %v5556
    %v5605 = vpack.c.b16 %v5559, %v5557
    %v5606 = vpack.c.b16 %v5562, %v5560
    %v5607 = vpack.c.b16 %v5563, %v5561
    %v5608 = vpack.c.b16 %v5566, %v5564
    %v5609 = vpack.c.b16 %v5567, %v5565
    %v5610 = vpack.c.b16 %v5570, %v5568
    %v5611 = vpack.c.b16 %v5571, %v5569
    %v5612 = vpack.c.b16 %v5574, %v5572
    %v5613 = vpack.c.b16 %v5575, %v5573
    %v5614 = vpack.c.b16 %v5578, %v5576
    %v5615 = vpack.c.b16 %v5579, %v5577
    %v5616 = vpack.c.b16 %v5582, %v5580
    %v5617 = vpack.c.b16 %v5583, %v5581
    %v5618 = vpack.c.b16 %v5586, %v5584
    %v5619 = vpack.c.b16 %v5587, %v5585
    %5652 = vmatpush.bf16.msra.mxu0 %v5602
    %5653 = vmatpush.bf16.msra.mxu0 %v5600
    %5654 = vmatpush.bf16.msra.mxu0 %v5598
    %5655 = vmatpush.bf16.msra.mxu0 %v5596
    %5656 = vmatpush.bf16.msra.mxu0 %v5594
    %5657 = vmatpush.bf16.msra.mxu0 %v5592
    %5658 = vmatpush.bf16.msra.mxu0 %v5590
    %5659 = vmatpush.bf16.msra.mxu0 %v5588
    %5660 = vmatmul.bf16.gmra.mxu0 %v5451
    %v5661 = vpop.f32.mrf.mxu0
    %v5662 = vadd.f32 %v5488, %v5661
    %v5663 = vpop.f32.mrf.mxu0
    %5664 = vdwg.mxu0
    %5665 = vmatpush.bf16.msra.mxu0 %v5618
    %5666 = vmatpush.bf16.msra.mxu0 %v5616
    %5667 = vmatpush.bf16.msra.mxu0 %v5614
    %5668 = vmatpush.bf16.msra.mxu0 %v5612
    %5669 = vmatpush.bf16.msra.mxu0 %v5610
    %5670 = vmatpush.bf16.msra.mxu0 %v5608
    %5671 = vmatpush.bf16.msra.mxu0 %v5606
    %5672 = vmatpush.bf16.msra.mxu0 %v5604
    %5673 = vmatmul.bf16.gmra.mxu0 %v5452
    %v5674 = vpop.f32.mrf.mxu0
    %v5675 = vadd.f32 %v5662, %v5674
    %v5676 = vpop.f32.mrf.mxu0
    %5677 = vdwg.mxu0
    %5678 = vmatpush.bf16.msra.mxu0 %v5603
    %5679 = vmatpush.bf16.msra.mxu0 %v5601
    %5680 = vmatpush.bf16.msra.mxu0 %v5599
    %5681 = vmatpush.bf16.msra.mxu0 %v5597
    %5682 = vmatpush.bf16.msra.mxu0 %v5595
    %5683 = vmatpush.bf16.msra.mxu0 %v5593
    %5684 = vmatpush.bf16.msra.mxu0 %v5591
    %5685 = vmatpush.bf16.msra.mxu0 %v5589
    %5686 = vmatmul.bf16.gmra.mxu0 %v5451
    %v5687 = vpop.f32.mrf.mxu0
    %v5688 = vadd.f32 %v5489, %v5687
    %v5689 = vpop.f32.mrf.mxu0
    %5690 = vdwg.mxu0
    %5691 = vmatpush.bf16.msra.mxu0 %v5619
    %5692 = vmatpush.bf16.msra.mxu0 %v5617
    %5693 = vmatpush.bf16.msra.mxu0 %v5615
    %5694 = vmatpush.bf16.msra.mxu0 %v5613
    %5695 = vmatpush.bf16.msra.mxu0 %v5611
    %5696 = vmatpush.bf16.msra.mxu0 %v5609
    %5697 = vmatpush.bf16.msra.mxu0 %v5607
    %5698 = vmatpush.bf16.msra.mxu0 %v5605
    %5699 = vmatmul.bf16.gmra.mxu0 %v5452
    %v5700 = vpop.f32.mrf.mxu0
    %v5701 = vadd.f32 %v5688, %v5700
    %v5702 = vpop.f32.mrf.mxu0
    %5703 = vdwg.mxu0
    %v5704 = vmax.f32 %v5675, 0.0
    %v5705 = vmax.f32 %v5701, 0.0
    %v5706 = vpack.c.bf16 %v5704, %v5704
    %v5707 = vpack.c.bf16 %v5705, %v5705
    %v5708 = vld [vmem:[#allocation7 + $0x20] sm:$0xf]
    %v5709 = vld [vmem:[#allocation7 + $0x24] sm:$0xf]
    %v5710 = vld [vmem:[#allocation7 + $0x28] sm:$0xf]
    %v5711 = vld [vmem:[#allocation7 + $0x2c] sm:$0xf]
    %v5712 = vld [vmem:[#allocation7 + $0x30] sm:$0xf]
    %v5713 = vld [vmem:[#allocation7 + $0x34] sm:$0xf]
    %v5714 = vld [vmem:[#allocation7 + $0x38] sm:$0xf]
    %v5715 = vld [vmem:[#allocation7 + $0x3c] sm:$0xf]
    %v5716 = vld [vmem:[#allocation7 + $0x40] sm:$0xf]
    %v5717 = vld [vmem:[#allocation7 + $0x44] sm:$0xf]
    %v5718 = vld [vmem:[#allocation7 + $0x48] sm:$0xf]
    %v5719 = vld [vmem:[#allocation7 + $0x4c] sm:$0xf]
    %v5720 = vld [vmem:[#allocation7 + $0x50] sm:$0xf]
    %v5721 = vld [vmem:[#allocation7 + $0x54] sm:$0xf]
    %v5722 = vld [vmem:[#allocation7 + $0x58] sm:$0xf]
    %v5723 = vld [vmem:[#allocation7 + $0x5c] sm:$0xf]
    %v5724 = vld [vmem:[#allocation7 + $0x60] sm:$0xf]
    %v5725 = vld [vmem:[#allocation7 + $0x64] sm:$0xf]
    %v5726 = vld [vmem:[#allocation7 + $0x68] sm:$0xf]
    %v5727 = vld [vmem:[#allocation7 + $0x6c] sm:$0xf]
    %v5728 = vld [vmem:[#allocation7 + $0x70] sm:$0xf]
    %v5729 = vld [vmem:[#allocation7 + $0x74] sm:$0xf]
    %v5730 = vld [vmem:[#allocation7 + $0x78] sm:$0xf]
    %v5731 = vld [vmem:[#allocation7 + $0x7c] sm:$0xf]
    %v5732 = vld [vmem:[#allocation7 + $0x80] sm:$0xf]
    %v5733 = vld [vmem:[#allocation7 + $0x84] sm:$0xf]
    %v5734 = vld [vmem:[#allocation7 + $0x88] sm:$0xf]
    %v5735 = vld [vmem:[#allocation7 + $0x8c] sm:$0xf]
    %v5736 = vld [vmem:[#allocation7 + $0x90] sm:$0xf]
    %v5737 = vld [vmem:[#allocation7 + $0x94] sm:$0xf]
    %v5738 = vld [vmem:[#allocation7 + $0x98] sm:$0xf]
    %v5739 = vld [vmem:[#allocation7 + $0x9c] sm:$0xf]
    %v5740 = vld [vmem:[#allocation5 + $0x85] ss:$0 sm:$0xff]
    %v5773 = vunpack.c.l.b16 %v5708
    %v5774 = vunpack.c.l.b16 %v5709
    %v5775 = vunpack.c.l.b16 %v5710
    %v5776 = vunpack.c.l.b16 %v5711
    %v5777 = vunpack.c.l.b16 %v5712
    %v5778 = vunpack.c.l.b16 %v5713
    %v5779 = vunpack.c.l.b16 %v5714
    %v5780 = vunpack.c.l.b16 %v5715
    %v5781 = vunpack.c.l.b16 %v5716
    %v5782 = vunpack.c.l.b16 %v5717
    %v5783 = vunpack.c.l.b16 %v5718
    %v5784 = vunpack.c.l.b16 %v5719
    %v5785 = vunpack.c.l.b16 %v5720
    %v5786 = vunpack.c.l.b16 %v5721
    %v5787 = vunpack.c.l.b16 %v5722
    %v5788 = vunpack.c.l.b16 %v5723
    %v5789 = vunpack.c.l.b16 %v5724
    %v5790 = vunpack.c.l.b16 %v5725
    %v5791 = vunpack.c.l.b16 %v5726
    %v5792 = vunpack.c.l.b16 %v5727
    %v5793 = vunpack.c.l.b16 %v5728
    %v5794 = vunpack.c.l.b16 %v5729
    %v5795 = vunpack.c.l.b16 %v5730
    %v5796 = vunpack.c.l.b16 %v5731
    %v5797 = vunpack.c.l.b16 %v5732
    %v5798 = vunpack.c.l.b16 %v5733
    %v5799 = vunpack.c.l.b16 %v5734
    %v5800 = vunpack.c.l.b16 %v5735
    %v5801 = vunpack.c.l.b16 %v5736
    %v5802 = vunpack.c.l.b16 %v5737
    %v5803 = vunpack.c.l.b16 %v5738
    %v5804 = vunpack.c.l.b16 %v5739
    %v5805 = vpack.c.b16 %v5774, %v5773
    %v5806 = vpack.c.b16 %v5776, %v5775
    %v5807 = vpack.c.b16 %v5778, %v5777
    %v5808 = vpack.c.b16 %v5780, %v5779
    %v5809 = vpack.c.b16 %v5782, %v5781
    %v5810 = vpack.c.b16 %v5784, %v5783
    %v5811 = vpack.c.b16 %v5786, %v5785
    %v5812 = vpack.c.b16 %v5788, %v5787
    %v5813 = vpack.c.b16 %v5790, %v5789
    %v5814 = vpack.c.b16 %v5792, %v5791
    %v5815 = vpack.c.b16 %v5794, %v5793
    %v5816 = vpack.c.b16 %v5796, %v5795
    %v5817 = vpack.c.b16 %v5798, %v5797
    %v5818 = vpack.c.b16 %v5800, %v5799
    %v5819 = vpack.c.b16 %v5802, %v5801
    %v5820 = vpack.c.b16 %v5804, %v5803
    %5837 = vmatpush.bf16.msra.mxu0 %v5812
    %5838 = vmatpush.bf16.msra.mxu0 %v5811
    %5839 = vmatpush.bf16.msra.mxu0 %v5810
    %5840 = vmatpush.bf16.msra.mxu0 %v5809
    %5841 = vmatpush.bf16.msra.mxu0 %v5808
    %5842 = vmatpush.bf16.msra.mxu0 %v5807
    %5843 = vmatpush.bf16.msra.mxu0 %v5806
    %5844 = vmatpush.bf16.msra.mxu0 %v5805
    %5845 = vmatmul.bf16.gmra.mxu0 %v5706
    %v5846 = vpop.f32.mrf.mxu0
    %v5847 = vadd.f32 %v5740, %v5846
    %v5848 = vpop.f32.mrf.mxu0
    %5849 = vdwg.mxu0
    %5850 = vmatpush.bf16.msra.mxu0 %v5820
    %5851 = vmatpush.bf16.msra.mxu0 %v5819
    %5852 = vmatpush.bf16.msra.mxu0 %v5818
    %5853 = vmatpush.bf16.msra.mxu0 %v5817
    %5854 = vmatpush.bf16.msra.mxu0 %v5816
    %5855 = vmatpush.bf16.msra.mxu0 %v5815
    %5856 = vmatpush.bf16.msra.mxu0 %v5814
    %5857 = vmatpush.bf16.msra.mxu0 %v5813
    %5858 = vmatmul.bf16.gmra.mxu0 %v5707
    %v5859 = vpop.f32.mrf.mxu0
    %v5860 = vadd.f32 %v5847, %v5859
    %v5861 = vpop.f32.mrf.mxu0
    %5862 = vdwg.mxu0
    %v5863 = vmax.f32 %v5860, 0.0
    %v5864 = vpack.c.bf16 %v5863, %v5863
    %v5865 = vld [vmem:[#allocation7 + $0xa0] sm:$0xf]
    %v5866 = vld [vmem:[#allocation7 + $0xa4] sm:$0xf]
    %v5867 = vld [vmem:[#allocation7 + $0xa8] sm:$0xf]
    %v5868 = vld [vmem:[#allocation7 + $0xac] sm:$0xf]
    %v5869 = vld [vmem:[#allocation7 + $0xb0] sm:$0xf]
    %v5870 = vld [vmem:[#allocation7 + $0xb4] sm:$0xf]
    %v5871 = vld [vmem:[#allocation7 + $0xb8] sm:$0xf]
    %v5872 = vld [vmem:[#allocation7 + $0xbc] sm:$0xf]
    %v5873 = vld [vmem:[#allocation7 + $0xc0] sm:$0xf]
    %v5874 = vld [vmem:[#allocation7 + $0xc4] sm:$0xf]
    %v5875 = vld [vmem:[#allocation7 + $0xc8] sm:$0xf]
    %v5876 = vld [vmem:[#allocation7 + $0xcc] sm:$0xf]
    %v5877 = vld [vmem:[#allocation7 + $0xd0] sm:$0xf]
    %v5878 = vld [vmem:[#allocation7 + $0xd4] sm:$0xf]
    %v5879 = vld [vmem:[#allocation7 + $0xd8] sm:$0xf]
    %v5880 = vld [vmem:[#allocation7 + $0xdc] sm:$0xf]
    %v5881 = vld [vmem:[#allocation5 + $0x86] ss:$0 sm:$0xff]
    %v5898 = vunpack.c.l.b16 %v5865
    %v5899 = vunpack.c.l.b16 %v5866
    %v5900 = vunpack.c.l.b16 %v5867
    %v5901 = vunpack.c.l.b16 %v5868
    %v5902 = vunpack.c.l.b16 %v5869
    %v5903 = vunpack.c.l.b16 %v5870
    %v5904 = vunpack.c.l.b16 %v5871
    %v5905 = vunpack.c.l.b16 %v5872
    %v5906 = vunpack.c.l.b16 %v5873
    %v5907 = vunpack.c.l.b16 %v5874
    %v5908 = vunpack.c.l.b16 %v5875
    %v5909 = vunpack.c.l.b16 %v5876
    %v5910 = vunpack.c.l.b16 %v5877
    %v5911 = vunpack.c.l.b16 %v5878
    %v5912 = vunpack.c.l.b16 %v5879
    %v5913 = vunpack.c.l.b16 %v5880
    %v5914 = vpack.c.b16 %v5899, %v5898
    %v5915 = vpack.c.b16 %v5901, %v5900
    %v5916 = vpack.c.b16 %v5903, %v5902
    %v5917 = vpack.c.b16 %v5905, %v5904
    %v5918 = vpack.c.b16 %v5907, %v5906
    %v5919 = vpack.c.b16 %v5909, %v5908
    %v5920 = vpack.c.b16 %v5911, %v5910
    %v5921 = vpack.c.b16 %v5913, %v5912
    %5930 = vmatpush.bf16.msra.mxu0 %v5921
    %5931 = vmatpush.bf16.msra.mxu0 %v5920
    %5932 = vmatpush.bf16.msra.mxu0 %v5919
    %5933 = vmatpush.bf16.msra.mxu0 %v5918
    %5934 = vmatpush.bf16.msra.mxu0 %v5917
    %5935 = vmatpush.bf16.msra.mxu0 %v5916
    %5936 = vmatpush.bf16.msra.mxu0 %v5915
    %5937 = vmatpush.bf16.msra.mxu0 %v5914
    %5938 = vmatmul.bf16.gmra.mxu0 %v5864
    %v5939 = vpop.f32.mrf.mxu0
    %v5940 = vadd.f32 %v5881, %v5939
    %v5941 = vpop.f32.mrf.mxu0
    %5942 = vdwg.mxu0
    %v5943 = vmax.f32 %v5940, 0.0
    %v5944 = vpack.c.bf16 %v5943, %v5943
    %v5945 = vld [vmem:[#allocation7 + $0xe0] sm:$0xf]
    %v5946 = vld [vmem:[#allocation7 + $0xe4] sm:$0xf]
    %v5947 = vld [vmem:[#allocation7 + $0xe8] sm:$0xf]
    %v5948 = vld [vmem:[#allocation7 + $0xec] sm:$0xf]
    %v5949 = vld [vmem:[#allocation7 + $0xf0] sm:$0xf]
    %v5950 = vld [vmem:[#allocation7 + $0xf4] sm:$0xf]
    %v5951 = vld [vmem:[#allocation7 + $0xf8] sm:$0xf]
    %v5952 = vld [vmem:[#allocation7 + $0xfc] sm:$0xf]
    %v5953 = vld [vmem:[#allocation7 + $0x100] sm:$0xf]
    %v5954 = vld [vmem:[#allocation7 + $0x104] sm:$0xf]
    %v5955 = vld [vmem:[#allocation7 + $0x108] sm:$0xf]
    %v5956 = vld [vmem:[#allocation7 + $0x10c] sm:$0xf]
    %v5957 = vld [vmem:[#allocation7 + $0x110] sm:$0xf]
    %v5958 = vld [vmem:[#allocation7 + $0x114] sm:$0xf]
    %v5959 = vld [vmem:[#allocation7 + $0x118] sm:$0xf]
    %v5960 = vld [vmem:[#allocation7 + $0x11c] sm:$0xf]
    %v5961 = vld [vmem:[#allocation5 + $0x87] ss:$0 sm:$0xff]
    %v5978 = vunpack.c.l.b16 %v5945
    %v5979 = vunpack.c.l.b16 %v5946
    %v5980 = vunpack.c.l.b16 %v5947
    %v5981 = vunpack.c.l.b16 %v5948
    %v5982 = vunpack.c.l.b16 %v5949
    %v5983 = vunpack.c.l.b16 %v5950
    %v5984 = vunpack.c.l.b16 %v5951
    %v5985 = vunpack.c.l.b16 %v5952
    %v5986 = vunpack.c.l.b16 %v5953
    %v5987 = vunpack.c.l.b16 %v5954
    %v5988 = vunpack.c.l.b16 %v5955
    %v5989 = vunpack.c.l.b16 %v5956
    %v5990 = vunpack.c.l.b16 %v5957
    %v5991 = vunpack.c.l.b16 %v5958
    %v5992 = vunpack.c.l.b16 %v5959
    %v5993 = vunpack.c.l.b16 %v5960
    %v5994 = vpack.c.b16 %v5979, %v5978
    %v5995 = vpack.c.b16 %v5981, %v5980
    %v5996 = vpack.c.b16 %v5983, %v5982
    %v5997 = vpack.c.b16 %v5985, %v5984
    %v5998 = vpack.c.b16 %v5987, %v5986
    %v5999 = vpack.c.b16 %v5989, %v5988
    %v6000 = vpack.c.b16 %v5991, %v5990
    %v6001 = vpack.c.b16 %v5993, %v5992
    %6010 = vmatpush.bf16.msra.mxu0 %v6001
    %6011 = vmatpush.bf16.msra.mxu0 %v6000
    %6012 = vmatpush.bf16.msra.mxu0 %v5999
    %6013 = vmatpush.bf16.msra.mxu0 %v5998
    %6014 = vmatpush.bf16.msra.mxu0 %v5997
    %6015 = vmatpush.bf16.msra.mxu0 %v5996
    %6016 = vmatpush.bf16.msra.mxu0 %v5995
    %6017 = vmatpush.bf16.msra.mxu0 %v5994
    %6018 = vmatmul.bf16.gmra.mxu0 %v5944
    %v6019 = vpop.f32.mrf.mxu0
    %v6020 = vadd.f32 %v5961, %v6019
    %v6021 = vpop.f32.mrf.mxu0
    %6022 = vdwg.mxu0
    %v6023 = vmax.f32 %v6020, 0.0
    %v6024 = vpack.c.bf16 %v6023, %v6023
    %v6025 = vld [vmem:[#allocation7 + $0x120] sm:$0xf]
    %v6026 = vld [vmem:[#allocation7 + $0x124] sm:$0xf]
    %v6027 = vld [vmem:[#allocation7 + $0x128] sm:$0xf]
    %v6028 = vld [vmem:[#allocation7 + $0x12c] sm:$0xf]
    %v6029 = vld [vmem:[#allocation7 + $0x130] sm:$0xf]
    %v6030 = vld [vmem:[#allocation7 + $0x134] sm:$0xf]
    %v6031 = vld [vmem:[#allocation7 + $0x138] sm:$0xf]
    %v6032 = vld [vmem:[#allocation7 + $0x13c] sm:$0xf]
    %v6033 = vld [vmem:[#allocation7 + $0x140] sm:$0xf]
    %v6034 = vld [vmem:[#allocation7 + $0x144] sm:$0xf]
    %v6035 = vld [vmem:[#allocation7 + $0x148] sm:$0xf]
    %v6036 = vld [vmem:[#allocation7 + $0x14c] sm:$0xf]
    %v6037 = vld [vmem:[#allocation7 + $0x150] sm:$0xf]
    %v6038 = vld [vmem:[#allocation7 + $0x154] sm:$0xf]
    %v6039 = vld [vmem:[#allocation7 + $0x158] sm:$0xf]
    %v6040 = vld [vmem:[#allocation7 + $0x15c] sm:$0xf]
    %v6041 = vld [vmem:[#allocation5 + $0xc0] ss:$0 sm:$0xff]
    %v6058 = vunpack.c.l.b16 %v6025
    %v6059 = vunpack.c.l.b16 %v6026
    %v6060 = vunpack.c.l.b16 %v6027
    %v6061 = vunpack.c.l.b16 %v6028
    %v6062 = vunpack.c.l.b16 %v6029
    %v6063 = vunpack.c.l.b16 %v6030
    %v6064 = vunpack.c.l.b16 %v6031
    %v6065 = vunpack.c.l.b16 %v6032
    %v6066 = vunpack.c.l.b16 %v6033
    %v6067 = vunpack.c.l.b16 %v6034
    %v6068 = vunpack.c.l.b16 %v6035
    %v6069 = vunpack.c.l.b16 %v6036
    %v6070 = vunpack.c.l.b16 %v6037
    %v6071 = vunpack.c.l.b16 %v6038
    %v6072 = vunpack.c.l.b16 %v6039
    %v6073 = vunpack.c.l.b16 %v6040
    %v6074 = vpack.c.b16 %v6059, %v6058
    %v6075 = vpack.c.b16 %v6061, %v6060
    %v6076 = vpack.c.b16 %v6063, %v6062
    %v6077 = vpack.c.b16 %v6065, %v6064
    %v6078 = vpack.c.b16 %v6067, %v6066
    %v6079 = vpack.c.b16 %v6069, %v6068
    %v6080 = vpack.c.b16 %v6071, %v6070
    %v6081 = vpack.c.b16 %v6073, %v6072
    %6090 = vmatpush.bf16.msra.mxu0 %v6081
    %6091 = vmatpush.bf16.msra.mxu0 %v6080
    %6092 = vmatpush.bf16.msra.mxu0 %v6079
    %6093 = vmatpush.bf16.msra.mxu0 %v6078
    %6094 = vmatpush.bf16.msra.mxu0 %v6077
    %6095 = vmatpush.bf16.msra.mxu0 %v6076
    %6096 = vmatpush.bf16.msra.mxu0 %v6075
    %6097 = vmatpush.bf16.msra.mxu0 %v6074
    %6098 = vmatmul.bf16.gmra.mxu0 %v6024
    %v6099 = vpop.f32.mrf.mxu0
    %v6100 = vadd.f32 %v6041, %v6099
    %v6101 = vpop.f32.mrf.mxu0
    %6102 = vdwg.mxu0
    %v6103 = vmax.f32 %v6100, 0.0
    %6104 = vst [vmem:[#allocation11] sm:$0x3] %v6103
    // Predicated region
    $region46: #{preae_forward.1} parent=1 // pred_check
      _
    $region47: #{preae_forward.1} parent=1 // pred_check_branch
      %6106 = sbr.rel (0) target = $region49
    $region48: #{preae_forward.1} parent=1 // pred_region
      %6108 = vsyncadd [#allocation4], 0
      %s6110 = sshll.u32 [#allocation11], 4
      %s6111 = int_to_ptr.vmem [resolvable:$true] %s6110
      %s6112 = sshll.u32 %s6, 4
      %s6113 = int_to_ptr.hbm [resolvable:$true] %s6112
      %6115 = dma.vmem_to_hbm [thread:$0]  %s6111, 32, %s6113, [#allocation4]
    $region49: #{preae_forward.1} parent=1 // pred_fallthru
      _
    // Predicated region
    $region50: #{preae_forward.1} parent=1 // pred_check
      _
    $region51: #{preae_forward.1} parent=1 // pred_check_branch
      %6117 = sbr.rel (0) target = $region53
    $region52: #{preae_forward.1} parent=1 // pred_region
      %6119 = dma.done [#allocation4], 32
    $region53: #{preae_forward.1} parent=1 // pred_fallthru
      _
    %6120 = vsyncpa [#allocation3], 1
    %6121 = vsyncpa [#allocation6], 1
    %6122 = vsyncpa [#allocation9], 1
    %6123 = vsyncpa [#allocation4], 1

</llo_original>
